<compile_context>
chip_gen: v7x
topology: tpu7x:2x2x1
jax: 0.10.0
libtpu: 0.0.40
codegen_flags: <defaults>
</compile_context>

<pallas_src>
import functools

import jax
import jax.numpy as jnp
from jax.experimental import pallas as pl
from jax.experimental.pallas import tpu as pltpu


def phrase_mlp_kernel(starts_ref, hid_ref, wrc_ref, wp_ref, b1_ref, w2_ref,
                      b2_ref, out_ref, *, bf16_product):
    # starts_ref: SMEM (B, T) int32 (scalar prefetch, full array)
    # hid_ref:    (BB, S, H) f32    batch block of encoder hidden states
    # wrc_ref:    (H, 2*Dh) bf16    fused [row | col] projection weights
    # wp_ref:     (H, Dh)  bf16     elementwise-product projection weights
    # b1_ref:     (1, Dh)  f32
    # w2_ref:     (Dh, Lp) bf16     Lp = L padded to 128 (lane-dense store)
    # b2_ref:     (1, Lp)  f32
    # out_ref:    (BB, T*T, Lp) bf16
    BB, S, H = hid_ref.shape
    T = starts_ref.shape[1]
    Dh = wp_ref.shape[1]
    Lp = out_ref.shape[-1]
    M = BB * T * T

    # In-kernel gather of the T phrase-start rows per sentence (torch.gather in
    # BERT.forward).  Indices come from SMEM; each row is a dynamic sublane
    # slice of the resident VMEM hidden block.
    base = pl.program_id(0) * BB
    rows = []
    for b in range(BB):
        for t in range(T):
            idx = starts_ref[base + b, t]
            row = hid_ref[pl.ds(b, 1), pl.ds(idx, 1), :]        # (1, 1, H)
            rows.append(row.reshape(1, H))
    con = jnp.concatenate(rows, axis=0).reshape(BB, T, H)        # f32

    con_bf = con.reshape(BB * T, H).astype(jnp.bfloat16)

    # Fused per-token row/col projections: one (BB*T, H) @ (H, 2*Dh) MXU pass.
    rowcol = jnp.dot(con_bf, wrc_ref[...],
                     preferred_element_type=jnp.float32)         # (BB*T, 2Dh)
    row_proj = rowcol[:, :Dh].reshape(BB, T, 1, Dh)
    col_proj = rowcol[:, Dh:].reshape(BB, 1, T, Dh)

    # Pairwise elementwise product: the only term needing an (M, H) matmul.
    # bf16 on chips with a bf16 VALU (v6e/v7x), f32 on v5e; MXU accumulates f32.
    if bf16_product:
        src = con_bf.reshape(BB, T, H)
    else:
        src = con
    prod = (src[:, :, None, :] * src[:, None, :, :]).reshape(M, H)
    prod_proj = jnp.dot(prod.astype(jnp.bfloat16), wp_ref[...],
                        preferred_element_type=jnp.float32)      # (M, Dh)

    hidden = jnp.tanh(prod_proj.reshape(BB, T, T, Dh)
                      + row_proj + col_proj
                      + b1_ref[...].reshape(1, 1, 1, Dh))        # (BB,T,T,Dh)

    logits = jnp.dot(hidden.reshape(M, Dh).astype(jnp.bfloat16), w2_ref[...],
                     preferred_element_type=jnp.float32) + b2_ref[...]
    # TODO(synk): for much larger B*T*T, pack 16 (i,j) rows x L logits per
    # 128-lane output row to cut the padded writeback 16x.
    out_ref[...] = logits.reshape(BB, T * T, Lp).astype(out_ref.dtype)


def _round_up(x, m):
    return ((x + m - 1) // m) * m


def _chip_tuning():
    """Per-generation knobs: MXU row target and bf16-VALU availability."""
    try:
        kind = jax.devices()[0].device_kind.lower()
    except Exception:  # pragma: no cover - defensive
        kind = ""
    is_v5 = "v5" in kind
    return {
        "target_rows": 128 if is_v5 else 256,   # v5e MXU is 128 rows, v6e/v7x 256
        "bf16_product": not is_v5,              # v5e has no bf16 VALU
    }


def _pick_batch_block(B, T, target_rows):
    """Smallest batch block (dividing B) whose flattened M=BB*T*T reaches
    target_rows; min_steps=1, so at toy sizes this collapses to BB=B, grid=(1,)."""
    best = 1
    for bb in range(1, B + 1):
        if B % bb:
            continue
        best = bb
        if bb * T * T >= target_rows:
            break
    return best


def prepare_phrase_weights(w1, b1, w2, b2):
    """Fold / pad / cast the classifier weights once (hoisted out of forward).

    table @ w1 with table = [r_i, r_j, r_i - r_j, r_i * r_j] is decomposed as
      r_i @ (W1a + W1c) + r_j @ (W1b - W1c) + (r_i * r_j) @ W1d + b1,
    and the two per-token projections are fused into one (H, 2*Dh) slab.
    """
    H4, Dh = w1.shape
    H = H4 // 4
    L = w2.shape[1]
    Lp = _round_up(L, 128)                    # lane-dense output width
    w1a, w1b, w1c, w1d = w1[:H], w1[H:2 * H], w1[2 * H:3 * H], w1[3 * H:]
    wrc = jnp.concatenate([w1a + w1c, w1b - w1c], axis=1).astype(jnp.bfloat16)
    wp = w1d.astype(jnp.bfloat16)
    w2p = jnp.pad(w2, ((0, 0), (0, Lp - L))).astype(jnp.bfloat16)
    b1_2d = b1.reshape(1, Dh).astype(jnp.float32)
    b2p = jnp.pad(b2, (0, Lp - L)).reshape(1, Lp).astype(jnp.float32)
    return {"wrc": wrc, "wp": wp, "b1": b1_2d, "w2": w2p, "b2": b2p,
            "H": H, "Dh": Dh, "L": L, "Lp": Lp}


def phrase_classifier_mlp(all_hidden, starts, weights):
    """Gather + pairwise span table + MLP classifier, all inside one kernel."""
    B, S, H = all_hidden.shape
    T = starts.shape[1]
    Dh, L, Lp = weights["Dh"], weights["L"], weights["Lp"]

    tune = _chip_tuning()
    BB = _pick_batch_block(B, T, tune["target_rows"])
    grid = (B // BB,)

    kernel = functools.partial(phrase_mlp_kernel,
                               bf16_product=tune["bf16_product"])

    padded = pl.pallas_call(
        kernel,
        out_shape=jax.ShapeDtypeStruct((B, T * T, Lp), jnp.bfloat16),
        grid_spec=pltpu.PrefetchScalarGridSpec(
            num_scalar_prefetch=1,            # starts -> SMEM, fed to index_maps
            grid=grid,
            in_specs=[
                pl.BlockSpec((BB, S, H), lambda g, st: (g, 0, 0)),
                # Constant-index weight blocks: Pallas only re-DMAs a block when
                # its index changes, so these are fetched once.
                # TODO(synk): switch to pipeline_mode=pl.Buffered(1) / VMEM
                # scratch once H/Dh reach real BERT sizes so the redundant
                # double-buffer allocation stops eating v7x's 64 MiB VMEM.
                pl.BlockSpec((H, 2 * Dh), lambda g, st: (0, 0)),
                pl.BlockSpec((H, Dh), lambda g, st: (0, 0)),
                pl.BlockSpec((1, Dh), lambda g, st: (0, 0)),
                pl.BlockSpec((Dh, Lp), lambda g, st: (0, 0)),
                pl.BlockSpec((1, Lp), lambda g, st: (0, 0)),
            ],
            out_specs=pl.BlockSpec((BB, T * T, Lp), lambda g, st: (g, 0, 0)),
        ),
        compiler_params=pltpu.CompilerParams(
            dimension_semantics=("parallel",)),
    )(starts.astype(jnp.int32), all_hidden.astype(jnp.float32),
      weights["wrc"], weights["wp"], weights["b1"], weights["w2"], weights["b2"])

    # Strip the lane padding and restore the (B, T, T, L) f32 logits layout.
    return padded[..., :L].astype(jnp.float32).reshape(B, T, T, L)


def encoder_stub(input_ids, attn_mask, embed_table):
    """Stand-in for BERT.forward hidden states (deterministic embedding lookup)."""
    del attn_mask  # would feed attention inside the real BERT; unused in stub
    return embed_table[input_ids]                                # (B, S, H)


def phrase_classifier_forward(input_ids, attn_mask, starts, embed_table, weights):
    all_hidden = encoder_stub(input_ids, attn_mask, embed_table)
    return phrase_classifier_mlp(all_hidden, starts, weights)


def reference_forward(input_ids, attn_mask, starts, embed_table, w1, b1, w2, b2):
    del attn_mask
    all_hidden = embed_table[input_ids]
    con = jnp.take_along_axis(all_hidden, starts[:, :, None], axis=1)
    B, T, H = con.shape
    row = jnp.broadcast_to(con[:, :, None, :], (B, T, T, H))
    col = jnp.broadcast_to(con[:, None, :, :], (B, T, T, H))
    table = jnp.concatenate([row, col, row - col, row * col], axis=-1)
    hidden = jnp.tanh(table @ w1 + b1)
    return hidden @ w2 + b2


if __name__ == "__main__":
    B, S, T, H, Dh, L, V = 2, 16, 8, 768, 128, 8, 32

    key = jax.random.PRNGKey(0)
    ks = jax.random.split(key, 8)
    embed_table = jax.random.normal(ks[0], (V, H), jnp.float32) * 0.02
    w1 = jax.random.normal(ks[1], (4 * H, Dh), jnp.float32) / jnp.sqrt(4.0 * H)
    b1 = jax.random.normal(ks[2], (Dh,), jnp.float32) * 0.01
    w2 = jax.random.normal(ks[3], (Dh, L), jnp.float32) / jnp.sqrt(float(Dh))
    b2 = jax.random.normal(ks[4], (L,), jnp.float32) * 0.01

    input_ids = jax.random.randint(ks[5], (B, S), 0, V, dtype=jnp.int32)
    attn_mask = jnp.ones((B, S), jnp.int32)
    starts = jax.random.randint(ks[6], (B, T), 0, S, dtype=jnp.int32)

    # Weight folding/padding/casting is hoisted out of the per-call path.
    weights = prepare_phrase_weights(w1, b1, w2, b2)

    out = phrase_classifier_forward(input_ids, attn_mask, starts,
                                    embed_table, weights)
    out = jax.block_until_ready(out)

    ref = reference_forward(input_ids, attn_mask, starts, embed_table,
                            w1, b1, w2, b2)
    assert out.shape == (B, T, T, L)
    # Tolerance loosened vs. pure-f32: bf16 MXU inputs (f32 accumulation) plus
    # bf16 output store; the algebraic decomposition itself is exact.
    assert jnp.allclose(out, ref, atol=2e-2, rtol=2e-2), "mismatch vs reference"

    print("KERNEL_OK")
</pallas_src>

<mosaic_0001>
module attributes {stable_mosaic.version = 11 : i64} {
  func.func @phrase_mlp_kernel(%arg0: i32, %arg1: memref<2x8xi32, #tpu.memory_space<smem>>, %arg2: memref<2x16x768xf32, #tpu.memory_space<vmem>>, %arg3: memref<768x256xbf16, #tpu.memory_space<vmem>>, %arg4: memref<768x128xbf16, #tpu.memory_space<vmem>>, %arg5: memref<1x128xf32, #tpu.memory_space<vmem>>, %arg6: memref<128x128xbf16, #tpu.memory_space<vmem>>, %arg7: memref<1x128xf32, #tpu.memory_space<vmem>>, %arg8: memref<2x64x128xbf16, #tpu.memory_space<vmem>>) attributes {dimension_semantics = [#tpu.dimension_semantics<parallel>], iteration_bounds = array<i64: 1>, scalar_prefetch = 1 : i64, scratch_operands = 0 : i64, tpu.core_type = #tpu.core_type<tc>, window_params = [{transform_indices = @transform_0, window_bounds = array<i64: 2, 16, 768>}, {pipeline_mode = #tpu.pipeline_mode<synchronous>, transform_indices = @transform_1, window_bounds = array<i64: 768, 256>}, {pipeline_mode = #tpu.pipeline_mode<synchronous>, transform_indices = @transform_2, window_bounds = array<i64: 768, 128>}, {pipeline_mode = #tpu.pipeline_mode<synchronous>, transform_indices = @transform_3, window_bounds = array<i64: 1, 128>}, {pipeline_mode = #tpu.pipeline_mode<synchronous>, transform_indices = @transform_4, window_bounds = array<i64: 128, 128>}, {pipeline_mode = #tpu.pipeline_mode<synchronous>, transform_indices = @transform_5, window_bounds = array<i64: 1, 128>}, {transform_indices = @transform_6, window_bounds = array<i64: 2, 64, 128>}]} {
    %c2_i32 = arith.constant 2 : i32
    %0 = arith.muli %arg0, %c2_i32 : i32
    %c0_i32 = arith.constant 0 : i32
    %1 = arith.addi %0, %c0_i32 : i32
    %2 = arith.index_cast %1 : i32 to index
    %c0 = arith.constant 0 : index
    %3 = memref.load %arg1[%2, %c0] : memref<2x8xi32, #tpu.memory_space<smem>>
    %c0_0 = arith.constant 0 : index
    %4 = arith.index_cast %3 : i32 to index
    %c0_1 = arith.constant 0 : index
    %5 = vector.load %arg2[%c0_0, %4, %c0_1] : memref<2x16x768xf32, #tpu.memory_space<vmem>>, vector<1x1x768xf32>
    %6 = vector.shape_cast %5 : vector<1x1x768xf32> to vector<1x768xf32>
    %c0_i32_2 = arith.constant 0 : i32
    %7 = arith.addi %0, %c0_i32_2 : i32
    %8 = arith.index_cast %7 : i32 to index
    %c1 = arith.constant 1 : index
    %9 = memref.load %arg1[%8, %c1] : memref<2x8xi32, #tpu.memory_space<smem>>
    %c0_3 = arith.constant 0 : index
    %10 = arith.index_cast %9 : i32 to index
    %c0_4 = arith.constant 0 : index
    %11 = vector.load %arg2[%c0_3, %10, %c0_4] : memref<2x16x768xf32, #tpu.memory_space<vmem>>, vector<1x1x768xf32>
    %12 = vector.shape_cast %11 : vector<1x1x768xf32> to vector<1x768xf32>
    %c0_i32_5 = arith.constant 0 : i32
    %13 = arith.addi %0, %c0_i32_5 : i32
    %14 = arith.index_cast %13 : i32 to index
    %c2 = arith.constant 2 : index
    %15 = memref.load %arg1[%14, %c2] : memref<2x8xi32, #tpu.memory_space<smem>>
    %c0_6 = arith.constant 0 : index
    %16 = arith.index_cast %15 : i32 to index
    %c0_7 = arith.constant 0 : index
    %17 = vector.load %arg2[%c0_6, %16, %c0_7] : memref<2x16x768xf32, #tpu.memory_space<vmem>>, vector<1x1x768xf32>
    %18 = vector.shape_cast %17 : vector<1x1x768xf32> to vector<1x768xf32>
    %c0_i32_8 = arith.constant 0 : i32
    %19 = arith.addi %0, %c0_i32_8 : i32
    %20 = arith.index_cast %19 : i32 to index
    %c3 = arith.constant 3 : index
    %21 = memref.load %arg1[%20, %c3] : memref<2x8xi32, #tpu.memory_space<smem>>
    %c0_9 = arith.constant 0 : index
    %22 = arith.index_cast %21 : i32 to index
    %c0_10 = arith.constant 0 : index
    %23 = vector.load %arg2[%c0_9, %22, %c0_10] : memref<2x16x768xf32, #tpu.memory_space<vmem>>, vector<1x1x768xf32>
    %24 = vector.shape_cast %23 : vector<1x1x768xf32> to vector<1x768xf32>
    %c0_i32_11 = arith.constant 0 : i32
    %25 = arith.addi %0, %c0_i32_11 : i32
    %26 = arith.index_cast %25 : i32 to index
    %c4 = arith.constant 4 : index
    %27 = memref.load %arg1[%26, %c4] : memref<2x8xi32, #tpu.memory_space<smem>>
    %c0_12 = arith.constant 0 : index
    %28 = arith.index_cast %27 : i32 to index
    %c0_13 = arith.constant 0 : index
    %29 = vector.load %arg2[%c0_12, %28, %c0_13] : memref<2x16x768xf32, #tpu.memory_space<vmem>>, vector<1x1x768xf32>
    %30 = vector.shape_cast %29 : vector<1x1x768xf32> to vector<1x768xf32>
    %c0_i32_14 = arith.constant 0 : i32
    %31 = arith.addi %0, %c0_i32_14 : i32
    %32 = arith.index_cast %31 : i32 to index
    %c5 = arith.constant 5 : index
    %33 = memref.load %arg1[%32, %c5] : memref<2x8xi32, #tpu.memory_space<smem>>
    %c0_15 = arith.constant 0 : index
    %34 = arith.index_cast %33 : i32 to index
    %c0_16 = arith.constant 0 : index
    %35 = vector.load %arg2[%c0_15, %34, %c0_16] : memref<2x16x768xf32, #tpu.memory_space<vmem>>, vector<1x1x768xf32>
    %36 = vector.shape_cast %35 : vector<1x1x768xf32> to vector<1x768xf32>
    %c0_i32_17 = arith.constant 0 : i32
    %37 = arith.addi %0, %c0_i32_17 : i32
    %38 = arith.index_cast %37 : i32 to index
    %c6 = arith.constant 6 : index
    %39 = memref.load %arg1[%38, %c6] : memref<2x8xi32, #tpu.memory_space<smem>>
    %c0_18 = arith.constant 0 : index
    %40 = arith.index_cast %39 : i32 to index
    %c0_19 = arith.constant 0 : index
    %41 = vector.load %arg2[%c0_18, %40, %c0_19] : memref<2x16x768xf32, #tpu.memory_space<vmem>>, vector<1x1x768xf32>
    %42 = vector.shape_cast %41 : vector<1x1x768xf32> to vector<1x768xf32>
    %c0_i32_20 = arith.constant 0 : i32
    %43 = arith.addi %0, %c0_i32_20 : i32
    %44 = arith.index_cast %43 : i32 to index
    %c7 = arith.constant 7 : index
    %45 = memref.load %arg1[%44, %c7] : memref<2x8xi32, #tpu.memory_space<smem>>
    %c0_21 = arith.constant 0 : index
    %46 = arith.index_cast %45 : i32 to index
    %c0_22 = arith.constant 0 : index
    %47 = vector.load %arg2[%c0_21, %46, %c0_22] : memref<2x16x768xf32, #tpu.memory_space<vmem>>, vector<1x1x768xf32>
    %48 = vector.shape_cast %47 : vector<1x1x768xf32> to vector<1x768xf32>
    %c1_i32 = arith.constant 1 : i32
    %49 = arith.addi %0, %c1_i32 : i32
    %50 = arith.index_cast %49 : i32 to index
    %c0_23 = arith.constant 0 : index
    %51 = memref.load %arg1[%50, %c0_23] : memref<2x8xi32, #tpu.memory_space<smem>>
    %c1_24 = arith.constant 1 : index
    %52 = arith.index_cast %51 : i32 to index
    %c0_25 = arith.constant 0 : index
    %53 = vector.load %arg2[%c1_24, %52, %c0_25] : memref<2x16x768xf32, #tpu.memory_space<vmem>>, vector<1x1x768xf32>
    %54 = vector.shape_cast %53 : vector<1x1x768xf32> to vector<1x768xf32>
    %c1_i32_26 = arith.constant 1 : i32
    %55 = arith.addi %0, %c1_i32_26 : i32
    %56 = arith.index_cast %55 : i32 to index
    %c1_27 = arith.constant 1 : index
    %57 = memref.load %arg1[%56, %c1_27] : memref<2x8xi32, #tpu.memory_space<smem>>
    %c1_28 = arith.constant 1 : index
    %58 = arith.index_cast %57 : i32 to index
    %c0_29 = arith.constant 0 : index
    %59 = vector.load %arg2[%c1_28, %58, %c0_29] : memref<2x16x768xf32, #tpu.memory_space<vmem>>, vector<1x1x768xf32>
    %60 = vector.shape_cast %59 : vector<1x1x768xf32> to vector<1x768xf32>
    %c1_i32_30 = arith.constant 1 : i32
    %61 = arith.addi %0, %c1_i32_30 : i32
    %62 = arith.index_cast %61 : i32 to index
    %c2_31 = arith.constant 2 : index
    %63 = memref.load %arg1[%62, %c2_31] : memref<2x8xi32, #tpu.memory_space<smem>>
    %c1_32 = arith.constant 1 : index
    %64 = arith.index_cast %63 : i32 to index
    %c0_33 = arith.constant 0 : index
    %65 = vector.load %arg2[%c1_32, %64, %c0_33] : memref<2x16x768xf32, #tpu.memory_space<vmem>>, vector<1x1x768xf32>
    %66 = vector.shape_cast %65 : vector<1x1x768xf32> to vector<1x768xf32>
    %c1_i32_34 = arith.constant 1 : i32
    %67 = arith.addi %0, %c1_i32_34 : i32
    %68 = arith.index_cast %67 : i32 to index
    %c3_35 = arith.constant 3 : index
    %69 = memref.load %arg1[%68, %c3_35] : memref<2x8xi32, #tpu.memory_space<smem>>
    %c1_36 = arith.constant 1 : index
    %70 = arith.index_cast %69 : i32 to index
    %c0_37 = arith.constant 0 : index
    %71 = vector.load %arg2[%c1_36, %70, %c0_37] : memref<2x16x768xf32, #tpu.memory_space<vmem>>, vector<1x1x768xf32>
    %72 = vector.shape_cast %71 : vector<1x1x768xf32> to vector<1x768xf32>
    %c1_i32_38 = arith.constant 1 : i32
    %73 = arith.addi %0, %c1_i32_38 : i32
    %74 = arith.index_cast %73 : i32 to index
    %c4_39 = arith.constant 4 : index
    %75 = memref.load %arg1[%74, %c4_39] : memref<2x8xi32, #tpu.memory_space<smem>>
    %c1_40 = arith.constant 1 : index
    %76 = arith.index_cast %75 : i32 to index
    %c0_41 = arith.constant 0 : index
    %77 = vector.load %arg2[%c1_40, %76, %c0_41] : memref<2x16x768xf32, #tpu.memory_space<vmem>>, vector<1x1x768xf32>
    %78 = vector.shape_cast %77 : vector<1x1x768xf32> to vector<1x768xf32>
    %c1_i32_42 = arith.constant 1 : i32
    %79 = arith.addi %0, %c1_i32_42 : i32
    %80 = arith.index_cast %79 : i32 to index
    %c5_43 = arith.constant 5 : index
    %81 = memref.load %arg1[%80, %c5_43] : memref<2x8xi32, #tpu.memory_space<smem>>
    %c1_44 = arith.constant 1 : index
    %82 = arith.index_cast %81 : i32 to index
    %c0_45 = arith.constant 0 : index
    %83 = vector.load %arg2[%c1_44, %82, %c0_45] : memref<2x16x768xf32, #tpu.memory_space<vmem>>, vector<1x1x768xf32>
    %84 = vector.shape_cast %83 : vector<1x1x768xf32> to vector<1x768xf32>
    %c1_i32_46 = arith.constant 1 : i32
    %85 = arith.addi %0, %c1_i32_46 : i32
    %86 = arith.index_cast %85 : i32 to index
    %c6_47 = arith.constant 6 : index
    %87 = memref.load %arg1[%86, %c6_47] : memref<2x8xi32, #tpu.memory_space<smem>>
    %c1_48 = arith.constant 1 : index
    %88 = arith.index_cast %87 : i32 to index
    %c0_49 = arith.constant 0 : index
    %89 = vector.load %arg2[%c1_48, %88, %c0_49] : memref<2x16x768xf32, #tpu.memory_space<vmem>>, vector<1x1x768xf32>
    %90 = vector.shape_cast %89 : vector<1x1x768xf32> to vector<1x768xf32>
    %c1_i32_50 = arith.constant 1 : i32
    %91 = arith.addi %0, %c1_i32_50 : i32
    %92 = arith.index_cast %91 : i32 to index
    %c7_51 = arith.constant 7 : index
    %93 = memref.load %arg1[%92, %c7_51] : memref<2x8xi32, #tpu.memory_space<smem>>
    %c1_52 = arith.constant 1 : index
    %94 = arith.index_cast %93 : i32 to index
    %c0_53 = arith.constant 0 : index
    %95 = vector.load %arg2[%c1_52, %94, %c0_53] : memref<2x16x768xf32, #tpu.memory_space<vmem>>, vector<1x1x768xf32>
    %96 = vector.shape_cast %95 : vector<1x1x768xf32> to vector<1x768xf32>
    %97 = tpu.concatenate %6, %12, %18, %24, %30, %36, %42, %48, %54, %60, %66, %72, %78, %84, %90, %96 in 0 : vector<1x768xf32>, vector<1x768xf32>, vector<1x768xf32>, vector<1x768xf32>, vector<1x768xf32>, vector<1x768xf32>, vector<1x768xf32>, vector<1x768xf32>, vector<1x768xf32>, vector<1x768xf32>, vector<1x768xf32>, vector<1x768xf32>, vector<1x768xf32>, vector<1x768xf32>, vector<1x768xf32>, vector<1x768xf32> -> vector<16x768xf32>
    %98 = vector.shape_cast %97 : vector<16x768xf32> to vector<2x8x768xf32>
    %99 = vector.shape_cast %98 : vector<2x8x768xf32> to vector<16x768xf32>
    %100 = arith.truncf %99 : vector<16x768xf32> to vector<16x768xbf16>
    %c0_54 = arith.constant 0 : index
    %c0_55 = arith.constant 0 : index
    %101 = vector.load %arg3[%c0_54, %c0_55] : memref<768x256xbf16, #tpu.memory_space<vmem>>, vector<768x256xbf16>
    %cst = arith.constant dense<0.000000e+00> : vector<16x256xf32>
    %102 = tpu.matmul %100, %101, %cst {dimension_numbers = #tpu.dot_dimension_numbers<[1], [0], [0], [1], [0, 0, 1, 1], [], []>} : vector<16x768xbf16>, vector<768x256xbf16>, vector<16x256xf32> -> vector<16x256xf32>
    %103 = vector.extract_strided_slice %102 {offsets = [0, 0], sizes = [16, 128], strides = [1, 1]} : vector<16x256xf32> to vector<16x128xf32>
    %104 = vector.shape_cast %103 : vector<16x128xf32> to vector<2x8x1x128xf32>
    %105 = vector.extract_strided_slice %102 {offsets = [0, 128], sizes = [16, 128], strides = [1, 1]} : vector<16x256xf32> to vector<16x128xf32>
    %106 = vector.shape_cast %105 : vector<16x128xf32> to vector<2x1x8x128xf32>
    %107 = vector.shape_cast %100 : vector<16x768xbf16> to vector<2x8x768xbf16>
    %108 = vector.shape_cast %107 : vector<2x8x768xbf16> to vector<2x8x1x768xbf16>
    %109 = vector.shape_cast %107 : vector<2x8x768xbf16> to vector<2x1x8x768xbf16>
    %110 = vector.broadcast %108 : vector<2x8x1x768xbf16> to vector<2x8x8x768xbf16>
    %111 = vector.broadcast %109 : vector<2x1x8x768xbf16> to vector<2x8x8x768xbf16>
    %112 = arith.mulf %110, %111 : vector<2x8x8x768xbf16>
    %113 = vector.shape_cast %112 : vector<2x8x8x768xbf16> to vector<128x768xbf16>
    %c0_56 = arith.constant 0 : index
    %c0_57 = arith.constant 0 : index
    %114 = vector.load %arg4[%c0_56, %c0_57] : memref<768x128xbf16, #tpu.memory_space<vmem>>, vector<768x128xbf16>
    %cst_58 = arith.constant dense<0.000000e+00> : vector<128x128xf32>
    %115 = tpu.matmul %113, %114, %cst_58 {dimension_numbers = #tpu.dot_dimension_numbers<[1], [0], [0], [1], [0, 0, 1, 1], [], []>} : vector<128x768xbf16>, vector<768x128xbf16>, vector<128x128xf32> -> vector<128x128xf32>
    %116 = vector.shape_cast %115 : vector<128x128xf32> to vector<2x8x8x128xf32>
    %117 = vector.broadcast %104 : vector<2x8x1x128xf32> to vector<2x8x8x128xf32>
    %118 = arith.addf %116, %117 : vector<2x8x8x128xf32>
    %119 = vector.broadcast %106 : vector<2x1x8x128xf32> to vector<2x8x8x128xf32>
    %120 = arith.addf %118, %119 : vector<2x8x8x128xf32>
    %c0_59 = arith.constant 0 : index
    %c0_60 = arith.constant 0 : index
    %121 = vector.load %arg5[%c0_59, %c0_60] : memref<1x128xf32, #tpu.memory_space<vmem>>, vector<1x128xf32>
    %122 = vector.shape_cast %121 : vector<1x128xf32> to vector<1x1x1x128xf32>
    %123 = vector.broadcast %122 : vector<1x1x1x128xf32> to vector<2x8x8x128xf32>
    %124 = arith.addf %120, %123 : vector<2x8x8x128xf32>
    %125 = math.tanh %124 : vector<2x8x8x128xf32>
    %126 = vector.shape_cast %125 : vector<2x8x8x128xf32> to vector<128x128xf32>
    %127 = arith.truncf %126 : vector<128x128xf32> to vector<128x128xbf16>
    %c0_61 = arith.constant 0 : index
    %c0_62 = arith.constant 0 : index
    %128 = vector.load %arg6[%c0_61, %c0_62] : memref<128x128xbf16, #tpu.memory_space<vmem>>, vector<128x128xbf16>
    %cst_63 = arith.constant dense<0.000000e+00> : vector<128x128xf32>
    %129 = tpu.matmul %127, %128, %cst_63 {dimension_numbers = #tpu.dot_dimension_numbers<[1], [0], [0], [1], [0, 0, 1, 1], [], []>} : vector<128x128xbf16>, vector<128x128xbf16>, vector<128x128xf32> -> vector<128x128xf32>
    %c0_64 = arith.constant 0 : index
    %c0_65 = arith.constant 0 : index
    %130 = vector.load %arg7[%c0_64, %c0_65] : memref<1x128xf32, #tpu.memory_space<vmem>>, vector<1x128xf32>
    %131 = vector.broadcast %130 : vector<1x128xf32> to vector<128x128xf32>
    %132 = arith.addf %129, %131 : vector<128x128xf32>
    %133 = vector.shape_cast %132 : vector<128x128xf32> to vector<2x64x128xf32>
    %134 = arith.truncf %133 : vector<2x64x128xf32> to vector<2x64x128xbf16>
    %c0_66 = arith.constant 0 : index
    %c0_67 = arith.constant 0 : index
    %c0_68 = arith.constant 0 : index
    %135 = vector.load %arg8[%c0_66, %c0_67, %c0_68] : memref<2x64x128xbf16, #tpu.memory_space<vmem>>, vector<2x64x128xbf16>
    tpu.vector_store %arg8[%c0_66, %c0_67, %c0_68], %134 {strides = array<i32>} : memref<2x64x128xbf16, #tpu.memory_space<vmem>>, vector<2x64x128xbf16>,
    return
  }
  func.func @transform_0(%arg0: i32, %arg1: memref<2x8xi32, #tpu.memory_space<smem>>) -> (i32, i32, i32) {
    %c0_i32 = arith.constant 0 : i32
    %c0_i32_0 = arith.constant 0 : i32
    %c0_i32_1 = arith.constant 0 : i32
    return %arg0, %c0_i32, %c0_i32_0 : i32, i32, i32
  }
  func.func @transform_1(%arg0: i32, %arg1: memref<2x8xi32, #tpu.memory_space<smem>>) -> (i32, i32) {
    %c0_i32 = arith.constant 0 : i32
    %c0_i32_0 = arith.constant 0 : i32
    %c0_i32_1 = arith.constant 0 : i32
    return %c0_i32, %c0_i32_0 : i32, i32
  }
  func.func @transform_2(%arg0: i32, %arg1: memref<2x8xi32, #tpu.memory_space<smem>>) -> (i32, i32) {
    %c0_i32 = arith.constant 0 : i32
    %c0_i32_0 = arith.constant 0 : i32
    %c0_i32_1 = arith.constant 0 : i32
    return %c0_i32, %c0_i32_0 : i32, i32
  }
  func.func @transform_3(%arg0: i32, %arg1: memref<2x8xi32, #tpu.memory_space<smem>>) -> (i32, i32) {
    %c0_i32 = arith.constant 0 : i32
    %c0_i32_0 = arith.constant 0 : i32
    %c0_i32_1 = arith.constant 0 : i32
    return %c0_i32, %c0_i32_0 : i32, i32
  }
  func.func @transform_4(%arg0: i32, %arg1: memref<2x8xi32, #tpu.memory_space<smem>>) -> (i32, i32) {
    %c0_i32 = arith.constant 0 : i32
    %c0_i32_0 = arith.constant 0 : i32
    %c0_i32_1 = arith.constant 0 : i32
    return %c0_i32, %c0_i32_0 : i32, i32
  }
  func.func @transform_5(%arg0: i32, %arg1: memref<2x8xi32, #tpu.memory_space<smem>>) -> (i32, i32) {
    %c0_i32 = arith.constant 0 : i32
    %c0_i32_0 = arith.constant 0 : i32
    %c0_i32_1 = arith.constant 0 : i32
    return %c0_i32, %c0_i32_0 : i32, i32
  }
  func.func @transform_6(%arg0: i32, %arg1: memref<2x8xi32, #tpu.memory_space<smem>>) -> (i32, i32, i32) {
    %c0_i32 = arith.constant 0 : i32
    %c0_i32_0 = arith.constant 0 : i32
    %c0_i32_1 = arith.constant 0 : i32
    return %arg0, %c0_i32, %c0_i32_0 : i32, i32, i32
  }
}

</mosaic_0001>

<llo_original>
// kernel: tpu_custom_call.1
$region0: #{tpu_custom_call.1}
  #allocation0 [shape = 'u32[]', space=smem, size = 0x4, offset = 0x4, fixed_abs, tag = 'smem constant byte address 0x4 - core index']
  #allocation1 [shape = 'u32[144,128]{1,0:T(1,128)}', space=vmem, size = 0x12000, scoped, tag = 'internal scratch']
  #allocation2 [shape = 's32[1]{0}', space=sflag, size = 0x4, scoped, tag = 'scoped memory for tpu_custom_call.1']
  #allocation3 [shape = 'u8[1024]{0}', space=smem, size = 0x400, scoped, tag = 'prefetched SMEM operand 0']
  %s0 = inlined_call_operand.hbm [shape: s32[2,8], index: 0, kind: input, shape index: {}]
  %s1 = inlined_call_operand.hbm [shape: f32[2,16,768], index: 1, kind: input, shape index: {}]
  %s2 = inlined_call_operand.hbm [shape: bf16[768,256], index: 2, kind: input, shape index: {}]
  %s3 = inlined_call_operand.hbm [shape: bf16[768,128], index: 3, kind: input, shape index: {}]
  %s4 = inlined_call_operand.vmem [shape: f32[1,128], index: 4, kind: input, shape index: {}]
  %s5 = inlined_call_operand.hbm [shape: bf16[128,128], index: 5, kind: input, shape index: {}]
  %s6 = inlined_call_operand.vmem [shape: f32[1,128], index: 6, kind: input, shape index: {}]
  %s7 = inlined_call_operand.hbm [shape: bf16[2,64,128], index: 7, kind: output, shape index: {}]
  %s8 = sld [smem:[#allocation0]]
  $region50: #{tpu_custom_call.1} parent=0
    _
  %s10 = ssub.s32 1, %s8
  %s11 = scalar_select 0, %s10, %s8
  %13 = dma.hbm_to_smem %s0, 32, [#allocation3], [#allocation2]
  %14 = dma.done [#allocation2], 32
  %15 = sfence
  $region1: #{tpu_custom_call.1} parent=0
    #allocation4 [shape = 'u8[98304]{0}', space=vmem, size = 0x18000, scoped, tag = 'input window, operand 1, single buffered']
    #allocation5 [shape = 's32[1]{0}', space=sflag, size = 0x4, scoped, tag = 'scoped memory for tpu_custom_call.1']
    #allocation6 [shape = 's32[1]{0}', space=sflag, size = 0x4, scoped, tag = 'scoped memory for tpu_custom_call.1']
    #allocation7 [shape = 'u8[393216]{0}', space=vmem, size = 0x60000, scoped, tag = 'input window, operand 2, single buffered']
    #allocation8 [shape = 's32[1]{0}', space=sflag, size = 0x4, scoped, tag = 'scoped memory for tpu_custom_call.1']
    #allocation9 [shape = 'u8[196608]{0}', space=vmem, size = 0x30000, scoped, tag = 'input window, operand 3, single buffered']
    #allocation10 [shape = 'u8[32768]{0}', space=vmem, size = 0x8000, scoped, tag = 'input window, operand 5, single buffered']
    #allocation11 [shape = 's32[1]{0}', space=sflag, size = 0x4, scoped, tag = 'scoped memory for tpu_custom_call.1']
    #allocation12 [shape = 'u8[32768]{0}', space=vmem, size = 0x8000, scoped, tag = 'output window, operand 0, single buffered']
    %16 = vsyncpa [#allocation5], 0
    %17 = vsyncpa [#allocation8], 0
    %18 = vsyncpa [#allocation11], 0
    %19 = vsyncpa [#allocation6], 0
    // Predicated region
    $region2: #{tpu_custom_call.1} parent=1 // pred_check
      _
    $region3: #{tpu_custom_call.1} parent=1 // pred_check_branch
      %21 = sbr.rel (0) target = $region5
    $region4: #{tpu_custom_call.1} parent=1 // pred_region
      %s23 = ssub.s32 3072, 3072
      %24 = vsyncadd [#allocation5], %s23
      %s25 = sshll.u32 [#allocation4], 4
      %s26 = int_to_ptr.vmem [resolvable:$true] %s25
      %31 = dma.hbm_to_vmem [thread:$0]  %s1, 3072, %s26, [#allocation5], 768, 768, 48
    $region5: #{tpu_custom_call.1} parent=1 // pred_fallthru
      _
    // Predicated region
    $region6: #{tpu_custom_call.1} parent=1 // pred_check
      _
    $region7: #{tpu_custom_call.1} parent=1 // pred_check_branch
      %33 = sbr.rel (0) target = $region9
    $region8: #{tpu_custom_call.1} parent=1 // pred_region
      %s35 = ssub.s32 12288, 12288
      %36 = vsyncadd [#allocation8], %s35
      %s37 = sshll.u32 [#allocation7], 4
      %s38 = int_to_ptr.vmem [resolvable:$true] %s37
      %43 = dma.hbm_to_vmem [thread:$0]  %s2, 12288, %s38, [#allocation8], 128, 128, 8
    $region9: #{tpu_custom_call.1} parent=1 // pred_fallthru
      _
    // Predicated region
    $region10: #{tpu_custom_call.1} parent=1 // pred_check
      _
    $region11: #{tpu_custom_call.1} parent=1 // pred_check_branch
      %45 = sbr.rel (0) target = $region13
    $region12: #{tpu_custom_call.1} parent=1 // pred_region
      %s47 = ssub.s32 6144, 6144
      %48 = vsyncadd [#allocation8], %s47
      %s49 = sshll.u32 [#allocation9], 4
      %s50 = int_to_ptr.vmem [resolvable:$true] %s49
      %55 = dma.hbm_to_vmem [thread:$0]  %s3, 6144, %s50, [#allocation8], 64, 64, 4
    $region13: #{tpu_custom_call.1} parent=1 // pred_fallthru
      _
    // Predicated region
    $region14: #{tpu_custom_call.1} parent=1 // pred_check
      _
    $region15: #{tpu_custom_call.1} parent=1 // pred_check_branch
      %57 = sbr.rel (0) target = $region17
    $region16: #{tpu_custom_call.1} parent=1 // pred_region
      _
    $region17: #{tpu_custom_call.1} parent=1 // pred_fallthru
      _
    // Predicated region
    $region18: #{tpu_custom_call.1} parent=1 // pred_check
      _
    $region19: #{tpu_custom_call.1} parent=1 // pred_check_branch
      %59 = sbr.rel (0) target = $region21
    $region20: #{tpu_custom_call.1} parent=1 // pred_region
      %s61 = ssub.s32 1024, 1024
      %62 = vsyncadd [#allocation11], %s61
      %s63 = sshll.u32 [#allocation10], 4
      %s64 = int_to_ptr.vmem [resolvable:$true] %s63
      %69 = dma.hbm_to_vmem [thread:$0]  %s5, 1024, %s64, [#allocation11], 64, 64, 4
    $region21: #{tpu_custom_call.1} parent=1 // pred_fallthru
      _
    // Predicated region
    $region22: #{tpu_custom_call.1} parent=1 // pred_check
      _
    $region23: #{tpu_custom_call.1} parent=1 // pred_check_branch
      %71 = sbr.rel (0) target = $region25
    $region24: #{tpu_custom_call.1} parent=1 // pred_region
      _
    $region25: #{tpu_custom_call.1} parent=1 // pred_fallthru
      _
    // Predicated region
    $region26: #{tpu_custom_call.1} parent=1 // pred_check
      _
    $region27: #{tpu_custom_call.1} parent=1 // pred_check_branch
      %73 = sbr.rel (0) target = $region29
    $region28: #{tpu_custom_call.1} parent=1 // pred_region
      %74 = dma.done [#allocation5], 3072
    $region29: #{tpu_custom_call.1} parent=1 // pred_fallthru
      _
    // Predicated region
    $region30: #{tpu_custom_call.1} parent=1 // pred_check
      _
    $region31: #{tpu_custom_call.1} parent=1 // pred_check_branch
      %76 = sbr.rel (0) target = $region33
    $region32: #{tpu_custom_call.1} parent=1 // pred_region
      %77 = dma.done [#allocation8], 12288
    $region33: #{tpu_custom_call.1} parent=1 // pred_fallthru
      _
    // Predicated region
    $region34: #{tpu_custom_call.1} parent=1 // pred_check
      _
    $region35: #{tpu_custom_call.1} parent=1 // pred_check_branch
      %79 = sbr.rel (0) target = $region37
    $region36: #{tpu_custom_call.1} parent=1 // pred_region
      %80 = dma.done [#allocation8], 6144
    $region37: #{tpu_custom_call.1} parent=1 // pred_fallthru
      _
    // Predicated region
    $region38: #{tpu_custom_call.1} parent=1 // pred_check
      _
    $region39: #{tpu_custom_call.1} parent=1 // pred_check_branch
      %82 = sbr.rel (0) target = $region41
    $region40: #{tpu_custom_call.1} parent=1 // pred_region
      %83 = dma.done [#allocation11], 1024
    $region41: #{tpu_custom_call.1} parent=1 // pred_fallthru
      _
    %s85 = smul.u32 0, 2
    %s86 = smul.u32 %s85, 128
    %s87 = sld [smem:[#allocation3 + %s86]]
    %s88 = sshra.s32 %s87, 3
    %s89 = sand.u32 %s87, 7
    %s90 = sshra.s32 %s87, 3
    %s91 = sand.u32 %s87, 7
    %s92 = smul.u32 %s88, 6
    %s93 = smul.u32 %s92, 8
    %s94 = sadd.s32 %s93, %s91
    %s95 = scalar_lea.vmem [#allocation4], %s94
    %v96 = vld [vmem:[%s95] ss:$8 sm:$0xf]
    %v97 = vld [vmem:[%s95] ss:$8 sm:$0x30]
    %v98 = vor.u32 %v96, %v97
    %s99 = sadd.s32 %s86, 1
    %s100 = sld [smem:[#allocation3 + %s99]]
    %s101 = sshra.s32 %s100, 3
    %s102 = sand.u32 %s100, 7
    %s103 = sshra.s32 %s100, 3
    %s104 = sand.u32 %s100, 7
    %s105 = smul.u32 %s101, 6
    %s106 = smul.u32 %s105, 8
    %s107 = sadd.s32 %s106, %s104
    %s108 = scalar_lea.vmem [#allocation4], %s107
    %v109 = vld [vmem:[%s108] ss:$8 sm:$0xf]
    %v110 = vld [vmem:[%s108] ss:$8 sm:$0x30]
    %v111 = vor.u32 %v109, %v110
    %s112 = sadd.s32 %s86, 2
    %s113 = sld [smem:[#allocation3 + %s112]]
    %s114 = sshra.s32 %s113, 3
    %s115 = sand.u32 %s113, 7
    %s116 = sshra.s32 %s113, 3
    %s117 = sand.u32 %s113, 7
    %s118 = smul.u32 %s114, 6
    %s119 = smul.u32 %s118, 8
    %s120 = sadd.s32 %s119, %s117
    %s121 = scalar_lea.vmem [#allocation4], %s120
    %v122 = vld [vmem:[%s121] ss:$8 sm:$0xf]
    %v123 = vld [vmem:[%s121] ss:$8 sm:$0x30]
    %v124 = vor.u32 %v122, %v123
    %s125 = sadd.s32 %s86, 3
    %s126 = sld [smem:[#allocation3 + %s125]]
    %s127 = sshra.s32 %s126, 3
    %s128 = sand.u32 %s126, 7
    %s129 = sshra.s32 %s126, 3
    %s130 = sand.u32 %s126, 7
    %s131 = smul.u32 %s127, 6
    %s132 = smul.u32 %s131, 8
    %s133 = sadd.s32 %s132, %s130
    %s134 = scalar_lea.vmem [#allocation4], %s133
    %v135 = vld [vmem:[%s134] ss:$8 sm:$0xf]
    %v136 = vld [vmem:[%s134] ss:$8 sm:$0x30]
    %v137 = vor.u32 %v135, %v136
    %s138 = sadd.s32 %s86, 4
    %s139 = sld [smem:[#allocation3 + %s138]]
    %s140 = sshra.s32 %s139, 3
    %s141 = sand.u32 %s139, 7
    %s142 = sshra.s32 %s139, 3
    %s143 = sand.u32 %s139, 7
    %s144 = smul.u32 %s140, 6
    %s145 = smul.u32 %s144, 8
    %s146 = sadd.s32 %s145, %s143
    %s147 = scalar_lea.vmem [#allocation4], %s146
    %v148 = vld [vmem:[%s147] ss:$8 sm:$0xf]
    %v149 = vld [vmem:[%s147] ss:$8 sm:$0x30]
    %v150 = vor.u32 %v148, %v149
    %s151 = sadd.s32 %s86, 5
    %s152 = sld [smem:[#allocation3 + %s151]]
    %s153 = sshra.s32 %s152, 3
    %s154 = sand.u32 %s152, 7
    %s155 = sshra.s32 %s152, 3
    %s156 = sand.u32 %s152, 7
    %s157 = smul.u32 %s153, 6
    %s158 = smul.u32 %s157, 8
    %s159 = sadd.s32 %s158, %s156
    %s160 = scalar_lea.vmem [#allocation4], %s159
    %v161 = vld [vmem:[%s160] ss:$8 sm:$0xf]
    %v162 = vld [vmem:[%s160] ss:$8 sm:$0x30]
    %v163 = vor.u32 %v161, %v162
    %s164 = sadd.s32 %s86, 6
    %s165 = sld [smem:[#allocation3 + %s164]]
    %s166 = sshra.s32 %s165, 3
    %s167 = sand.u32 %s165, 7
    %s168 = sshra.s32 %s165, 3
    %s169 = sand.u32 %s165, 7
    %s170 = smul.u32 %s166, 6
    %s171 = smul.u32 %s170, 8
    %s172 = sadd.s32 %s171, %s169
    %s173 = scalar_lea.vmem [#allocation4], %s172
    %v174 = vld [vmem:[%s173] ss:$8 sm:$0xf]
    %v175 = vld [vmem:[%s173] ss:$8 sm:$0x30]
    %v176 = vor.u32 %v174, %v175
    %s177 = sadd.s32 %s86, 7
    %s178 = sld [smem:[#allocation3 + %s177]]
    %s179 = sshra.s32 %s178, 3
    %s180 = sand.u32 %s178, 7
    %s181 = sshra.s32 %s178, 3
    %s182 = sand.u32 %s178, 7
    %s183 = smul.u32 %s179, 6
    %s184 = smul.u32 %s183, 8
    %s185 = sadd.s32 %s184, %s182
    %s186 = scalar_lea.vmem [#allocation4], %s185
    %v187 = vld [vmem:[%s186] ss:$8 sm:$0xf]
    %v188 = vld [vmem:[%s186] ss:$8 sm:$0x30]
    %v189 = vor.u32 %v187, %v188
    %s190 = sadd.s32 %s85, 1
    %s191 = smul.u32 %s190, 128
    %s192 = sld [smem:[#allocation3 + %s191]]
    %s193 = sshra.s32 %s192, 3
    %s194 = sand.u32 %s192, 7
    %s195 = sshra.s32 %s192, 3
    %s196 = sand.u32 %s192, 7
    %s197 = smul.u32 %s193, 6
    %s198 = smul.u32 %s197, 8
    %s199 = sadd.s32 %s198, %s196
    %s200 = sadd.s32 96, %s199
    %s201 = scalar_lea.vmem [#allocation4], %s200
    %v202 = vld [vmem:[%s201] ss:$8 sm:$0xf]
    %v203 = vld [vmem:[%s201] ss:$8 sm:$0x30]
    %v204 = vor.u32 %v202, %v203
    %s205 = sadd.s32 %s191, 1
    %s206 = sld [smem:[#allocation3 + %s205]]
    %s207 = sshra.s32 %s206, 3
    %s208 = sand.u32 %s206, 7
    %s209 = sshra.s32 %s206, 3
    %s210 = sand.u32 %s206, 7
    %s211 = smul.u32 %s207, 6
    %s212 = smul.u32 %s211, 8
    %s213 = sadd.s32 %s212, %s210
    %s214 = sadd.s32 96, %s213
    %s215 = scalar_lea.vmem [#allocation4], %s214
    %v216 = vld [vmem:[%s215] ss:$8 sm:$0xf]
    %v217 = vld [vmem:[%s215] ss:$8 sm:$0x30]
    %v218 = vor.u32 %v216, %v217
    %s219 = sadd.s32 %s191, 2
    %s220 = sld [smem:[#allocation3 + %s219]]
    %s221 = sshra.s32 %s220, 3
    %s222 = sand.u32 %s220, 7
    %s223 = sshra.s32 %s220, 3
    %s224 = sand.u32 %s220, 7
    %s225 = smul.u32 %s221, 6
    %s226 = smul.u32 %s225, 8
    %s227 = sadd.s32 %s226, %s224
    %s228 = sadd.s32 96, %s227
    %s229 = scalar_lea.vmem [#allocation4], %s228
    %v230 = vld [vmem:[%s229] ss:$8 sm:$0xf]
    %v231 = vld [vmem:[%s229] ss:$8 sm:$0x30]
    %v232 = vor.u32 %v230, %v231
    %s233 = sadd.s32 %s191, 3
    %s234 = sld [smem:[#allocation3 + %s233]]
    %s235 = sshra.s32 %s234, 3
    %s236 = sand.u32 %s234, 7
    %s237 = sshra.s32 %s234, 3
    %s238 = sand.u32 %s234, 7
    %s239 = smul.u32 %s235, 6
    %s240 = smul.u32 %s239, 8
    %s241 = sadd.s32 %s240, %s238
    %s242 = sadd.s32 96, %s241
    %s243 = scalar_lea.vmem [#allocation4], %s242
    %v244 = vld [vmem:[%s243] ss:$8 sm:$0xf]
    %v245 = vld [vmem:[%s243] ss:$8 sm:$0x30]
    %v246 = vor.u32 %v244, %v245
    %s247 = sadd.s32 %s191, 4
    %s248 = sld [smem:[#allocation3 + %s247]]
    %s249 = sshra.s32 %s248, 3
    %s250 = sand.u32 %s248, 7
    %s251 = sshra.s32 %s248, 3
    %s252 = sand.u32 %s248, 7
    %s253 = smul.u32 %s249, 6
    %s254 = smul.u32 %s253, 8
    %s255 = sadd.s32 %s254, %s252
    %s256 = sadd.s32 96, %s255
    %s257 = scalar_lea.vmem [#allocation4], %s256
    %v258 = vld [vmem:[%s257] ss:$8 sm:$0xf]
    %v259 = vld [vmem:[%s257] ss:$8 sm:$0x30]
    %v260 = vor.u32 %v258, %v259
    %s261 = sadd.s32 %s191, 5
    %s262 = sld [smem:[#allocation3 + %s261]]
    %s263 = sshra.s32 %s262, 3
    %s264 = sand.u32 %s262, 7
    %s265 = sshra.s32 %s262, 3
    %s266 = sand.u32 %s262, 7
    %s267 = smul.u32 %s263, 6
    %s268 = smul.u32 %s267, 8
    %s269 = sadd.s32 %s268, %s266
    %s270 = sadd.s32 96, %s269
    %s271 = scalar_lea.vmem [#allocation4], %s270
    %v272 = vld [vmem:[%s271] ss:$8 sm:$0xf]
    %v273 = vld [vmem:[%s271] ss:$8 sm:$0x30]
    %v274 = vor.u32 %v272, %v273
    %s275 = sadd.s32 %s191, 6
    %s276 = sld [smem:[#allocation3 + %s275]]
    %s277 = sshra.s32 %s276, 3
    %s278 = sand.u32 %s276, 7
    %s279 = sshra.s32 %s276, 3
    %s280 = sand.u32 %s276, 7
    %s281 = smul.u32 %s277, 6
    %s282 = smul.u32 %s281, 8
    %s283 = sadd.s32 %s282, %s280
    %s284 = sadd.s32 96, %s283
    %s285 = scalar_lea.vmem [#allocation4], %s284
    %v286 = vld [vmem:[%s285] ss:$8 sm:$0xf]
    %v287 = vld [vmem:[%s285] ss:$8 sm:$0x30]
    %v288 = vor.u32 %v286, %v287
    %s289 = sadd.s32 %s191, 7
    %s290 = sld [smem:[#allocation3 + %s289]]
    %s291 = sshra.s32 %s290, 3
    %s292 = sand.u32 %s290, 7
    %s293 = sshra.s32 %s290, 3
    %s294 = sand.u32 %s290, 7
    %s295 = smul.u32 %s291, 6
    %s296 = smul.u32 %s295, 8
    %s297 = sadd.s32 %s296, %s294
    %s298 = sadd.s32 96, %s297
    %s299 = scalar_lea.vmem [#allocation4], %s298
    %v300 = vld [vmem:[%s299] ss:$8 sm:$0xf]
    %v301 = vld [vmem:[%s299] ss:$8 sm:$0x30]
    %v302 = vor.u32 %v300, %v301
    %v304 = vlaneseq
    %v305 = vshrl.u32 %v304, 7
    %v306 = vsub.s32 0, %v305
    %v307 = vrot.slane %v98, %v306
    %v308 = vlaneseq
    %v309 = vshrl.u32 %v308, 7
    %v310 = vsub.s32 1, %v309
    %v311 = vrot.slane %v98, %v310
    %v312 = vlaneseq
    %v313 = vshrl.u32 %v312, 7
    %v314 = vsub.s32 2, %v313
    %v315 = vrot.slane %v98, %v314
    %v316 = vlaneseq
    %v317 = vshrl.u32 %v316, 7
    %v318 = vsub.s32 3, %v317
    %v319 = vrot.slane %v98, %v318
    %v320 = vlaneseq
    %v321 = vshrl.u32 %v320, 7
    %v322 = vsub.s32 4, %v321
    %v323 = vrot.slane %v98, %v322
    %v324 = vlaneseq
    %v325 = vshrl.u32 %v324, 7
    %v326 = vsub.s32 5, %v325
    %v327 = vrot.slane %v98, %v326
    %v335 = vlaneseq
    %v336 = vshrl.u32 %v335, 7
    %v337 = vsub.s32 0, %v336
    %v338 = vrot.slane %v111, %v337
    %v339 = vlaneseq
    %v340 = vshrl.u32 %v339, 7
    %v341 = vsub.s32 1, %v340
    %v342 = vrot.slane %v111, %v341
    %v343 = vlaneseq
    %v344 = vshrl.u32 %v343, 7
    %v345 = vsub.s32 2, %v344
    %v346 = vrot.slane %v111, %v345
    %v347 = vlaneseq
    %v348 = vshrl.u32 %v347, 7
    %v349 = vsub.s32 3, %v348
    %v350 = vrot.slane %v111, %v349
    %v351 = vlaneseq
    %v352 = vshrl.u32 %v351, 7
    %v353 = vsub.s32 4, %v352
    %v354 = vrot.slane %v111, %v353
    %v355 = vlaneseq
    %v356 = vshrl.u32 %v355, 7
    %v357 = vsub.s32 5, %v356
    %v358 = vrot.slane %v111, %v357
    %v366 = vlaneseq
    %v367 = vshrl.u32 %v366, 7
    %v368 = vsub.s32 0, %v367
    %v369 = vrot.slane %v124, %v368
    %v370 = vlaneseq
    %v371 = vshrl.u32 %v370, 7
    %v372 = vsub.s32 1, %v371
    %v373 = vrot.slane %v124, %v372
    %v374 = vlaneseq
    %v375 = vshrl.u32 %v374, 7
    %v376 = vsub.s32 2, %v375
    %v377 = vrot.slane %v124, %v376
    %v378 = vlaneseq
    %v379 = vshrl.u32 %v378, 7
    %v380 = vsub.s32 3, %v379
    %v381 = vrot.slane %v124, %v380
    %v382 = vlaneseq
    %v383 = vshrl.u32 %v382, 7
    %v384 = vsub.s32 4, %v383
    %v385 = vrot.slane %v124, %v384
    %v386 = vlaneseq
    %v387 = vshrl.u32 %v386, 7
    %v388 = vsub.s32 5, %v387
    %v389 = vrot.slane %v124, %v388
    %v397 = vlaneseq
    %v398 = vshrl.u32 %v397, 7
    %v399 = vsub.s32 0, %v398
    %v400 = vrot.slane %v137, %v399
    %v401 = vlaneseq
    %v402 = vshrl.u32 %v401, 7
    %v403 = vsub.s32 1, %v402
    %v404 = vrot.slane %v137, %v403
    %v405 = vlaneseq
    %v406 = vshrl.u32 %v405, 7
    %v407 = vsub.s32 2, %v406
    %v408 = vrot.slane %v137, %v407
    %v409 = vlaneseq
    %v410 = vshrl.u32 %v409, 7
    %v411 = vsub.s32 3, %v410
    %v412 = vrot.slane %v137, %v411
    %v413 = vlaneseq
    %v414 = vshrl.u32 %v413, 7
    %v415 = vsub.s32 4, %v414
    %v416 = vrot.slane %v137, %v415
    %v417 = vlaneseq
    %v418 = vshrl.u32 %v417, 7
    %v419 = vsub.s32 5, %v418
    %v420 = vrot.slane %v137, %v419
    %v428 = vlaneseq
    %v429 = vshrl.u32 %v428, 7
    %v430 = vsub.s32 0, %v429
    %v431 = vrot.slane %v150, %v430
    %v432 = vlaneseq
    %v433 = vshrl.u32 %v432, 7
    %v434 = vsub.s32 1, %v433
    %v435 = vrot.slane %v150, %v434
    %v436 = vlaneseq
    %v437 = vshrl.u32 %v436, 7
    %v438 = vsub.s32 2, %v437
    %v439 = vrot.slane %v150, %v438
    %v440 = vlaneseq
    %v441 = vshrl.u32 %v440, 7
    %v442 = vsub.s32 3, %v441
    %v443 = vrot.slane %v150, %v442
    %v444 = vlaneseq
    %v445 = vshrl.u32 %v444, 7
    %v446 = vsub.s32 4, %v445
    %v447 = vrot.slane %v150, %v446
    %v448 = vlaneseq
    %v449 = vshrl.u32 %v448, 7
    %v450 = vsub.s32 5, %v449
    %v451 = vrot.slane %v150, %v450
    %v459 = vlaneseq
    %v460 = vshrl.u32 %v459, 7
    %v461 = vsub.s32 0, %v460
    %v462 = vrot.slane %v163, %v461
    %v463 = vlaneseq
    %v464 = vshrl.u32 %v463, 7
    %v465 = vsub.s32 1, %v464
    %v466 = vrot.slane %v163, %v465
    %v467 = vlaneseq
    %v468 = vshrl.u32 %v467, 7
    %v469 = vsub.s32 2, %v468
    %v470 = vrot.slane %v163, %v469
    %v471 = vlaneseq
    %v472 = vshrl.u32 %v471, 7
    %v473 = vsub.s32 3, %v472
    %v474 = vrot.slane %v163, %v473
    %v475 = vlaneseq
    %v476 = vshrl.u32 %v475, 7
    %v477 = vsub.s32 4, %v476
    %v478 = vrot.slane %v163, %v477
    %v479 = vlaneseq
    %v480 = vshrl.u32 %v479, 7
    %v481 = vsub.s32 5, %v480
    %v482 = vrot.slane %v163, %v481
    %v490 = vlaneseq
    %v491 = vshrl.u32 %v490, 7
    %v492 = vsub.s32 0, %v491
    %v493 = vrot.slane %v176, %v492
    %v494 = vlaneseq
    %v495 = vshrl.u32 %v494, 7
    %v496 = vsub.s32 1, %v495
    %v497 = vrot.slane %v176, %v496
    %v498 = vlaneseq
    %v499 = vshrl.u32 %v498, 7
    %v500 = vsub.s32 2, %v499
    %v501 = vrot.slane %v176, %v500
    %v502 = vlaneseq
    %v503 = vshrl.u32 %v502, 7
    %v504 = vsub.s32 3, %v503
    %v505 = vrot.slane %v176, %v504
    %v506 = vlaneseq
    %v507 = vshrl.u32 %v506, 7
    %v508 = vsub.s32 4, %v507
    %v509 = vrot.slane %v176, %v508
    %v510 = vlaneseq
    %v511 = vshrl.u32 %v510, 7
    %v512 = vsub.s32 5, %v511
    %v513 = vrot.slane %v176, %v512
    %v521 = vlaneseq
    %v522 = vshrl.u32 %v521, 7
    %v523 = vsub.s32 0, %v522
    %v524 = vrot.slane %v189, %v523
    %v525 = vlaneseq
    %v526 = vshrl.u32 %v525, 7
    %v527 = vsub.s32 1, %v526
    %v528 = vrot.slane %v189, %v527
    %v529 = vlaneseq
    %v530 = vshrl.u32 %v529, 7
    %v531 = vsub.s32 2, %v530
    %v532 = vrot.slane %v189, %v531
    %v533 = vlaneseq
    %v534 = vshrl.u32 %v533, 7
    %v535 = vsub.s32 3, %v534
    %v536 = vrot.slane %v189, %v535
    %v537 = vlaneseq
    %v538 = vshrl.u32 %v537, 7
    %v539 = vsub.s32 4, %v538
    %v540 = vrot.slane %v189, %v539
    %v541 = vlaneseq
    %v542 = vshrl.u32 %v541, 7
    %v543 = vsub.s32 5, %v542
    %v544 = vrot.slane %v189, %v543
    %v552 = vlaneseq
    %v553 = vshrl.u32 %v552, 7
    %v554 = vsub.s32 0, %v553
    %v555 = vrot.slane %v204, %v554
    %v556 = vlaneseq
    %v557 = vshrl.u32 %v556, 7
    %v558 = vsub.s32 1, %v557
    %v559 = vrot.slane %v204, %v558
    %v560 = vlaneseq
    %v561 = vshrl.u32 %v560, 7
    %v562 = vsub.s32 2, %v561
    %v563 = vrot.slane %v204, %v562
    %v564 = vlaneseq
    %v565 = vshrl.u32 %v564, 7
    %v566 = vsub.s32 3, %v565
    %v567 = vrot.slane %v204, %v566
    %v568 = vlaneseq
    %v569 = vshrl.u32 %v568, 7
    %v570 = vsub.s32 4, %v569
    %v571 = vrot.slane %v204, %v570
    %v572 = vlaneseq
    %v573 = vshrl.u32 %v572, 7
    %v574 = vsub.s32 5, %v573
    %v575 = vrot.slane %v204, %v574
    %v583 = vlaneseq
    %v584 = vshrl.u32 %v583, 7
    %v585 = vsub.s32 0, %v584
    %v586 = vrot.slane %v218, %v585
    %v587 = vlaneseq
    %v588 = vshrl.u32 %v587, 7
    %v589 = vsub.s32 1, %v588
    %v590 = vrot.slane %v218, %v589
    %v591 = vlaneseq
    %v592 = vshrl.u32 %v591, 7
    %v593 = vsub.s32 2, %v592
    %v594 = vrot.slane %v218, %v593
    %v595 = vlaneseq
    %v596 = vshrl.u32 %v595, 7
    %v597 = vsub.s32 3, %v596
    %v598 = vrot.slane %v218, %v597
    %v599 = vlaneseq
    %v600 = vshrl.u32 %v599, 7
    %v601 = vsub.s32 4, %v600
    %v602 = vrot.slane %v218, %v601
    %v603 = vlaneseq
    %v604 = vshrl.u32 %v603, 7
    %v605 = vsub.s32 5, %v604
    %v606 = vrot.slane %v218, %v605
    %v614 = vlaneseq
    %v615 = vshrl.u32 %v614, 7
    %v616 = vsub.s32 0, %v615
    %v617 = vrot.slane %v232, %v616
    %v618 = vlaneseq
    %v619 = vshrl.u32 %v618, 7
    %v620 = vsub.s32 1, %v619
    %v621 = vrot.slane %v232, %v620
    %v622 = vlaneseq
    %v623 = vshrl.u32 %v622, 7
    %v624 = vsub.s32 2, %v623
    %v625 = vrot.slane %v232, %v624
    %v626 = vlaneseq
    %v627 = vshrl.u32 %v626, 7
    %v628 = vsub.s32 3, %v627
    %v629 = vrot.slane %v232, %v628
    %v630 = vlaneseq
    %v631 = vshrl.u32 %v630, 7
    %v632 = vsub.s32 4, %v631
    %v633 = vrot.slane %v232, %v632
    %v634 = vlaneseq
    %v635 = vshrl.u32 %v634, 7
    %v636 = vsub.s32 5, %v635
    %v637 = vrot.slane %v232, %v636
    %v645 = vlaneseq
    %v646 = vshrl.u32 %v645, 7
    %v647 = vsub.s32 0, %v646
    %v648 = vrot.slane %v246, %v647
    %v649 = vlaneseq
    %v650 = vshrl.u32 %v649, 7
    %v651 = vsub.s32 1, %v650
    %v652 = vrot.slane %v246, %v651
    %v653 = vlaneseq
    %v654 = vshrl.u32 %v653, 7
    %v655 = vsub.s32 2, %v654
    %v656 = vrot.slane %v246, %v655
    %v657 = vlaneseq
    %v658 = vshrl.u32 %v657, 7
    %v659 = vsub.s32 3, %v658
    %v660 = vrot.slane %v246, %v659
    %v661 = vlaneseq
    %v662 = vshrl.u32 %v661, 7
    %v663 = vsub.s32 4, %v662
    %v664 = vrot.slane %v246, %v663
    %v665 = vlaneseq
    %v666 = vshrl.u32 %v665, 7
    %v667 = vsub.s32 5, %v666
    %v668 = vrot.slane %v246, %v667
    %v676 = vlaneseq
    %v677 = vshrl.u32 %v676, 7
    %v678 = vsub.s32 0, %v677
    %v679 = vrot.slane %v260, %v678
    %v680 = vlaneseq
    %v681 = vshrl.u32 %v680, 7
    %v682 = vsub.s32 1, %v681
    %v683 = vrot.slane %v260, %v682
    %v684 = vlaneseq
    %v685 = vshrl.u32 %v684, 7
    %v686 = vsub.s32 2, %v685
    %v687 = vrot.slane %v260, %v686
    %v688 = vlaneseq
    %v689 = vshrl.u32 %v688, 7
    %v690 = vsub.s32 3, %v689
    %v691 = vrot.slane %v260, %v690
    %v692 = vlaneseq
    %v693 = vshrl.u32 %v692, 7
    %v694 = vsub.s32 4, %v693
    %v695 = vrot.slane %v260, %v694
    %v696 = vlaneseq
    %v697 = vshrl.u32 %v696, 7
    %v698 = vsub.s32 5, %v697
    %v699 = vrot.slane %v260, %v698
    %v707 = vlaneseq
    %v708 = vshrl.u32 %v707, 7
    %v709 = vsub.s32 0, %v708
    %v710 = vrot.slane %v274, %v709
    %v711 = vlaneseq
    %v712 = vshrl.u32 %v711, 7
    %v713 = vsub.s32 1, %v712
    %v714 = vrot.slane %v274, %v713
    %v715 = vlaneseq
    %v716 = vshrl.u32 %v715, 7
    %v717 = vsub.s32 2, %v716
    %v718 = vrot.slane %v274, %v717
    %v719 = vlaneseq
    %v720 = vshrl.u32 %v719, 7
    %v721 = vsub.s32 3, %v720
    %v722 = vrot.slane %v274, %v721
    %v723 = vlaneseq
    %v724 = vshrl.u32 %v723, 7
    %v725 = vsub.s32 4, %v724
    %v726 = vrot.slane %v274, %v725
    %v727 = vlaneseq
    %v728 = vshrl.u32 %v727, 7
    %v729 = vsub.s32 5, %v728
    %v730 = vrot.slane %v274, %v729
    %v738 = vlaneseq
    %v739 = vshrl.u32 %v738, 7
    %v740 = vsub.s32 0, %v739
    %v741 = vrot.slane %v288, %v740
    %v742 = vlaneseq
    %v743 = vshrl.u32 %v742, 7
    %v744 = vsub.s32 1, %v743
    %v745 = vrot.slane %v288, %v744
    %v746 = vlaneseq
    %v747 = vshrl.u32 %v746, 7
    %v748 = vsub.s32 2, %v747
    %v749 = vrot.slane %v288, %v748
    %v750 = vlaneseq
    %v751 = vshrl.u32 %v750, 7
    %v752 = vsub.s32 3, %v751
    %v753 = vrot.slane %v288, %v752
    %v754 = vlaneseq
    %v755 = vshrl.u32 %v754, 7
    %v756 = vsub.s32 4, %v755
    %v757 = vrot.slane %v288, %v756
    %v758 = vlaneseq
    %v759 = vshrl.u32 %v758, 7
    %v760 = vsub.s32 5, %v759
    %v761 = vrot.slane %v288, %v760
    %v769 = vlaneseq
    %v770 = vshrl.u32 %v769, 7
    %v771 = vsub.s32 0, %v770
    %v772 = vrot.slane %v302, %v771
    %v773 = vlaneseq
    %v774 = vshrl.u32 %v773, 7
    %v775 = vsub.s32 1, %v774
    %v776 = vrot.slane %v302, %v775
    %v777 = vlaneseq
    %v778 = vshrl.u32 %v777, 7
    %v779 = vsub.s32 2, %v778
    %v780 = vrot.slane %v302, %v779
    %v781 = vlaneseq
    %v782 = vshrl.u32 %v781, 7
    %v783 = vsub.s32 3, %v782
    %v784 = vrot.slane %v302, %v783
    %v785 = vlaneseq
    %v786 = vshrl.u32 %v785, 7
    %v787 = vsub.s32 4, %v786
    %v788 = vrot.slane %v302, %v787
    %v789 = vlaneseq
    %v790 = vshrl.u32 %v789, 7
    %v791 = vsub.s32 5, %v790
    %v792 = vrot.slane %v302, %v791
    %vm799 = vcmask 1040384
    %v800 = vsel %vm799, %v307, %v338
    %v801 = vsel %vm799, %v311, %v342
    %v802 = vsel %vm799, %v315, %v346
    %v803 = vsel %vm799, %v319, %v350
    %v804 = vsel %vm799, %v323, %v354
    %v805 = vsel %vm799, %v327, %v358
    %vm806 = vcmask 1041408
    %v807 = vsel %vm806, %v800, %v369
    %v808 = vsel %vm806, %v801, %v373
    %v809 = vsel %vm806, %v802, %v377
    %v810 = vsel %vm806, %v803, %v381
    %v811 = vsel %vm806, %v804, %v385
    %v812 = vsel %vm806, %v805, %v389
    %vm813 = vcmask 1042432
    %v814 = vsel %vm813, %v807, %v400
    %v815 = vsel %vm813, %v808, %v404
    %v816 = vsel %vm813, %v809, %v408
    %v817 = vsel %vm813, %v810, %v412
    %v818 = vsel %vm813, %v811, %v416
    %v819 = vsel %vm813, %v812, %v420
    %vm820 = vcmask 1043456
    %v821 = vsel %vm820, %v814, %v431
    %v822 = vsel %vm820, %v815, %v435
    %v823 = vsel %vm820, %v816, %v439
    %v824 = vsel %vm820, %v817, %v443
    %v825 = vsel %vm820, %v818, %v447
    %v826 = vsel %vm820, %v819, %v451
    %vm827 = vcmask 1044480
    %v828 = vsel %vm827, %v821, %v462
    %v829 = vsel %vm827, %v822, %v466
    %v830 = vsel %vm827, %v823, %v470
    %v831 = vsel %vm827, %v824, %v474
    %v832 = vsel %vm827, %v825, %v478
    %v833 = vsel %vm827, %v826, %v482
    %vm834 = vcmask 1045504
    %v835 = vsel %vm834, %v828, %v493
    %v836 = vsel %vm834, %v829, %v497
    %v837 = vsel %vm834, %v830, %v501
    %v838 = vsel %vm834, %v831, %v505
    %v839 = vsel %vm834, %v832, %v509
    %v840 = vsel %vm834, %v833, %v513
    %vm841 = vcmask 1046528
    %v842 = vsel %vm841, %v835, %v524
    %v843 = vsel %vm841, %v836, %v528
    %v844 = vsel %vm841, %v837, %v532
    %v845 = vsel %vm841, %v838, %v536
    %v846 = vsel %vm841, %v839, %v540
    %v847 = vsel %vm841, %v840, %v544
    %v848 = vsel %vm799, %v555, %v586
    %v849 = vsel %vm799, %v559, %v590
    %v850 = vsel %vm799, %v563, %v594
    %v851 = vsel %vm799, %v567, %v598
    %v852 = vsel %vm799, %v571, %v602
    %v853 = vsel %vm799, %v575, %v606
    %v854 = vsel %vm806, %v848, %v617
    %v855 = vsel %vm806, %v849, %v621
    %v856 = vsel %vm806, %v850, %v625
    %v857 = vsel %vm806, %v851, %v629
    %v858 = vsel %vm806, %v852, %v633
    %v859 = vsel %vm806, %v853, %v637
    %v860 = vsel %vm813, %v854, %v648
    %v861 = vsel %vm813, %v855, %v652
    %v862 = vsel %vm813, %v856, %v656
    %v863 = vsel %vm813, %v857, %v660
    %v864 = vsel %vm813, %v858, %v664
    %v865 = vsel %vm813, %v859, %v668
    %v866 = vsel %vm820, %v860, %v679
    %v867 = vsel %vm820, %v861, %v683
    %v868 = vsel %vm820, %v862, %v687
    %v869 = vsel %vm820, %v863, %v691
    %v870 = vsel %vm820, %v864, %v695
    %v871 = vsel %vm820, %v865, %v699
    %v872 = vsel %vm827, %v866, %v710
    %v873 = vsel %vm827, %v867, %v714
    %v874 = vsel %vm827, %v868, %v718
    %v875 = vsel %vm827, %v869, %v722
    %v876 = vsel %vm827, %v870, %v726
    %v877 = vsel %vm827, %v871, %v730
    %v878 = vsel %vm834, %v872, %v741
    %v879 = vsel %vm834, %v873, %v745
    %v880 = vsel %vm834, %v874, %v749
    %v881 = vsel %vm834, %v875, %v753
    %v882 = vsel %vm834, %v876, %v757
    %v883 = vsel %vm834, %v877, %v761
    %v884 = vsel %vm841, %v878, %v772
    %v885 = vsel %vm841, %v879, %v776
    %v886 = vsel %vm841, %v880, %v780
    %v887 = vsel %vm841, %v881, %v784
    %v888 = vsel %vm841, %v882, %v788
    %v889 = vsel %vm841, %v883, %v792
    %v890 = vpack.c.bf16 %v884, %v842
    %v891 = vpack.c.bf16 %v885, %v843
    %v892 = vpack.c.bf16 %v886, %v844
    %v893 = vpack.c.bf16 %v887, %v845
    %v894 = vpack.c.bf16 %v888, %v846
    %v895 = vpack.c.bf16 %v889, %v847
    %v896 = vld [vmem:[#allocation7] sm:$0xff]
    %v897 = vld [vmem:[#allocation7 + $0x8] sm:$0xff]
    %v898 = vld [vmem:[#allocation7 + $0x10] sm:$0xff]
    %v899 = vld [vmem:[#allocation7 + $0x18] sm:$0xff]
    %v900 = vld [vmem:[#allocation7 + $0x20] sm:$0xff]
    %v901 = vld [vmem:[#allocation7 + $0x28] sm:$0xff]
    %v902 = vld [vmem:[#allocation7 + $0x30] sm:$0xff]
    %v903 = vld [vmem:[#allocation7 + $0x38] sm:$0xff]
    %v904 = vld [vmem:[#allocation7 + $0x40] sm:$0xff]
    %v905 = vld [vmem:[#allocation7 + $0x48] sm:$0xff]
    %v906 = vld [vmem:[#allocation7 + $0x50] sm:$0xff]
    %v907 = vld [vmem:[#allocation7 + $0x58] sm:$0xff]
    %v908 = vld [vmem:[#allocation7 + $0x60] sm:$0xff]
    %v909 = vld [vmem:[#allocation7 + $0x68] sm:$0xff]
    %v910 = vld [vmem:[#allocation7 + $0x70] sm:$0xff]
    %v911 = vld [vmem:[#allocation7 + $0x78] sm:$0xff]
    %v912 = vld [vmem:[#allocation7 + $0x80] sm:$0xff]
    %v913 = vld [vmem:[#allocation7 + $0x88] sm:$0xff]
    %v914 = vld [vmem:[#allocation7 + $0x90] sm:$0xff]
    %v915 = vld [vmem:[#allocation7 + $0x98] sm:$0xff]
    %v916 = vld [vmem:[#allocation7 + $0xa0] sm:$0xff]
    %v917 = vld [vmem:[#allocation7 + $0xa8] sm:$0xff]
    %v918 = vld [vmem:[#allocation7 + $0xb0] sm:$0xff]
    %v919 = vld [vmem:[#allocation7 + $0xb8] sm:$0xff]
    %v920 = vld [vmem:[#allocation7 + $0xc0] sm:$0xff]
    %v921 = vld [vmem:[#allocation7 + $0xc8] sm:$0xff]
    %v922 = vld [vmem:[#allocation7 + $0xd0] sm:$0xff]
    %v923 = vld [vmem:[#allocation7 + $0xd8] sm:$0xff]
    %v924 = vld [vmem:[#allocation7 + $0xe0] sm:$0xff]
    %v925 = vld [vmem:[#allocation7 + $0xe8] sm:$0xff]
    %v926 = vld [vmem:[#allocation7 + $0xf0] sm:$0xff]
    %v927 = vld [vmem:[#allocation7 + $0xf8] sm:$0xff]
    %v928 = vld [vmem:[#allocation7 + $0x100] sm:$0xff]
    %v929 = vld [vmem:[#allocation7 + $0x108] sm:$0xff]
    %v930 = vld [vmem:[#allocation7 + $0x110] sm:$0xff]
    %v931 = vld [vmem:[#allocation7 + $0x118] sm:$0xff]
    %v932 = vld [vmem:[#allocation7 + $0x120] sm:$0xff]
    %v933 = vld [vmem:[#allocation7 + $0x128] sm:$0xff]
    %v934 = vld [vmem:[#allocation7 + $0x130] sm:$0xff]
    %v935 = vld [vmem:[#allocation7 + $0x138] sm:$0xff]
    %v936 = vld [vmem:[#allocation7 + $0x140] sm:$0xff]
    %v937 = vld [vmem:[#allocation7 + $0x148] sm:$0xff]
    %v938 = vld [vmem:[#allocation7 + $0x150] sm:$0xff]
    %v939 = vld [vmem:[#allocation7 + $0x158] sm:$0xff]
    %v940 = vld [vmem:[#allocation7 + $0x160] sm:$0xff]
    %v941 = vld [vmem:[#allocation7 + $0x168] sm:$0xff]
    %v942 = vld [vmem:[#allocation7 + $0x170] sm:$0xff]
    %v943 = vld [vmem:[#allocation7 + $0x178] sm:$0xff]
    %v944 = vld [vmem:[#allocation7 + $0x180] sm:$0xff]
    %v945 = vld [vmem:[#allocation7 + $0x188] sm:$0xff]
    %v946 = vld [vmem:[#allocation7 + $0x190] sm:$0xff]
    %v947 = vld [vmem:[#allocation7 + $0x198] sm:$0xff]
    %v948 = vld [vmem:[#allocation7 + $0x1a0] sm:$0xff]
    %v949 = vld [vmem:[#allocation7 + $0x1a8] sm:$0xff]
    %v950 = vld [vmem:[#allocation7 + $0x1b0] sm:$0xff]
    %v951 = vld [vmem:[#allocation7 + $0x1b8] sm:$0xff]
    %v952 = vld [vmem:[#allocation7 + $0x1c0] sm:$0xff]
    %v953 = vld [vmem:[#allocation7 + $0x1c8] sm:$0xff]
    %v954 = vld [vmem:[#allocation7 + $0x1d0] sm:$0xff]
    %v955 = vld [vmem:[#allocation7 + $0x1d8] sm:$0xff]
    %v956 = vld [vmem:[#allocation7 + $0x1e0] sm:$0xff]
    %v957 = vld [vmem:[#allocation7 + $0x1e8] sm:$0xff]
    %v958 = vld [vmem:[#allocation7 + $0x1f0] sm:$0xff]
    %v959 = vld [vmem:[#allocation7 + $0x1f8] sm:$0xff]
    %v960 = vld [vmem:[#allocation7 + $0x200] sm:$0xff]
    %v961 = vld [vmem:[#allocation7 + $0x208] sm:$0xff]
    %v962 = vld [vmem:[#allocation7 + $0x210] sm:$0xff]
    %v963 = vld [vmem:[#allocation7 + $0x218] sm:$0xff]
    %v964 = vld [vmem:[#allocation7 + $0x220] sm:$0xff]
    %v965 = vld [vmem:[#allocation7 + $0x228] sm:$0xff]
    %v966 = vld [vmem:[#allocation7 + $0x230] sm:$0xff]
    %v967 = vld [vmem:[#allocation7 + $0x238] sm:$0xff]
    %v968 = vld [vmem:[#allocation7 + $0x240] sm:$0xff]
    %v969 = vld [vmem:[#allocation7 + $0x248] sm:$0xff]
    %v970 = vld [vmem:[#allocation7 + $0x250] sm:$0xff]
    %v971 = vld [vmem:[#allocation7 + $0x258] sm:$0xff]
    %v972 = vld [vmem:[#allocation7 + $0x260] sm:$0xff]
    %v973 = vld [vmem:[#allocation7 + $0x268] sm:$0xff]
    %v974 = vld [vmem:[#allocation7 + $0x270] sm:$0xff]
    %v975 = vld [vmem:[#allocation7 + $0x278] sm:$0xff]
    %v976 = vld [vmem:[#allocation7 + $0x280] sm:$0xff]
    %v977 = vld [vmem:[#allocation7 + $0x288] sm:$0xff]
    %v978 = vld [vmem:[#allocation7 + $0x290] sm:$0xff]
    %v979 = vld [vmem:[#allocation7 + $0x298] sm:$0xff]
    %v980 = vld [vmem:[#allocation7 + $0x2a0] sm:$0xff]
    %v981 = vld [vmem:[#allocation7 + $0x2a8] sm:$0xff]
    %v982 = vld [vmem:[#allocation7 + $0x2b0] sm:$0xff]
    %v983 = vld [vmem:[#allocation7 + $0x2b8] sm:$0xff]
    %v984 = vld [vmem:[#allocation7 + $0x2c0] sm:$0xff]
    %v985 = vld [vmem:[#allocation7 + $0x2c8] sm:$0xff]
    %v986 = vld [vmem:[#allocation7 + $0x2d0] sm:$0xff]
    %v987 = vld [vmem:[#allocation7 + $0x2d8] sm:$0xff]
    %v988 = vld [vmem:[#allocation7 + $0x2e0] sm:$0xff]
    %v989 = vld [vmem:[#allocation7 + $0x2e8] sm:$0xff]
    %v990 = vld [vmem:[#allocation7 + $0x2f0] sm:$0xff]
    %v991 = vld [vmem:[#allocation7 + $0x2f8] sm:$0xff]
    %v1088 = vunpack.c.l.b16 %v896
    %v1089 = vunpack.c.h.b16 %v896
    %v1090 = vunpack.c.l.b16 %v897
    %v1091 = vunpack.c.h.b16 %v897
    %v1092 = vunpack.c.l.b16 %v898
    %v1093 = vunpack.c.h.b16 %v898
    %v1094 = vunpack.c.l.b16 %v899
    %v1095 = vunpack.c.h.b16 %v899
    %v1096 = vunpack.c.l.b16 %v900
    %v1097 = vunpack.c.h.b16 %v900
    %v1098 = vunpack.c.l.b16 %v901
    %v1099 = vunpack.c.h.b16 %v901
    %v1100 = vunpack.c.l.b16 %v902
    %v1101 = vunpack.c.h.b16 %v902
    %v1102 = vunpack.c.l.b16 %v903
    %v1103 = vunpack.c.h.b16 %v903
    %v1104 = vunpack.c.l.b16 %v904
    %v1105 = vunpack.c.h.b16 %v904
    %v1106 = vunpack.c.l.b16 %v905
    %v1107 = vunpack.c.h.b16 %v905
    %v1108 = vunpack.c.l.b16 %v906
    %v1109 = vunpack.c.h.b16 %v906
    %v1110 = vunpack.c.l.b16 %v907
    %v1111 = vunpack.c.h.b16 %v907
    %v1112 = vunpack.c.l.b16 %v908
    %v1113 = vunpack.c.h.b16 %v908
    %v1114 = vunpack.c.l.b16 %v909
    %v1115 = vunpack.c.h.b16 %v909
    %v1116 = vunpack.c.l.b16 %v910
    %v1117 = vunpack.c.h.b16 %v910
    %v1118 = vunpack.c.l.b16 %v911
    %v1119 = vunpack.c.h.b16 %v911
    %v1120 = vunpack.c.l.b16 %v912
    %v1121 = vunpack.c.h.b16 %v912
    %v1122 = vunpack.c.l.b16 %v913
    %v1123 = vunpack.c.h.b16 %v913
    %v1124 = vunpack.c.l.b16 %v914
    %v1125 = vunpack.c.h.b16 %v914
    %v1126 = vunpack.c.l.b16 %v915
    %v1127 = vunpack.c.h.b16 %v915
    %v1128 = vunpack.c.l.b16 %v916
    %v1129 = vunpack.c.h.b16 %v916
    %v1130 = vunpack.c.l.b16 %v917
    %v1131 = vunpack.c.h.b16 %v917
    %v1132 = vunpack.c.l.b16 %v918
    %v1133 = vunpack.c.h.b16 %v918
    %v1134 = vunpack.c.l.b16 %v919
    %v1135 = vunpack.c.h.b16 %v919
    %v1136 = vunpack.c.l.b16 %v920
    %v1137 = vunpack.c.h.b16 %v920
    %v1138 = vunpack.c.l.b16 %v921
    %v1139 = vunpack.c.h.b16 %v921
    %v1140 = vunpack.c.l.b16 %v922
    %v1141 = vunpack.c.h.b16 %v922
    %v1142 = vunpack.c.l.b16 %v923
    %v1143 = vunpack.c.h.b16 %v923
    %v1144 = vunpack.c.l.b16 %v924
    %v1145 = vunpack.c.h.b16 %v924
    %v1146 = vunpack.c.l.b16 %v925
    %v1147 = vunpack.c.h.b16 %v925
    %v1148 = vunpack.c.l.b16 %v926
    %v1149 = vunpack.c.h.b16 %v926
    %v1150 = vunpack.c.l.b16 %v927
    %v1151 = vunpack.c.h.b16 %v927
    %v1152 = vunpack.c.l.b16 %v928
    %v1153 = vunpack.c.h.b16 %v928
    %v1154 = vunpack.c.l.b16 %v929
    %v1155 = vunpack.c.h.b16 %v929
    %v1156 = vunpack.c.l.b16 %v930
    %v1157 = vunpack.c.h.b16 %v930
    %v1158 = vunpack.c.l.b16 %v931
    %v1159 = vunpack.c.h.b16 %v931
    %v1160 = vunpack.c.l.b16 %v932
    %v1161 = vunpack.c.h.b16 %v932
    %v1162 = vunpack.c.l.b16 %v933
    %v1163 = vunpack.c.h.b16 %v933
    %v1164 = vunpack.c.l.b16 %v934
    %v1165 = vunpack.c.h.b16 %v934
    %v1166 = vunpack.c.l.b16 %v935
    %v1167 = vunpack.c.h.b16 %v935
    %v1168 = vunpack.c.l.b16 %v936
    %v1169 = vunpack.c.h.b16 %v936
    %v1170 = vunpack.c.l.b16 %v937
    %v1171 = vunpack.c.h.b16 %v937
    %v1172 = vunpack.c.l.b16 %v938
    %v1173 = vunpack.c.h.b16 %v938
    %v1174 = vunpack.c.l.b16 %v939
    %v1175 = vunpack.c.h.b16 %v939
    %v1176 = vunpack.c.l.b16 %v940
    %v1177 = vunpack.c.h.b16 %v940
    %v1178 = vunpack.c.l.b16 %v941
    %v1179 = vunpack.c.h.b16 %v941
    %v1180 = vunpack.c.l.b16 %v942
    %v1181 = vunpack.c.h.b16 %v942
    %v1182 = vunpack.c.l.b16 %v943
    %v1183 = vunpack.c.h.b16 %v943
    %v1184 = vunpack.c.l.b16 %v944
    %v1185 = vunpack.c.h.b16 %v944
    %v1186 = vunpack.c.l.b16 %v945
    %v1187 = vunpack.c.h.b16 %v945
    %v1188 = vunpack.c.l.b16 %v946
    %v1189 = vunpack.c.h.b16 %v946
    %v1190 = vunpack.c.l.b16 %v947
    %v1191 = vunpack.c.h.b16 %v947
    %v1192 = vunpack.c.l.b16 %v948
    %v1193 = vunpack.c.h.b16 %v948
    %v1194 = vunpack.c.l.b16 %v949
    %v1195 = vunpack.c.h.b16 %v949
    %v1196 = vunpack.c.l.b16 %v950
    %v1197 = vunpack.c.h.b16 %v950
    %v1198 = vunpack.c.l.b16 %v951
    %v1199 = vunpack.c.h.b16 %v951
    %v1200 = vunpack.c.l.b16 %v952
    %v1201 = vunpack.c.h.b16 %v952
    %v1202 = vunpack.c.l.b16 %v953
    %v1203 = vunpack.c.h.b16 %v953
    %v1204 = vunpack.c.l.b16 %v954
    %v1205 = vunpack.c.h.b16 %v954
    %v1206 = vunpack.c.l.b16 %v955
    %v1207 = vunpack.c.h.b16 %v955
    %v1208 = vunpack.c.l.b16 %v956
    %v1209 = vunpack.c.h.b16 %v956
    %v1210 = vunpack.c.l.b16 %v957
    %v1211 = vunpack.c.h.b16 %v957
    %v1212 = vunpack.c.l.b16 %v958
    %v1213 = vunpack.c.h.b16 %v958
    %v1214 = vunpack.c.l.b16 %v959
    %v1215 = vunpack.c.h.b16 %v959
    %v1216 = vunpack.c.l.b16 %v960
    %v1217 = vunpack.c.h.b16 %v960
    %v1218 = vunpack.c.l.b16 %v961
    %v1219 = vunpack.c.h.b16 %v961
    %v1220 = vunpack.c.l.b16 %v962
    %v1221 = vunpack.c.h.b16 %v962
    %v1222 = vunpack.c.l.b16 %v963
    %v1223 = vunpack.c.h.b16 %v963
    %v1224 = vunpack.c.l.b16 %v964
    %v1225 = vunpack.c.h.b16 %v964
    %v1226 = vunpack.c.l.b16 %v965
    %v1227 = vunpack.c.h.b16 %v965
    %v1228 = vunpack.c.l.b16 %v966
    %v1229 = vunpack.c.h.b16 %v966
    %v1230 = vunpack.c.l.b16 %v967
    %v1231 = vunpack.c.h.b16 %v967
    %v1232 = vunpack.c.l.b16 %v968
    %v1233 = vunpack.c.h.b16 %v968
    %v1234 = vunpack.c.l.b16 %v969
    %v1235 = vunpack.c.h.b16 %v969
    %v1236 = vunpack.c.l.b16 %v970
    %v1237 = vunpack.c.h.b16 %v970
    %v1238 = vunpack.c.l.b16 %v971
    %v1239 = vunpack.c.h.b16 %v971
    %v1240 = vunpack.c.l.b16 %v972
    %v1241 = vunpack.c.h.b16 %v972
    %v1242 = vunpack.c.l.b16 %v973
    %v1243 = vunpack.c.h.b16 %v973
    %v1244 = vunpack.c.l.b16 %v974
    %v1245 = vunpack.c.h.b16 %v974
    %v1246 = vunpack.c.l.b16 %v975
    %v1247 = vunpack.c.h.b16 %v975
    %v1248 = vunpack.c.l.b16 %v976
    %v1249 = vunpack.c.h.b16 %v976
    %v1250 = vunpack.c.l.b16 %v977
    %v1251 = vunpack.c.h.b16 %v977
    %v1252 = vunpack.c.l.b16 %v978
    %v1253 = vunpack.c.h.b16 %v978
    %v1254 = vunpack.c.l.b16 %v979
    %v1255 = vunpack.c.h.b16 %v979
    %v1256 = vunpack.c.l.b16 %v980
    %v1257 = vunpack.c.h.b16 %v980
    %v1258 = vunpack.c.l.b16 %v981
    %v1259 = vunpack.c.h.b16 %v981
    %v1260 = vunpack.c.l.b16 %v982
    %v1261 = vunpack.c.h.b16 %v982
    %v1262 = vunpack.c.l.b16 %v983
    %v1263 = vunpack.c.h.b16 %v983
    %v1264 = vunpack.c.l.b16 %v984
    %v1265 = vunpack.c.h.b16 %v984
    %v1266 = vunpack.c.l.b16 %v985
    %v1267 = vunpack.c.h.b16 %v985
    %v1268 = vunpack.c.l.b16 %v986
    %v1269 = vunpack.c.h.b16 %v986
    %v1270 = vunpack.c.l.b16 %v987
    %v1271 = vunpack.c.h.b16 %v987
    %v1272 = vunpack.c.l.b16 %v988
    %v1273 = vunpack.c.h.b16 %v988
    %v1274 = vunpack.c.l.b16 %v989
    %v1275 = vunpack.c.h.b16 %v989
    %v1276 = vunpack.c.l.b16 %v990
    %v1277 = vunpack.c.h.b16 %v990
    %v1278 = vunpack.c.l.b16 %v991
    %v1279 = vunpack.c.h.b16 %v991
    %v1280 = vpack.c.b16 %v1090, %v1088
    %v1281 = vpack.c.b16 %v1091, %v1089
    %v1282 = vpack.c.b16 %v1094, %v1092
    %v1283 = vpack.c.b16 %v1095, %v1093
    %v1284 = vpack.c.b16 %v1098, %v1096
    %v1285 = vpack.c.b16 %v1099, %v1097
    %v1286 = vpack.c.b16 %v1102, %v1100
    %v1287 = vpack.c.b16 %v1103, %v1101
    %v1288 = vpack.c.b16 %v1106, %v1104
    %v1289 = vpack.c.b16 %v1107, %v1105
    %v1290 = vpack.c.b16 %v1110, %v1108
    %v1291 = vpack.c.b16 %v1111, %v1109
    %v1292 = vpack.c.b16 %v1114, %v1112
    %v1293 = vpack.c.b16 %v1115, %v1113
    %v1294 = vpack.c.b16 %v1118, %v1116
    %v1295 = vpack.c.b16 %v1119, %v1117
    %v1296 = vpack.c.b16 %v1122, %v1120
    %v1297 = vpack.c.b16 %v1123, %v1121
    %v1298 = vpack.c.b16 %v1126, %v1124
    %v1299 = vpack.c.b16 %v1127, %v1125
    %v1300 = vpack.c.b16 %v1130, %v1128
    %v1301 = vpack.c.b16 %v1131, %v1129
    %v1302 = vpack.c.b16 %v1134, %v1132
    %v1303 = vpack.c.b16 %v1135, %v1133
    %v1304 = vpack.c.b16 %v1138, %v1136
    %v1305 = vpack.c.b16 %v1139, %v1137
    %v1306 = vpack.c.b16 %v1142, %v1140
    %v1307 = vpack.c.b16 %v1143, %v1141
    %v1308 = vpack.c.b16 %v1146, %v1144
    %v1309 = vpack.c.b16 %v1147, %v1145
    %v1310 = vpack.c.b16 %v1150, %v1148
    %v1311 = vpack.c.b16 %v1151, %v1149
    %v1312 = vpack.c.b16 %v1154, %v1152
    %v1313 = vpack.c.b16 %v1155, %v1153
    %v1314 = vpack.c.b16 %v1158, %v1156
    %v1315 = vpack.c.b16 %v1159, %v1157
    %v1316 = vpack.c.b16 %v1162, %v1160
    %v1317 = vpack.c.b16 %v1163, %v1161
    %v1318 = vpack.c.b16 %v1166, %v1164
    %v1319 = vpack.c.b16 %v1167, %v1165
    %v1320 = vpack.c.b16 %v1170, %v1168
    %v1321 = vpack.c.b16 %v1171, %v1169
    %v1322 = vpack.c.b16 %v1174, %v1172
    %v1323 = vpack.c.b16 %v1175, %v1173
    %v1324 = vpack.c.b16 %v1178, %v1176
    %v1325 = vpack.c.b16 %v1179, %v1177
    %v1326 = vpack.c.b16 %v1182, %v1180
    %v1327 = vpack.c.b16 %v1183, %v1181
    %v1328 = vpack.c.b16 %v1186, %v1184
    %v1329 = vpack.c.b16 %v1187, %v1185
    %v1330 = vpack.c.b16 %v1190, %v1188
    %v1331 = vpack.c.b16 %v1191, %v1189
    %v1332 = vpack.c.b16 %v1194, %v1192
    %v1333 = vpack.c.b16 %v1195, %v1193
    %v1334 = vpack.c.b16 %v1198, %v1196
    %v1335 = vpack.c.b16 %v1199, %v1197
    %v1336 = vpack.c.b16 %v1202, %v1200
    %v1337 = vpack.c.b16 %v1203, %v1201
    %v1338 = vpack.c.b16 %v1206, %v1204
    %v1339 = vpack.c.b16 %v1207, %v1205
    %v1340 = vpack.c.b16 %v1210, %v1208
    %v1341 = vpack.c.b16 %v1211, %v1209
    %v1342 = vpack.c.b16 %v1214, %v1212
    %v1343 = vpack.c.b16 %v1215, %v1213
    %v1344 = vpack.c.b16 %v1218, %v1216
    %v1345 = vpack.c.b16 %v1219, %v1217
    %v1346 = vpack.c.b16 %v1222, %v1220
    %v1347 = vpack.c.b16 %v1223, %v1221
    %v1348 = vpack.c.b16 %v1226, %v1224
    %v1349 = vpack.c.b16 %v1227, %v1225
    %v1350 = vpack.c.b16 %v1230, %v1228
    %v1351 = vpack.c.b16 %v1231, %v1229
    %v1352 = vpack.c.b16 %v1234, %v1232
    %v1353 = vpack.c.b16 %v1235, %v1233
    %v1354 = vpack.c.b16 %v1238, %v1236
    %v1355 = vpack.c.b16 %v1239, %v1237
    %v1356 = vpack.c.b16 %v1242, %v1240
    %v1357 = vpack.c.b16 %v1243, %v1241
    %v1358 = vpack.c.b16 %v1246, %v1244
    %v1359 = vpack.c.b16 %v1247, %v1245
    %v1360 = vpack.c.b16 %v1250, %v1248
    %v1361 = vpack.c.b16 %v1251, %v1249
    %v1362 = vpack.c.b16 %v1254, %v1252
    %v1363 = vpack.c.b16 %v1255, %v1253
    %v1364 = vpack.c.b16 %v1258, %v1256
    %v1365 = vpack.c.b16 %v1259, %v1257
    %v1366 = vpack.c.b16 %v1262, %v1260
    %v1367 = vpack.c.b16 %v1263, %v1261
    %v1368 = vpack.c.b16 %v1266, %v1264
    %v1369 = vpack.c.b16 %v1267, %v1265
    %v1370 = vpack.c.b16 %v1270, %v1268
    %v1371 = vpack.c.b16 %v1271, %v1269
    %v1372 = vpack.c.b16 %v1274, %v1272
    %v1373 = vpack.c.b16 %v1275, %v1273
    %v1374 = vpack.c.b16 %v1278, %v1276
    %v1375 = vpack.c.b16 %v1279, %v1277
    %1472 = vmatprep.subr.bf16.mxu0 %v1281
    %1473 = vmatpush1.bf16.msra.mxu0 %v1280
    %1474 = vmatprep.subr.bf16.mxu0 %v1283
    %1475 = vmatpush1.bf16.msra.mxu0 %v1282
    %1476 = vmatprep.subr.bf16.mxu0 %v1285
    %1477 = vmatpush1.bf16.msra.mxu0 %v1284
    %1478 = vmatprep.subr.bf16.mxu0 %v1287
    %1479 = vmatpush1.bf16.msra.mxu0 %v1286
    %1480 = vmatprep.subr.bf16.mxu0 %v1289
    %1481 = vmatpush1.bf16.msra.mxu0 %v1288
    %1482 = vmatprep.subr.bf16.mxu0 %v1291
    %1483 = vmatpush1.bf16.msra.mxu0 %v1290
    %1484 = vmatprep.subr.bf16.mxu0 %v1293
    %1485 = vmatpush1.bf16.msra.mxu0 %v1292
    %1486 = vmatprep.subr.bf16.mxu0 %v1295
    %1487 = vmatpush1.bf16.msra.mxu0 %v1294
    %1488 = vmatprep.subr.bf16.mxu0 %v1297
    %1489 = vmatpush1.bf16.msra.mxu0 %v1296
    %1490 = vmatprep.subr.bf16.mxu0 %v1299
    %1491 = vmatpush1.bf16.msra.mxu0 %v1298
    %1492 = vmatprep.subr.bf16.mxu0 %v1301
    %1493 = vmatpush1.bf16.msra.mxu0 %v1300
    %1494 = vmatprep.subr.bf16.mxu0 %v1303
    %1495 = vmatpush1.bf16.msra.mxu0 %v1302
    %1496 = vmatprep.subr.bf16.mxu0 %v1305
    %1497 = vmatpush1.bf16.msra.mxu0 %v1304
    %1498 = vmatprep.subr.bf16.mxu0 %v1307
    %1499 = vmatpush1.bf16.msra.mxu0 %v1306
    %1500 = vmatprep.subr.bf16.mxu0 %v1309
    %1501 = vmatpush1.bf16.msra.mxu0 %v1308
    %1502 = vmatprep.subr.bf16.mxu0 %v1311
    %1503 = vmatpush1.bf16.msra.mxu0 %v1310
    %1504 = vmatprep.mubr.bf16.mxu0 %v891
    %1505 = vmatmul.mubr.bf16.gmra.mrb[0].mxu0 %v890
    %v1506 = vpop.f32.mrb[0].mxu0
    %v1507 = vadd.f32 0.0, %v1506
    %v1508 = vpop.f32.mrb[0].mxu0
    %v1509 = vadd.f32 0.0, %v1508
    %v1510 = vpop.f32.mrb[0].mxu0
    %v1511 = vadd.f32 0.0, %v1510
    %v1512 = vpop.f32.mrb[0].mxu0
    %v1513 = vadd.f32 0.0, %v1512
    %1514 = vdwg.mxu0
    %1515 = vmatprep.subr.bf16.mxu0 %v1313
    %1516 = vmatpush1.bf16.msra.mxu0 %v1312
    %1517 = vmatprep.subr.bf16.mxu0 %v1315
    %1518 = vmatpush1.bf16.msra.mxu0 %v1314
    %1519 = vmatprep.subr.bf16.mxu0 %v1317
    %1520 = vmatpush1.bf16.msra.mxu0 %v1316
    %1521 = vmatprep.subr.bf16.mxu0 %v1319
    %1522 = vmatpush1.bf16.msra.mxu0 %v1318
    %1523 = vmatprep.subr.bf16.mxu0 %v1321
    %1524 = vmatpush1.bf16.msra.mxu0 %v1320
    %1525 = vmatprep.subr.bf16.mxu0 %v1323
    %1526 = vmatpush1.bf16.msra.mxu0 %v1322
    %1527 = vmatprep.subr.bf16.mxu0 %v1325
    %1528 = vmatpush1.bf16.msra.mxu0 %v1324
    %1529 = vmatprep.subr.bf16.mxu0 %v1327
    %1530 = vmatpush1.bf16.msra.mxu0 %v1326
    %1531 = vmatprep.subr.bf16.mxu0 %v1329
    %1532 = vmatpush1.bf16.msra.mxu0 %v1328
    %1533 = vmatprep.subr.bf16.mxu0 %v1331
    %1534 = vmatpush1.bf16.msra.mxu0 %v1330
    %1535 = vmatprep.subr.bf16.mxu0 %v1333
    %1536 = vmatpush1.bf16.msra.mxu0 %v1332
    %1537 = vmatprep.subr.bf16.mxu0 %v1335
    %1538 = vmatpush1.bf16.msra.mxu0 %v1334
    %1539 = vmatprep.subr.bf16.mxu0 %v1337
    %1540 = vmatpush1.bf16.msra.mxu0 %v1336
    %1541 = vmatprep.subr.bf16.mxu0 %v1339
    %1542 = vmatpush1.bf16.msra.mxu0 %v1338
    %1543 = vmatprep.subr.bf16.mxu0 %v1341
    %1544 = vmatpush1.bf16.msra.mxu0 %v1340
    %1545 = vmatprep.subr.bf16.mxu0 %v1343
    %1546 = vmatpush1.bf16.msra.mxu0 %v1342
    %1547 = vmatprep.mubr.bf16.mxu0 %v893
    %1548 = vmatmul.mubr.bf16.gmra.mrb[0].mxu0 %v892
    %v1549 = vpop.f32.mrb[0].mxu0
    %v1550 = vadd.f32 %v1507, %v1549
    %v1551 = vpop.f32.mrb[0].mxu0
    %v1552 = vadd.f32 %v1509, %v1551
    %v1553 = vpop.f32.mrb[0].mxu0
    %v1554 = vadd.f32 %v1511, %v1553
    %v1555 = vpop.f32.mrb[0].mxu0
    %v1556 = vadd.f32 %v1513, %v1555
    %1557 = vdwg.mxu0
    %1558 = vmatprep.subr.bf16.mxu0 %v1345
    %1559 = vmatpush1.bf16.msra.mxu0 %v1344
    %1560 = vmatprep.subr.bf16.mxu0 %v1347
    %1561 = vmatpush1.bf16.msra.mxu0 %v1346
    %1562 = vmatprep.subr.bf16.mxu0 %v1349
    %1563 = vmatpush1.bf16.msra.mxu0 %v1348
    %1564 = vmatprep.subr.bf16.mxu0 %v1351
    %1565 = vmatpush1.bf16.msra.mxu0 %v1350
    %1566 = vmatprep.subr.bf16.mxu0 %v1353
    %1567 = vmatpush1.bf16.msra.mxu0 %v1352
    %1568 = vmatprep.subr.bf16.mxu0 %v1355
    %1569 = vmatpush1.bf16.msra.mxu0 %v1354
    %1570 = vmatprep.subr.bf16.mxu0 %v1357
    %1571 = vmatpush1.bf16.msra.mxu0 %v1356
    %1572 = vmatprep.subr.bf16.mxu0 %v1359
    %1573 = vmatpush1.bf16.msra.mxu0 %v1358
    %1574 = vmatprep.subr.bf16.mxu0 %v1361
    %1575 = vmatpush1.bf16.msra.mxu0 %v1360
    %1576 = vmatprep.subr.bf16.mxu0 %v1363
    %1577 = vmatpush1.bf16.msra.mxu0 %v1362
    %1578 = vmatprep.subr.bf16.mxu0 %v1365
    %1579 = vmatpush1.bf16.msra.mxu0 %v1364
    %1580 = vmatprep.subr.bf16.mxu0 %v1367
    %1581 = vmatpush1.bf16.msra.mxu0 %v1366
    %1582 = vmatprep.subr.bf16.mxu0 %v1369
    %1583 = vmatpush1.bf16.msra.mxu0 %v1368
    %1584 = vmatprep.subr.bf16.mxu0 %v1371
    %1585 = vmatpush1.bf16.msra.mxu0 %v1370
    %1586 = vmatprep.subr.bf16.mxu0 %v1373
    %1587 = vmatpush1.bf16.msra.mxu0 %v1372
    %1588 = vmatprep.subr.bf16.mxu0 %v1375
    %1589 = vmatpush1.bf16.msra.mxu0 %v1374
    %1590 = vmatprep.mubr.bf16.mxu0 %v895
    %1591 = vmatmul.mubr.bf16.gmra.mrb[0].mxu0 %v894
    %v1592 = vpop.f32.mrb[0].mxu0
    %v1593 = vadd.f32 %v1550, %v1592
    %v1594 = vpop.f32.mrb[0].mxu0
    %v1595 = vadd.f32 %v1552, %v1594
    %v1596 = vpop.f32.mrb[0].mxu0
    %v1597 = vadd.f32 %v1554, %v1596
    %v1598 = vpop.f32.mrb[0].mxu0
    %v1599 = vadd.f32 %v1556, %v1598
    %1600 = vdwg.mxu0
    %v1603 = vcombine.high %v1593, %v1593
    %v1605 = vunpack.c.l.s4 1966171168
    %v1606 = vunpack.c.0.s8 %v1605
    %v1607 = vlaneseq
    %v1608 = vshrl.u32 %v1607, 7
    %v1609 = vsub.s32 %v1606, %v1608
    %v1610 = vrot.slane %v1593, %v1609
    %v1612 = vunpack.c.l.s4 1966171168
    %v1613 = vunpack.c.0.s8 %v1612
    %v1614 = vlaneseq
    %v1615 = vshrl.u32 %v1614, 7
    %v1616 = vsub.s32 %v1613, %v1615
    %v1617 = vrot.slane %v1603, %v1616
    %v1618 = vcombine.high %v1610, %v1610
    %v1619 = vcombine.high %v1617, %v1617
    %v1621 = vunpack.c.l.s4 1966171168
    %v1622 = vunpack.c.0.s8 %v1621
    %v1623 = vlaneseq
    %v1624 = vshrl.u32 %v1623, 7
    %v1625 = vsub.s32 %v1622, %v1624
    %v1626 = vrot.slane %v1610, %v1625
    %v1628 = vunpack.c.l.s4 1966171168
    %v1629 = vunpack.c.0.s8 %v1628
    %v1630 = vlaneseq
    %v1631 = vshrl.u32 %v1630, 7
    %v1632 = vsub.s32 %v1629, %v1631
    %v1633 = vrot.slane %v1617, %v1632
    %v1635 = vunpack.c.l.s4 1966171168
    %v1636 = vunpack.c.0.s8 %v1635
    %v1637 = vlaneseq
    %v1638 = vshrl.u32 %v1637, 7
    %v1639 = vsub.s32 %v1636, %v1638
    %v1640 = vrot.slane %v1618, %v1639
    %v1642 = vunpack.c.l.s4 1966171168
    %v1643 = vunpack.c.0.s8 %v1642
    %v1644 = vlaneseq
    %v1645 = vshrl.u32 %v1644, 7
    %v1646 = vsub.s32 %v1643, %v1645
    %v1647 = vrot.slane %v1619, %v1646
    %v1648 = vcombine.high %v1626, %v1626
    %v1649 = vcombine.high %v1633, %v1633
    %v1650 = vcombine.high %v1640, %v1640
    %v1651 = vcombine.high %v1647, %v1647
    %v1652 = vcombine.high %v1597, %v1597
    %v1654 = vunpack.c.l.s4 1966171168
    %v1655 = vunpack.c.0.s8 %v1654
    %v1656 = vlaneseq
    %v1657 = vshrl.u32 %v1656, 7
    %v1658 = vsub.s32 %v1655, %v1657
    %v1659 = vrot.slane %v1597, %v1658
    %v1661 = vunpack.c.l.s4 1966171168
    %v1662 = vunpack.c.0.s8 %v1661
    %v1663 = vlaneseq
    %v1664 = vshrl.u32 %v1663, 7
    %v1665 = vsub.s32 %v1662, %v1664
    %v1666 = vrot.slane %v1652, %v1665
    %v1667 = vcombine.high %v1659, %v1659
    %v1668 = vcombine.high %v1666, %v1666
    %v1670 = vunpack.c.l.s4 1966171168
    %v1671 = vunpack.c.0.s8 %v1670
    %v1672 = vlaneseq
    %v1673 = vshrl.u32 %v1672, 7
    %v1674 = vsub.s32 %v1671, %v1673
    %v1675 = vrot.slane %v1659, %v1674
    %v1677 = vunpack.c.l.s4 1966171168
    %v1678 = vunpack.c.0.s8 %v1677
    %v1679 = vlaneseq
    %v1680 = vshrl.u32 %v1679, 7
    %v1681 = vsub.s32 %v1678, %v1680
    %v1682 = vrot.slane %v1666, %v1681
    %v1684 = vunpack.c.l.s4 1966171168
    %v1685 = vunpack.c.0.s8 %v1684
    %v1686 = vlaneseq
    %v1687 = vshrl.u32 %v1686, 7
    %v1688 = vsub.s32 %v1685, %v1687
    %v1689 = vrot.slane %v1667, %v1688
    %v1691 = vunpack.c.l.s4 1966171168
    %v1692 = vunpack.c.0.s8 %v1691
    %v1693 = vlaneseq
    %v1694 = vshrl.u32 %v1693, 7
    %v1695 = vsub.s32 %v1692, %v1694
    %v1696 = vrot.slane %v1668, %v1695
    %v1697 = vcombine.high %v1675, %v1675
    %v1698 = vcombine.high %v1682, %v1682
    %v1699 = vcombine.high %v1689, %v1689
    %v1700 = vcombine.high %v1696, %v1696
    %v1707 = vcombine.low %v890, %v891
    %v1708 = vcombine.high %v890, %v891
    %v1709 = vcombine.low %v892, %v893
    %v1710 = vcombine.high %v892, %v893
    %v1711 = vcombine.low %v894, %v895
    %v1712 = vcombine.high %v894, %v895
    %v1714 = vunpack.c.l.s4 1966171168
    %v1715 = vunpack.c.0.s8 %v1714
    %v1716 = vlaneseq
    %v1717 = vshrl.u32 %v1716, 7
    %v1718 = vsub.s32 %v1715, %v1717
    %v1719 = vrot.slane %v1707, %v1718
    %v1721 = vunpack.c.l.s4 1966171168
    %v1722 = vunpack.c.0.s8 %v1721
    %v1723 = vlaneseq
    %v1724 = vshrl.u32 %v1723, 7
    %v1725 = vsub.s32 %v1722, %v1724
    %v1726 = vrot.slane %v1708, %v1725
    %v1728 = vunpack.c.l.s4 1966171168
    %v1729 = vunpack.c.0.s8 %v1728
    %v1730 = vlaneseq
    %v1731 = vshrl.u32 %v1730, 7
    %v1732 = vsub.s32 %v1729, %v1731
    %v1733 = vrot.slane %v1709, %v1732
    %v1735 = vunpack.c.l.s4 1966171168
    %v1736 = vunpack.c.0.s8 %v1735
    %v1737 = vlaneseq
    %v1738 = vshrl.u32 %v1737, 7
    %v1739 = vsub.s32 %v1736, %v1738
    %v1740 = vrot.slane %v1710, %v1739
    %v1742 = vunpack.c.l.s4 1966171168
    %v1743 = vunpack.c.0.s8 %v1742
    %v1744 = vlaneseq
    %v1745 = vshrl.u32 %v1744, 7
    %v1746 = vsub.s32 %v1743, %v1745
    %v1747 = vrot.slane %v1711, %v1746
    %v1749 = vunpack.c.l.s4 1966171168
    %v1750 = vunpack.c.0.s8 %v1749
    %v1751 = vlaneseq
    %v1752 = vshrl.u32 %v1751, 7
    %v1753 = vsub.s32 %v1750, %v1752
    %v1754 = vrot.slane %v1712, %v1753
    %v1755 = vcombine.low %v1719, %v1733
    %v1756 = vcombine.high %v1719, %v1733
    %v1757 = vcombine.low %v1726, %v1740
    %v1758 = vcombine.high %v1726, %v1740
    %v1759 = vcombine.high %v1747, %v1747
    %v1760 = vcombine.high %v1754, %v1754
    %v1762 = vunpack.c.l.s4 1966171168
    %v1763 = vunpack.c.0.s8 %v1762
    %v1764 = vlaneseq
    %v1765 = vshrl.u32 %v1764, 7
    %v1766 = vsub.s32 %v1763, %v1765
    %v1767 = vrot.slane %v1755, %v1766
    %v1769 = vunpack.c.l.s4 1966171168
    %v1770 = vunpack.c.0.s8 %v1769
    %v1771 = vlaneseq
    %v1772 = vshrl.u32 %v1771, 7
    %v1773 = vsub.s32 %v1770, %v1772
    %v1774 = vrot.slane %v1757, %v1773
    %v1776 = vunpack.c.l.s4 1966171168
    %v1777 = vunpack.c.0.s8 %v1776
    %v1778 = vlaneseq
    %v1779 = vshrl.u32 %v1778, 7
    %v1780 = vsub.s32 %v1777, %v1779
    %v1781 = vrot.slane %v1756, %v1780
    %v1783 = vunpack.c.l.s4 1966171168
    %v1784 = vunpack.c.0.s8 %v1783
    %v1785 = vlaneseq
    %v1786 = vshrl.u32 %v1785, 7
    %v1787 = vsub.s32 %v1784, %v1786
    %v1788 = vrot.slane %v1758, %v1787
    %v1790 = vunpack.c.l.s4 1966171168
    %v1791 = vunpack.c.0.s8 %v1790
    %v1792 = vlaneseq
    %v1793 = vshrl.u32 %v1792, 7
    %v1794 = vsub.s32 %v1791, %v1793
    %v1795 = vrot.slane %v1747, %v1794
    %v1797 = vunpack.c.l.s4 1966171168
    %v1798 = vunpack.c.0.s8 %v1797
    %v1799 = vlaneseq
    %v1800 = vshrl.u32 %v1799, 7
    %v1801 = vsub.s32 %v1798, %v1800
    %v1802 = vrot.slane %v1754, %v1801
    %v1804 = vunpack.c.l.s4 1966171168
    %v1805 = vunpack.c.0.s8 %v1804
    %v1806 = vlaneseq
    %v1807 = vshrl.u32 %v1806, 7
    %v1808 = vsub.s32 %v1805, %v1807
    %v1809 = vrot.slane %v1759, %v1808
    %v1811 = vunpack.c.l.s4 1966171168
    %v1812 = vunpack.c.0.s8 %v1811
    %v1813 = vlaneseq
    %v1814 = vshrl.u32 %v1813, 7
    %v1815 = vsub.s32 %v1812, %v1814
    %v1816 = vrot.slane %v1760, %v1815
    %v1817 = vcombine.low %v1767, %v1795
    %v1818 = vcombine.high %v1767, %v1795
    %v1819 = vcombine.low %v1774, %v1802
    %v1820 = vcombine.high %v1774, %v1802
    %v1821 = vcombine.low %v1781, %v1809
    %v1822 = vcombine.high %v1781, %v1809
    %v1823 = vcombine.low %v1788, %v1816
    %v1824 = vcombine.high %v1788, %v1816
    %v1825 = vunpack.i.l.s16 %v1817
    %v1826 = vunpack.i.h.s16 %v1817
    %v1827 = vunpack.i.l.s16 %v1821
    %v1828 = vunpack.i.h.s16 %v1821
    %v1829 = vunpack.i.l.s16 %v1818
    %v1830 = vunpack.i.h.s16 %v1818
    %v1831 = vunpack.i.l.s16 %v1822
    %v1832 = vunpack.i.h.s16 %v1822
    %v1833 = vunpack.i.l.s16 %v1819
    %v1834 = vunpack.i.h.s16 %v1819
    %v1835 = vunpack.i.l.s16 %v1823
    %v1836 = vunpack.i.h.s16 %v1823
    %v1837 = vunpack.i.l.s16 %v1820
    %v1838 = vunpack.i.h.s16 %v1820
    %v1839 = vunpack.i.l.s16 %v1824
    %v1840 = vunpack.i.h.s16 %v1824
    %v1841 = vunpack.c.l.b16 %v890
    %v1842 = vunpack.c.l.b16 %v891
    %v1843 = vunpack.c.l.b16 %v892
    %v1844 = vunpack.c.l.b16 %v893
    %v1845 = vunpack.c.l.b16 %v894
    %v1846 = vunpack.c.l.b16 %v895
    %v1847 = vunpack.c.h.b16 %v890
    %v1848 = vunpack.c.h.b16 %v891
    %v1849 = vunpack.c.h.b16 %v892
    %v1850 = vunpack.c.h.b16 %v893
    %v1851 = vunpack.c.h.b16 %v894
    %v1852 = vunpack.c.h.b16 %v895
    %v1853 = vpack.i.b16 %v1825, %v1825
    %v1854 = vpack.i.b16 %v1826, %v1826
    %v1855 = vpack.i.b16 %v1827, %v1827
    %v1856 = vpack.i.b16 %v1828, %v1828
    %v1857 = vpack.i.b16 %v1829, %v1829
    %v1858 = vpack.i.b16 %v1830, %v1830
    %v1859 = vpack.i.b16 %v1831, %v1831
    %v1860 = vpack.i.b16 %v1832, %v1832
    %v1861 = vpack.i.b16 %v1833, %v1833
    %v1862 = vpack.i.b16 %v1834, %v1834
    %v1863 = vpack.i.b16 %v1835, %v1835
    %v1864 = vpack.i.b16 %v1836, %v1836
    %v1865 = vpack.i.b16 %v1837, %v1837
    %v1866 = vpack.i.b16 %v1838, %v1838
    %v1867 = vpack.i.b16 %v1839, %v1839
    %v1868 = vpack.i.b16 %v1840, %v1840
    %v1869 = vlaneseq
    %v1870 = vshrl.u32 %v1869, 7
    %v1871 = vsub.s32 0, %v1870
    %v1872 = vrot.slane %v1853, %v1871
    %v1873 = vlaneseq
    %v1874 = vshrl.u32 %v1873, 7
    %v1875 = vsub.s32 1, %v1874
    %v1876 = vrot.slane %v1853, %v1875
    %v1877 = vlaneseq
    %v1878 = vshrl.u32 %v1877, 7
    %v1879 = vsub.s32 2, %v1878
    %v1880 = vrot.slane %v1853, %v1879
    %v1881 = vlaneseq
    %v1882 = vshrl.u32 %v1881, 7
    %v1883 = vsub.s32 3, %v1882
    %v1884 = vrot.slane %v1853, %v1883
    %v1885 = vlaneseq
    %v1886 = vshrl.u32 %v1885, 7
    %v1887 = vsub.s32 4, %v1886
    %v1888 = vrot.slane %v1853, %v1887
    %v1889 = vlaneseq
    %v1890 = vshrl.u32 %v1889, 7
    %v1891 = vsub.s32 5, %v1890
    %v1892 = vrot.slane %v1853, %v1891
    %v1893 = vlaneseq
    %v1894 = vshrl.u32 %v1893, 7
    %v1895 = vsub.s32 0, %v1894
    %v1896 = vrot.slane %v1854, %v1895
    %v1897 = vlaneseq
    %v1898 = vshrl.u32 %v1897, 7
    %v1899 = vsub.s32 1, %v1898
    %v1900 = vrot.slane %v1854, %v1899
    %v1901 = vlaneseq
    %v1902 = vshrl.u32 %v1901, 7
    %v1903 = vsub.s32 2, %v1902
    %v1904 = vrot.slane %v1854, %v1903
    %v1905 = vlaneseq
    %v1906 = vshrl.u32 %v1905, 7
    %v1907 = vsub.s32 3, %v1906
    %v1908 = vrot.slane %v1854, %v1907
    %v1909 = vlaneseq
    %v1910 = vshrl.u32 %v1909, 7
    %v1911 = vsub.s32 4, %v1910
    %v1912 = vrot.slane %v1854, %v1911
    %v1913 = vlaneseq
    %v1914 = vshrl.u32 %v1913, 7
    %v1915 = vsub.s32 5, %v1914
    %v1916 = vrot.slane %v1854, %v1915
    %v1917 = vlaneseq
    %v1918 = vshrl.u32 %v1917, 7
    %v1919 = vsub.s32 0, %v1918
    %v1920 = vrot.slane %v1855, %v1919
    %v1921 = vlaneseq
    %v1922 = vshrl.u32 %v1921, 7
    %v1923 = vsub.s32 1, %v1922
    %v1924 = vrot.slane %v1855, %v1923
    %v1925 = vlaneseq
    %v1926 = vshrl.u32 %v1925, 7
    %v1927 = vsub.s32 2, %v1926
    %v1928 = vrot.slane %v1855, %v1927
    %v1929 = vlaneseq
    %v1930 = vshrl.u32 %v1929, 7
    %v1931 = vsub.s32 3, %v1930
    %v1932 = vrot.slane %v1855, %v1931
    %v1933 = vlaneseq
    %v1934 = vshrl.u32 %v1933, 7
    %v1935 = vsub.s32 4, %v1934
    %v1936 = vrot.slane %v1855, %v1935
    %v1937 = vlaneseq
    %v1938 = vshrl.u32 %v1937, 7
    %v1939 = vsub.s32 5, %v1938
    %v1940 = vrot.slane %v1855, %v1939
    %v1941 = vlaneseq
    %v1942 = vshrl.u32 %v1941, 7
    %v1943 = vsub.s32 0, %v1942
    %v1944 = vrot.slane %v1856, %v1943
    %v1945 = vlaneseq
    %v1946 = vshrl.u32 %v1945, 7
    %v1947 = vsub.s32 1, %v1946
    %v1948 = vrot.slane %v1856, %v1947
    %v1949 = vlaneseq
    %v1950 = vshrl.u32 %v1949, 7
    %v1951 = vsub.s32 2, %v1950
    %v1952 = vrot.slane %v1856, %v1951
    %v1953 = vlaneseq
    %v1954 = vshrl.u32 %v1953, 7
    %v1955 = vsub.s32 3, %v1954
    %v1956 = vrot.slane %v1856, %v1955
    %v1957 = vlaneseq
    %v1958 = vshrl.u32 %v1957, 7
    %v1959 = vsub.s32 4, %v1958
    %v1960 = vrot.slane %v1856, %v1959
    %v1961 = vlaneseq
    %v1962 = vshrl.u32 %v1961, 7
    %v1963 = vsub.s32 5, %v1962
    %v1964 = vrot.slane %v1856, %v1963
    %v1965 = vlaneseq
    %v1966 = vshrl.u32 %v1965, 7
    %v1967 = vsub.s32 0, %v1966
    %v1968 = vrot.slane %v1857, %v1967
    %v1969 = vlaneseq
    %v1970 = vshrl.u32 %v1969, 7
    %v1971 = vsub.s32 1, %v1970
    %v1972 = vrot.slane %v1857, %v1971
    %v1973 = vlaneseq
    %v1974 = vshrl.u32 %v1973, 7
    %v1975 = vsub.s32 2, %v1974
    %v1976 = vrot.slane %v1857, %v1975
    %v1977 = vlaneseq
    %v1978 = vshrl.u32 %v1977, 7
    %v1979 = vsub.s32 3, %v1978
    %v1980 = vrot.slane %v1857, %v1979
    %v1981 = vlaneseq
    %v1982 = vshrl.u32 %v1981, 7
    %v1983 = vsub.s32 4, %v1982
    %v1984 = vrot.slane %v1857, %v1983
    %v1985 = vlaneseq
    %v1986 = vshrl.u32 %v1985, 7
    %v1987 = vsub.s32 5, %v1986
    %v1988 = vrot.slane %v1857, %v1987
    %v1989 = vlaneseq
    %v1990 = vshrl.u32 %v1989, 7
    %v1991 = vsub.s32 0, %v1990
    %v1992 = vrot.slane %v1858, %v1991
    %v1993 = vlaneseq
    %v1994 = vshrl.u32 %v1993, 7
    %v1995 = vsub.s32 1, %v1994
    %v1996 = vrot.slane %v1858, %v1995
    %v1997 = vlaneseq
    %v1998 = vshrl.u32 %v1997, 7
    %v1999 = vsub.s32 2, %v1998
    %v2000 = vrot.slane %v1858, %v1999
    %v2001 = vlaneseq
    %v2002 = vshrl.u32 %v2001, 7
    %v2003 = vsub.s32 3, %v2002
    %v2004 = vrot.slane %v1858, %v2003
    %v2005 = vlaneseq
    %v2006 = vshrl.u32 %v2005, 7
    %v2007 = vsub.s32 4, %v2006
    %v2008 = vrot.slane %v1858, %v2007
    %v2009 = vlaneseq
    %v2010 = vshrl.u32 %v2009, 7
    %v2011 = vsub.s32 5, %v2010
    %v2012 = vrot.slane %v1858, %v2011
    %v2013 = vlaneseq
    %v2014 = vshrl.u32 %v2013, 7
    %v2015 = vsub.s32 0, %v2014
    %v2016 = vrot.slane %v1859, %v2015
    %v2017 = vlaneseq
    %v2018 = vshrl.u32 %v2017, 7
    %v2019 = vsub.s32 1, %v2018
    %v2020 = vrot.slane %v1859, %v2019
    %v2021 = vlaneseq
    %v2022 = vshrl.u32 %v2021, 7
    %v2023 = vsub.s32 2, %v2022
    %v2024 = vrot.slane %v1859, %v2023
    %v2025 = vlaneseq
    %v2026 = vshrl.u32 %v2025, 7
    %v2027 = vsub.s32 3, %v2026
    %v2028 = vrot.slane %v1859, %v2027
    %v2029 = vlaneseq
    %v2030 = vshrl.u32 %v2029, 7
    %v2031 = vsub.s32 4, %v2030
    %v2032 = vrot.slane %v1859, %v2031
    %v2033 = vlaneseq
    %v2034 = vshrl.u32 %v2033, 7
    %v2035 = vsub.s32 5, %v2034
    %v2036 = vrot.slane %v1859, %v2035
    %v2037 = vlaneseq
    %v2038 = vshrl.u32 %v2037, 7
    %v2039 = vsub.s32 0, %v2038
    %v2040 = vrot.slane %v1860, %v2039
    %v2041 = vlaneseq
    %v2042 = vshrl.u32 %v2041, 7
    %v2043 = vsub.s32 1, %v2042
    %v2044 = vrot.slane %v1860, %v2043
    %v2045 = vlaneseq
    %v2046 = vshrl.u32 %v2045, 7
    %v2047 = vsub.s32 2, %v2046
    %v2048 = vrot.slane %v1860, %v2047
    %v2049 = vlaneseq
    %v2050 = vshrl.u32 %v2049, 7
    %v2051 = vsub.s32 3, %v2050
    %v2052 = vrot.slane %v1860, %v2051
    %v2053 = vlaneseq
    %v2054 = vshrl.u32 %v2053, 7
    %v2055 = vsub.s32 4, %v2054
    %v2056 = vrot.slane %v1860, %v2055
    %v2057 = vlaneseq
    %v2058 = vshrl.u32 %v2057, 7
    %v2059 = vsub.s32 5, %v2058
    %v2060 = vrot.slane %v1860, %v2059
    %v2061 = vlaneseq
    %v2062 = vshrl.u32 %v2061, 7
    %v2063 = vsub.s32 0, %v2062
    %v2064 = vrot.slane %v1861, %v2063
    %v2065 = vlaneseq
    %v2066 = vshrl.u32 %v2065, 7
    %v2067 = vsub.s32 1, %v2066
    %v2068 = vrot.slane %v1861, %v2067
    %v2069 = vlaneseq
    %v2070 = vshrl.u32 %v2069, 7
    %v2071 = vsub.s32 2, %v2070
    %v2072 = vrot.slane %v1861, %v2071
    %v2073 = vlaneseq
    %v2074 = vshrl.u32 %v2073, 7
    %v2075 = vsub.s32 3, %v2074
    %v2076 = vrot.slane %v1861, %v2075
    %v2077 = vlaneseq
    %v2078 = vshrl.u32 %v2077, 7
    %v2079 = vsub.s32 4, %v2078
    %v2080 = vrot.slane %v1861, %v2079
    %v2081 = vlaneseq
    %v2082 = vshrl.u32 %v2081, 7
    %v2083 = vsub.s32 5, %v2082
    %v2084 = vrot.slane %v1861, %v2083
    %v2085 = vlaneseq
    %v2086 = vshrl.u32 %v2085, 7
    %v2087 = vsub.s32 0, %v2086
    %v2088 = vrot.slane %v1862, %v2087
    %v2089 = vlaneseq
    %v2090 = vshrl.u32 %v2089, 7
    %v2091 = vsub.s32 1, %v2090
    %v2092 = vrot.slane %v1862, %v2091
    %v2093 = vlaneseq
    %v2094 = vshrl.u32 %v2093, 7
    %v2095 = vsub.s32 2, %v2094
    %v2096 = vrot.slane %v1862, %v2095
    %v2097 = vlaneseq
    %v2098 = vshrl.u32 %v2097, 7
    %v2099 = vsub.s32 3, %v2098
    %v2100 = vrot.slane %v1862, %v2099
    %v2101 = vlaneseq
    %v2102 = vshrl.u32 %v2101, 7
    %v2103 = vsub.s32 4, %v2102
    %v2104 = vrot.slane %v1862, %v2103
    %v2105 = vlaneseq
    %v2106 = vshrl.u32 %v2105, 7
    %v2107 = vsub.s32 5, %v2106
    %v2108 = vrot.slane %v1862, %v2107
    %v2109 = vlaneseq
    %v2110 = vshrl.u32 %v2109, 7
    %v2111 = vsub.s32 0, %v2110
    %v2112 = vrot.slane %v1863, %v2111
    %v2113 = vlaneseq
    %v2114 = vshrl.u32 %v2113, 7
    %v2115 = vsub.s32 1, %v2114
    %v2116 = vrot.slane %v1863, %v2115
    %v2117 = vlaneseq
    %v2118 = vshrl.u32 %v2117, 7
    %v2119 = vsub.s32 2, %v2118
    %v2120 = vrot.slane %v1863, %v2119
    %v2121 = vlaneseq
    %v2122 = vshrl.u32 %v2121, 7
    %v2123 = vsub.s32 3, %v2122
    %v2124 = vrot.slane %v1863, %v2123
    %v2125 = vlaneseq
    %v2126 = vshrl.u32 %v2125, 7
    %v2127 = vsub.s32 4, %v2126
    %v2128 = vrot.slane %v1863, %v2127
    %v2129 = vlaneseq
    %v2130 = vshrl.u32 %v2129, 7
    %v2131 = vsub.s32 5, %v2130
    %v2132 = vrot.slane %v1863, %v2131
    %v2133 = vlaneseq
    %v2134 = vshrl.u32 %v2133, 7
    %v2135 = vsub.s32 0, %v2134
    %v2136 = vrot.slane %v1864, %v2135
    %v2137 = vlaneseq
    %v2138 = vshrl.u32 %v2137, 7
    %v2139 = vsub.s32 1, %v2138
    %v2140 = vrot.slane %v1864, %v2139
    %v2141 = vlaneseq
    %v2142 = vshrl.u32 %v2141, 7
    %v2143 = vsub.s32 2, %v2142
    %v2144 = vrot.slane %v1864, %v2143
    %v2145 = vlaneseq
    %v2146 = vshrl.u32 %v2145, 7
    %v2147 = vsub.s32 3, %v2146
    %v2148 = vrot.slane %v1864, %v2147
    %v2149 = vlaneseq
    %v2150 = vshrl.u32 %v2149, 7
    %v2151 = vsub.s32 4, %v2150
    %v2152 = vrot.slane %v1864, %v2151
    %v2153 = vlaneseq
    %v2154 = vshrl.u32 %v2153, 7
    %v2155 = vsub.s32 5, %v2154
    %v2156 = vrot.slane %v1864, %v2155
    %v2157 = vlaneseq
    %v2158 = vshrl.u32 %v2157, 7
    %v2159 = vsub.s32 0, %v2158
    %v2160 = vrot.slane %v1865, %v2159
    %v2161 = vlaneseq
    %v2162 = vshrl.u32 %v2161, 7
    %v2163 = vsub.s32 1, %v2162
    %v2164 = vrot.slane %v1865, %v2163
    %v2165 = vlaneseq
    %v2166 = vshrl.u32 %v2165, 7
    %v2167 = vsub.s32 2, %v2166
    %v2168 = vrot.slane %v1865, %v2167
    %v2169 = vlaneseq
    %v2170 = vshrl.u32 %v2169, 7
    %v2171 = vsub.s32 3, %v2170
    %v2172 = vrot.slane %v1865, %v2171
    %v2173 = vlaneseq
    %v2174 = vshrl.u32 %v2173, 7
    %v2175 = vsub.s32 4, %v2174
    %v2176 = vrot.slane %v1865, %v2175
    %v2177 = vlaneseq
    %v2178 = vshrl.u32 %v2177, 7
    %v2179 = vsub.s32 5, %v2178
    %v2180 = vrot.slane %v1865, %v2179
    %v2181 = vlaneseq
    %v2182 = vshrl.u32 %v2181, 7
    %v2183 = vsub.s32 0, %v2182
    %v2184 = vrot.slane %v1866, %v2183
    %v2185 = vlaneseq
    %v2186 = vshrl.u32 %v2185, 7
    %v2187 = vsub.s32 1, %v2186
    %v2188 = vrot.slane %v1866, %v2187
    %v2189 = vlaneseq
    %v2190 = vshrl.u32 %v2189, 7
    %v2191 = vsub.s32 2, %v2190
    %v2192 = vrot.slane %v1866, %v2191
    %v2193 = vlaneseq
    %v2194 = vshrl.u32 %v2193, 7
    %v2195 = vsub.s32 3, %v2194
    %v2196 = vrot.slane %v1866, %v2195
    %v2197 = vlaneseq
    %v2198 = vshrl.u32 %v2197, 7
    %v2199 = vsub.s32 4, %v2198
    %v2200 = vrot.slane %v1866, %v2199
    %v2201 = vlaneseq
    %v2202 = vshrl.u32 %v2201, 7
    %v2203 = vsub.s32 5, %v2202
    %v2204 = vrot.slane %v1866, %v2203
    %v2205 = vlaneseq
    %v2206 = vshrl.u32 %v2205, 7
    %v2207 = vsub.s32 0, %v2206
    %v2208 = vrot.slane %v1867, %v2207
    %v2209 = vlaneseq
    %v2210 = vshrl.u32 %v2209, 7
    %v2211 = vsub.s32 1, %v2210
    %v2212 = vrot.slane %v1867, %v2211
    %v2213 = vlaneseq
    %v2214 = vshrl.u32 %v2213, 7
    %v2215 = vsub.s32 2, %v2214
    %v2216 = vrot.slane %v1867, %v2215
    %v2217 = vlaneseq
    %v2218 = vshrl.u32 %v2217, 7
    %v2219 = vsub.s32 3, %v2218
    %v2220 = vrot.slane %v1867, %v2219
    %v2221 = vlaneseq
    %v2222 = vshrl.u32 %v2221, 7
    %v2223 = vsub.s32 4, %v2222
    %v2224 = vrot.slane %v1867, %v2223
    %v2225 = vlaneseq
    %v2226 = vshrl.u32 %v2225, 7
    %v2227 = vsub.s32 5, %v2226
    %v2228 = vrot.slane %v1867, %v2227
    %v2229 = vlaneseq
    %v2230 = vshrl.u32 %v2229, 7
    %v2231 = vsub.s32 0, %v2230
    %v2232 = vrot.slane %v1868, %v2231
    %v2233 = vlaneseq
    %v2234 = vshrl.u32 %v2233, 7
    %v2235 = vsub.s32 1, %v2234
    %v2236 = vrot.slane %v1868, %v2235
    %v2237 = vlaneseq
    %v2238 = vshrl.u32 %v2237, 7
    %v2239 = vsub.s32 2, %v2238
    %v2240 = vrot.slane %v1868, %v2239
    %v2241 = vlaneseq
    %v2242 = vshrl.u32 %v2241, 7
    %v2243 = vsub.s32 3, %v2242
    %v2244 = vrot.slane %v1868, %v2243
    %v2245 = vlaneseq
    %v2246 = vshrl.u32 %v2245, 7
    %v2247 = vsub.s32 4, %v2246
    %v2248 = vrot.slane %v1868, %v2247
    %v2249 = vlaneseq
    %v2250 = vshrl.u32 %v2249, 7
    %v2251 = vsub.s32 5, %v2250
    %v2252 = vrot.slane %v1868, %v2251
    %v2254 = vpack.i.b16 %v1872, %v1872
    %v2256 = vlaneseq
    %v2257 = vshrl.u32 %v2256, 7
    %v2258 = vsub.s32 0, %v2257
    %v2259 = vrot.slane %v2254, %v2258
    %v2261 = vpack.i.b16 %v1876, %v1876
    %v2263 = vlaneseq
    %v2264 = vshrl.u32 %v2263, 7
    %v2265 = vsub.s32 0, %v2264
    %v2266 = vrot.slane %v2261, %v2265
    %v2268 = vpack.i.b16 %v1880, %v1880
    %v2270 = vlaneseq
    %v2271 = vshrl.u32 %v2270, 7
    %v2272 = vsub.s32 0, %v2271
    %v2273 = vrot.slane %v2268, %v2272
    %v2275 = vpack.i.b16 %v1884, %v1884
    %v2277 = vlaneseq
    %v2278 = vshrl.u32 %v2277, 7
    %v2279 = vsub.s32 0, %v2278
    %v2280 = vrot.slane %v2275, %v2279
    %v2282 = vpack.i.b16 %v1888, %v1888
    %v2284 = vlaneseq
    %v2285 = vshrl.u32 %v2284, 7
    %v2286 = vsub.s32 0, %v2285
    %v2287 = vrot.slane %v2282, %v2286
    %v2289 = vpack.i.b16 %v1892, %v1892
    %v2291 = vlaneseq
    %v2292 = vshrl.u32 %v2291, 7
    %v2293 = vsub.s32 0, %v2292
    %v2294 = vrot.slane %v2289, %v2293
    %v2296 = vpack.i.b16 %v1896, %v1896
    %v2298 = vlaneseq
    %v2299 = vshrl.u32 %v2298, 7
    %v2300 = vsub.s32 0, %v2299
    %v2301 = vrot.slane %v2296, %v2300
    %v2303 = vpack.i.b16 %v1900, %v1900
    %v2305 = vlaneseq
    %v2306 = vshrl.u32 %v2305, 7
    %v2307 = vsub.s32 0, %v2306
    %v2308 = vrot.slane %v2303, %v2307
    %v2310 = vpack.i.b16 %v1904, %v1904
    %v2312 = vlaneseq
    %v2313 = vshrl.u32 %v2312, 7
    %v2314 = vsub.s32 0, %v2313
    %v2315 = vrot.slane %v2310, %v2314
    %v2317 = vpack.i.b16 %v1908, %v1908
    %v2319 = vlaneseq
    %v2320 = vshrl.u32 %v2319, 7
    %v2321 = vsub.s32 0, %v2320
    %v2322 = vrot.slane %v2317, %v2321
    %v2324 = vpack.i.b16 %v1912, %v1912
    %v2326 = vlaneseq
    %v2327 = vshrl.u32 %v2326, 7
    %v2328 = vsub.s32 0, %v2327
    %v2329 = vrot.slane %v2324, %v2328
    %v2331 = vpack.i.b16 %v1916, %v1916
    %v2333 = vlaneseq
    %v2334 = vshrl.u32 %v2333, 7
    %v2335 = vsub.s32 0, %v2334
    %v2336 = vrot.slane %v2331, %v2335
    %v2338 = vpack.i.b16 %v1920, %v1920
    %v2340 = vlaneseq
    %v2341 = vshrl.u32 %v2340, 7
    %v2342 = vsub.s32 0, %v2341
    %v2343 = vrot.slane %v2338, %v2342
    %v2345 = vpack.i.b16 %v1924, %v1924
    %v2347 = vlaneseq
    %v2348 = vshrl.u32 %v2347, 7
    %v2349 = vsub.s32 0, %v2348
    %v2350 = vrot.slane %v2345, %v2349
    %v2352 = vpack.i.b16 %v1928, %v1928
    %v2354 = vlaneseq
    %v2355 = vshrl.u32 %v2354, 7
    %v2356 = vsub.s32 0, %v2355
    %v2357 = vrot.slane %v2352, %v2356
    %v2359 = vpack.i.b16 %v1932, %v1932
    %v2361 = vlaneseq
    %v2362 = vshrl.u32 %v2361, 7
    %v2363 = vsub.s32 0, %v2362
    %v2364 = vrot.slane %v2359, %v2363
    %v2366 = vpack.i.b16 %v1936, %v1936
    %v2368 = vlaneseq
    %v2369 = vshrl.u32 %v2368, 7
    %v2370 = vsub.s32 0, %v2369
    %v2371 = vrot.slane %v2366, %v2370
    %v2373 = vpack.i.b16 %v1940, %v1940
    %v2375 = vlaneseq
    %v2376 = vshrl.u32 %v2375, 7
    %v2377 = vsub.s32 0, %v2376
    %v2378 = vrot.slane %v2373, %v2377
    %v2380 = vpack.i.b16 %v1944, %v1944
    %v2382 = vlaneseq
    %v2383 = vshrl.u32 %v2382, 7
    %v2384 = vsub.s32 0, %v2383
    %v2385 = vrot.slane %v2380, %v2384
    %v2387 = vpack.i.b16 %v1948, %v1948
    %v2389 = vlaneseq
    %v2390 = vshrl.u32 %v2389, 7
    %v2391 = vsub.s32 0, %v2390
    %v2392 = vrot.slane %v2387, %v2391
    %v2394 = vpack.i.b16 %v1952, %v1952
    %v2396 = vlaneseq
    %v2397 = vshrl.u32 %v2396, 7
    %v2398 = vsub.s32 0, %v2397
    %v2399 = vrot.slane %v2394, %v2398
    %v2401 = vpack.i.b16 %v1956, %v1956
    %v2403 = vlaneseq
    %v2404 = vshrl.u32 %v2403, 7
    %v2405 = vsub.s32 0, %v2404
    %v2406 = vrot.slane %v2401, %v2405
    %v2408 = vpack.i.b16 %v1960, %v1960
    %v2410 = vlaneseq
    %v2411 = vshrl.u32 %v2410, 7
    %v2412 = vsub.s32 0, %v2411
    %v2413 = vrot.slane %v2408, %v2412
    %v2415 = vpack.i.b16 %v1964, %v1964
    %v2417 = vlaneseq
    %v2418 = vshrl.u32 %v2417, 7
    %v2419 = vsub.s32 0, %v2418
    %v2420 = vrot.slane %v2415, %v2419
    %v2422 = vpack.i.b16 %v1968, %v1968
    %v2424 = vlaneseq
    %v2425 = vshrl.u32 %v2424, 7
    %v2426 = vsub.s32 0, %v2425
    %v2427 = vrot.slane %v2422, %v2426
    %v2429 = vpack.i.b16 %v1972, %v1972
    %v2431 = vlaneseq
    %v2432 = vshrl.u32 %v2431, 7
    %v2433 = vsub.s32 0, %v2432
    %v2434 = vrot.slane %v2429, %v2433
    %v2436 = vpack.i.b16 %v1976, %v1976
    %v2438 = vlaneseq
    %v2439 = vshrl.u32 %v2438, 7
    %v2440 = vsub.s32 0, %v2439
    %v2441 = vrot.slane %v2436, %v2440
    %v2443 = vpack.i.b16 %v1980, %v1980
    %v2445 = vlaneseq
    %v2446 = vshrl.u32 %v2445, 7
    %v2447 = vsub.s32 0, %v2446
    %v2448 = vrot.slane %v2443, %v2447
    %v2450 = vpack.i.b16 %v1984, %v1984
    %v2452 = vlaneseq
    %v2453 = vshrl.u32 %v2452, 7
    %v2454 = vsub.s32 0, %v2453
    %v2455 = vrot.slane %v2450, %v2454
    %v2457 = vpack.i.b16 %v1988, %v1988
    %v2459 = vlaneseq
    %v2460 = vshrl.u32 %v2459, 7
    %v2461 = vsub.s32 0, %v2460
    %v2462 = vrot.slane %v2457, %v2461
    %v2464 = vpack.i.b16 %v1992, %v1992
    %v2466 = vlaneseq
    %v2467 = vshrl.u32 %v2466, 7
    %v2468 = vsub.s32 0, %v2467
    %v2469 = vrot.slane %v2464, %v2468
    %v2471 = vpack.i.b16 %v1996, %v1996
    %v2473 = vlaneseq
    %v2474 = vshrl.u32 %v2473, 7
    %v2475 = vsub.s32 0, %v2474
    %v2476 = vrot.slane %v2471, %v2475
    %v2478 = vpack.i.b16 %v2000, %v2000
    %v2480 = vlaneseq
    %v2481 = vshrl.u32 %v2480, 7
    %v2482 = vsub.s32 0, %v2481
    %v2483 = vrot.slane %v2478, %v2482
    %v2485 = vpack.i.b16 %v2004, %v2004
    %v2487 = vlaneseq
    %v2488 = vshrl.u32 %v2487, 7
    %v2489 = vsub.s32 0, %v2488
    %v2490 = vrot.slane %v2485, %v2489
    %v2492 = vpack.i.b16 %v2008, %v2008
    %v2494 = vlaneseq
    %v2495 = vshrl.u32 %v2494, 7
    %v2496 = vsub.s32 0, %v2495
    %v2497 = vrot.slane %v2492, %v2496
    %v2499 = vpack.i.b16 %v2012, %v2012
    %v2501 = vlaneseq
    %v2502 = vshrl.u32 %v2501, 7
    %v2503 = vsub.s32 0, %v2502
    %v2504 = vrot.slane %v2499, %v2503
    %v2506 = vpack.i.b16 %v2016, %v2016
    %v2508 = vlaneseq
    %v2509 = vshrl.u32 %v2508, 7
    %v2510 = vsub.s32 0, %v2509
    %v2511 = vrot.slane %v2506, %v2510
    %v2513 = vpack.i.b16 %v2020, %v2020
    %v2515 = vlaneseq
    %v2516 = vshrl.u32 %v2515, 7
    %v2517 = vsub.s32 0, %v2516
    %v2518 = vrot.slane %v2513, %v2517
    %v2520 = vpack.i.b16 %v2024, %v2024
    %v2522 = vlaneseq
    %v2523 = vshrl.u32 %v2522, 7
    %v2524 = vsub.s32 0, %v2523
    %v2525 = vrot.slane %v2520, %v2524
    %v2527 = vpack.i.b16 %v2028, %v2028
    %v2529 = vlaneseq
    %v2530 = vshrl.u32 %v2529, 7
    %v2531 = vsub.s32 0, %v2530
    %v2532 = vrot.slane %v2527, %v2531
    %v2534 = vpack.i.b16 %v2032, %v2032
    %v2536 = vlaneseq
    %v2537 = vshrl.u32 %v2536, 7
    %v2538 = vsub.s32 0, %v2537
    %v2539 = vrot.slane %v2534, %v2538
    %v2541 = vpack.i.b16 %v2036, %v2036
    %v2543 = vlaneseq
    %v2544 = vshrl.u32 %v2543, 7
    %v2545 = vsub.s32 0, %v2544
    %v2546 = vrot.slane %v2541, %v2545
    %v2548 = vpack.i.b16 %v2040, %v2040
    %v2550 = vlaneseq
    %v2551 = vshrl.u32 %v2550, 7
    %v2552 = vsub.s32 0, %v2551
    %v2553 = vrot.slane %v2548, %v2552
    %v2555 = vpack.i.b16 %v2044, %v2044
    %v2557 = vlaneseq
    %v2558 = vshrl.u32 %v2557, 7
    %v2559 = vsub.s32 0, %v2558
    %v2560 = vrot.slane %v2555, %v2559
    %v2562 = vpack.i.b16 %v2048, %v2048
    %v2564 = vlaneseq
    %v2565 = vshrl.u32 %v2564, 7
    %v2566 = vsub.s32 0, %v2565
    %v2567 = vrot.slane %v2562, %v2566
    %v2569 = vpack.i.b16 %v2052, %v2052
    %v2571 = vlaneseq
    %v2572 = vshrl.u32 %v2571, 7
    %v2573 = vsub.s32 0, %v2572
    %v2574 = vrot.slane %v2569, %v2573
    %v2576 = vpack.i.b16 %v2056, %v2056
    %v2578 = vlaneseq
    %v2579 = vshrl.u32 %v2578, 7
    %v2580 = vsub.s32 0, %v2579
    %v2581 = vrot.slane %v2576, %v2580
    %v2583 = vpack.i.b16 %v2060, %v2060
    %v2585 = vlaneseq
    %v2586 = vshrl.u32 %v2585, 7
    %v2587 = vsub.s32 0, %v2586
    %v2588 = vrot.slane %v2583, %v2587
    %v2590 = vpack.i.b16 %v2064, %v2064
    %v2592 = vlaneseq
    %v2593 = vshrl.u32 %v2592, 7
    %v2594 = vsub.s32 0, %v2593
    %v2595 = vrot.slane %v2590, %v2594
    %v2597 = vpack.i.b16 %v2068, %v2068
    %v2599 = vlaneseq
    %v2600 = vshrl.u32 %v2599, 7
    %v2601 = vsub.s32 0, %v2600
    %v2602 = vrot.slane %v2597, %v2601
    %v2604 = vpack.i.b16 %v2072, %v2072
    %v2606 = vlaneseq
    %v2607 = vshrl.u32 %v2606, 7
    %v2608 = vsub.s32 0, %v2607
    %v2609 = vrot.slane %v2604, %v2608
    %v2611 = vpack.i.b16 %v2076, %v2076
    %v2613 = vlaneseq
    %v2614 = vshrl.u32 %v2613, 7
    %v2615 = vsub.s32 0, %v2614
    %v2616 = vrot.slane %v2611, %v2615
    %v2618 = vpack.i.b16 %v2080, %v2080
    %v2620 = vlaneseq
    %v2621 = vshrl.u32 %v2620, 7
    %v2622 = vsub.s32 0, %v2621
    %v2623 = vrot.slane %v2618, %v2622
    %v2625 = vpack.i.b16 %v2084, %v2084
    %v2627 = vlaneseq
    %v2628 = vshrl.u32 %v2627, 7
    %v2629 = vsub.s32 0, %v2628
    %v2630 = vrot.slane %v2625, %v2629
    %v2632 = vpack.i.b16 %v2088, %v2088
    %v2634 = vlaneseq
    %v2635 = vshrl.u32 %v2634, 7
    %v2636 = vsub.s32 0, %v2635
    %v2637 = vrot.slane %v2632, %v2636
    %v2639 = vpack.i.b16 %v2092, %v2092
    %v2641 = vlaneseq
    %v2642 = vshrl.u32 %v2641, 7
    %v2643 = vsub.s32 0, %v2642
    %v2644 = vrot.slane %v2639, %v2643
    %v2646 = vpack.i.b16 %v2096, %v2096
    %v2648 = vlaneseq
    %v2649 = vshrl.u32 %v2648, 7
    %v2650 = vsub.s32 0, %v2649
    %v2651 = vrot.slane %v2646, %v2650
    %v2653 = vpack.i.b16 %v2100, %v2100
    %v2655 = vlaneseq
    %v2656 = vshrl.u32 %v2655, 7
    %v2657 = vsub.s32 0, %v2656
    %v2658 = vrot.slane %v2653, %v2657
    %v2660 = vpack.i.b16 %v2104, %v2104
    %v2662 = vlaneseq
    %v2663 = vshrl.u32 %v2662, 7
    %v2664 = vsub.s32 0, %v2663
    %v2665 = vrot.slane %v2660, %v2664
    %v2667 = vpack.i.b16 %v2108, %v2108
    %v2669 = vlaneseq
    %v2670 = vshrl.u32 %v2669, 7
    %v2671 = vsub.s32 0, %v2670
    %v2672 = vrot.slane %v2667, %v2671
    %v2674 = vpack.i.b16 %v2112, %v2112
    %v2676 = vlaneseq
    %v2677 = vshrl.u32 %v2676, 7
    %v2678 = vsub.s32 0, %v2677
    %v2679 = vrot.slane %v2674, %v2678
    %v2681 = vpack.i.b16 %v2116, %v2116
    %v2683 = vlaneseq
    %v2684 = vshrl.u32 %v2683, 7
    %v2685 = vsub.s32 0, %v2684
    %v2686 = vrot.slane %v2681, %v2685
    %v2688 = vpack.i.b16 %v2120, %v2120
    %v2690 = vlaneseq
    %v2691 = vshrl.u32 %v2690, 7
    %v2692 = vsub.s32 0, %v2691
    %v2693 = vrot.slane %v2688, %v2692
    %v2695 = vpack.i.b16 %v2124, %v2124
    %v2697 = vlaneseq
    %v2698 = vshrl.u32 %v2697, 7
    %v2699 = vsub.s32 0, %v2698
    %v2700 = vrot.slane %v2695, %v2699
    %v2702 = vpack.i.b16 %v2128, %v2128
    %v2704 = vlaneseq
    %v2705 = vshrl.u32 %v2704, 7
    %v2706 = vsub.s32 0, %v2705
    %v2707 = vrot.slane %v2702, %v2706
    %v2709 = vpack.i.b16 %v2132, %v2132
    %v2711 = vlaneseq
    %v2712 = vshrl.u32 %v2711, 7
    %v2713 = vsub.s32 0, %v2712
    %v2714 = vrot.slane %v2709, %v2713
    %v2716 = vpack.i.b16 %v2136, %v2136
    %v2718 = vlaneseq
    %v2719 = vshrl.u32 %v2718, 7
    %v2720 = vsub.s32 0, %v2719
    %v2721 = vrot.slane %v2716, %v2720
    %v2723 = vpack.i.b16 %v2140, %v2140
    %v2725 = vlaneseq
    %v2726 = vshrl.u32 %v2725, 7
    %v2727 = vsub.s32 0, %v2726
    %v2728 = vrot.slane %v2723, %v2727
    %v2730 = vpack.i.b16 %v2144, %v2144
    %v2732 = vlaneseq
    %v2733 = vshrl.u32 %v2732, 7
    %v2734 = vsub.s32 0, %v2733
    %v2735 = vrot.slane %v2730, %v2734
    %v2737 = vpack.i.b16 %v2148, %v2148
    %v2739 = vlaneseq
    %v2740 = vshrl.u32 %v2739, 7
    %v2741 = vsub.s32 0, %v2740
    %v2742 = vrot.slane %v2737, %v2741
    %v2744 = vpack.i.b16 %v2152, %v2152
    %v2746 = vlaneseq
    %v2747 = vshrl.u32 %v2746, 7
    %v2748 = vsub.s32 0, %v2747
    %v2749 = vrot.slane %v2744, %v2748
    %v2751 = vpack.i.b16 %v2156, %v2156
    %v2753 = vlaneseq
    %v2754 = vshrl.u32 %v2753, 7
    %v2755 = vsub.s32 0, %v2754
    %v2756 = vrot.slane %v2751, %v2755
    %v2758 = vpack.i.b16 %v2160, %v2160
    %v2760 = vlaneseq
    %v2761 = vshrl.u32 %v2760, 7
    %v2762 = vsub.s32 0, %v2761
    %v2763 = vrot.slane %v2758, %v2762
    %v2765 = vpack.i.b16 %v2164, %v2164
    %v2767 = vlaneseq
    %v2768 = vshrl.u32 %v2767, 7
    %v2769 = vsub.s32 0, %v2768
    %v2770 = vrot.slane %v2765, %v2769
    %v2772 = vpack.i.b16 %v2168, %v2168
    %v2774 = vlaneseq
    %v2775 = vshrl.u32 %v2774, 7
    %v2776 = vsub.s32 0, %v2775
    %v2777 = vrot.slane %v2772, %v2776
    %v2779 = vpack.i.b16 %v2172, %v2172
    %v2781 = vlaneseq
    %v2782 = vshrl.u32 %v2781, 7
    %v2783 = vsub.s32 0, %v2782
    %v2784 = vrot.slane %v2779, %v2783
    %v2786 = vpack.i.b16 %v2176, %v2176
    %v2788 = vlaneseq
    %v2789 = vshrl.u32 %v2788, 7
    %v2790 = vsub.s32 0, %v2789
    %v2791 = vrot.slane %v2786, %v2790
    %v2793 = vpack.i.b16 %v2180, %v2180
    %v2795 = vlaneseq
    %v2796 = vshrl.u32 %v2795, 7
    %v2797 = vsub.s32 0, %v2796
    %v2798 = vrot.slane %v2793, %v2797
    %v2800 = vpack.i.b16 %v2184, %v2184
    %v2802 = vlaneseq
    %v2803 = vshrl.u32 %v2802, 7
    %v2804 = vsub.s32 0, %v2803
    %v2805 = vrot.slane %v2800, %v2804
    %v2807 = vpack.i.b16 %v2188, %v2188
    %v2809 = vlaneseq
    %v2810 = vshrl.u32 %v2809, 7
    %v2811 = vsub.s32 0, %v2810
    %v2812 = vrot.slane %v2807, %v2811
    %v2814 = vpack.i.b16 %v2192, %v2192
    %v2816 = vlaneseq
    %v2817 = vshrl.u32 %v2816, 7
    %v2818 = vsub.s32 0, %v2817
    %v2819 = vrot.slane %v2814, %v2818
    %v2821 = vpack.i.b16 %v2196, %v2196
    %v2823 = vlaneseq
    %v2824 = vshrl.u32 %v2823, 7
    %v2825 = vsub.s32 0, %v2824
    %v2826 = vrot.slane %v2821, %v2825
    %v2828 = vpack.i.b16 %v2200, %v2200
    %v2830 = vlaneseq
    %v2831 = vshrl.u32 %v2830, 7
    %v2832 = vsub.s32 0, %v2831
    %v2833 = vrot.slane %v2828, %v2832
    %v2835 = vpack.i.b16 %v2204, %v2204
    %v2837 = vlaneseq
    %v2838 = vshrl.u32 %v2837, 7
    %v2839 = vsub.s32 0, %v2838
    %v2840 = vrot.slane %v2835, %v2839
    %v2842 = vpack.i.b16 %v2208, %v2208
    %v2844 = vlaneseq
    %v2845 = vshrl.u32 %v2844, 7
    %v2846 = vsub.s32 0, %v2845
    %v2847 = vrot.slane %v2842, %v2846
    %v2849 = vpack.i.b16 %v2212, %v2212
    %v2851 = vlaneseq
    %v2852 = vshrl.u32 %v2851, 7
    %v2853 = vsub.s32 0, %v2852
    %v2854 = vrot.slane %v2849, %v2853
    %v2856 = vpack.i.b16 %v2216, %v2216
    %v2858 = vlaneseq
    %v2859 = vshrl.u32 %v2858, 7
    %v2860 = vsub.s32 0, %v2859
    %v2861 = vrot.slane %v2856, %v2860
    %v2863 = vpack.i.b16 %v2220, %v2220
    %v2865 = vlaneseq
    %v2866 = vshrl.u32 %v2865, 7
    %v2867 = vsub.s32 0, %v2866
    %v2868 = vrot.slane %v2863, %v2867
    %v2870 = vpack.i.b16 %v2224, %v2224
    %v2872 = vlaneseq
    %v2873 = vshrl.u32 %v2872, 7
    %v2874 = vsub.s32 0, %v2873
    %v2875 = vrot.slane %v2870, %v2874
    %v2877 = vpack.i.b16 %v2228, %v2228
    %v2879 = vlaneseq
    %v2880 = vshrl.u32 %v2879, 7
    %v2881 = vsub.s32 0, %v2880
    %v2882 = vrot.slane %v2877, %v2881
    %v2884 = vpack.i.b16 %v2232, %v2232
    %v2886 = vlaneseq
    %v2887 = vshrl.u32 %v2886, 7
    %v2888 = vsub.s32 0, %v2887
    %v2889 = vrot.slane %v2884, %v2888
    %v2891 = vpack.i.b16 %v2236, %v2236
    %v2893 = vlaneseq
    %v2894 = vshrl.u32 %v2893, 7
    %v2895 = vsub.s32 0, %v2894
    %v2896 = vrot.slane %v2891, %v2895
    %v2898 = vpack.i.b16 %v2240, %v2240
    %v2900 = vlaneseq
    %v2901 = vshrl.u32 %v2900, 7
    %v2902 = vsub.s32 0, %v2901
    %v2903 = vrot.slane %v2898, %v2902
    %v2905 = vpack.i.b16 %v2244, %v2244
    %v2907 = vlaneseq
    %v2908 = vshrl.u32 %v2907, 7
    %v2909 = vsub.s32 0, %v2908
    %v2910 = vrot.slane %v2905, %v2909
    %v2912 = vpack.i.b16 %v2248, %v2248
    %v2914 = vlaneseq
    %v2915 = vshrl.u32 %v2914, 7
    %v2916 = vsub.s32 0, %v2915
    %v2917 = vrot.slane %v2912, %v2916
    %v2919 = vpack.i.b16 %v2252, %v2252
    %v2921 = vlaneseq
    %v2922 = vshrl.u32 %v2921, 7
    %v2923 = vsub.s32 0, %v2922
    %v2924 = vrot.slane %v2919, %v2923
    %v2925 = vpack.c.b16 %v1841, %v1841
    %v2926 = vpack.c.b16 %v1842, %v1842
    %v2927 = vpack.c.b16 %v1843, %v1843
    %v2928 = vpack.c.b16 %v1844, %v1844
    %v2929 = vpack.c.b16 %v1845, %v1845
    %v2930 = vpack.c.b16 %v1846, %v1846
    %v2931 = vpack.c.b16 %v1847, %v1847
    %v2932 = vpack.c.b16 %v1848, %v1848
    %v2933 = vpack.c.b16 %v1849, %v1849
    %v2934 = vpack.c.b16 %v1850, %v1850
    %v2935 = vpack.c.b16 %v1851, %v1851
    %v2936 = vpack.c.b16 %v1852, %v1852
    %v2949 = vmul.bf16 %v2259, %v2925
    %v2950 = vmul.bf16 %v2266, %v2926
    %v2951 = vmul.bf16 %v2273, %v2927
    %v2952 = vmul.bf16 %v2280, %v2928
    %v2953 = vmul.bf16 %v2287, %v2929
    %v2954 = vmul.bf16 %v2294, %v2930
    %v2955 = vmul.bf16 %v2301, %v2925
    %v2956 = vmul.bf16 %v2308, %v2926
    %v2957 = vmul.bf16 %v2315, %v2927
    %v2958 = vmul.bf16 %v2322, %v2928
    %v2959 = vmul.bf16 %v2329, %v2929
    %v2960 = vmul.bf16 %v2336, %v2930
    %v2961 = vmul.bf16 %v2343, %v2925
    %v2962 = vmul.bf16 %v2350, %v2926
    %v2963 = vmul.bf16 %v2357, %v2927
    %v2964 = vmul.bf16 %v2364, %v2928
    %v2965 = vmul.bf16 %v2371, %v2929
    %v2966 = vmul.bf16 %v2378, %v2930
    %v2967 = vmul.bf16 %v2385, %v2925
    %v2968 = vmul.bf16 %v2392, %v2926
    %v2969 = vmul.bf16 %v2399, %v2927
    %v2970 = vmul.bf16 %v2406, %v2928
    %v2971 = vmul.bf16 %v2413, %v2929
    %v2972 = vmul.bf16 %v2420, %v2930
    %v2973 = vmul.bf16 %v2427, %v2925
    %v2974 = vmul.bf16 %v2434, %v2926
    %v2975 = vmul.bf16 %v2441, %v2927
    %v2976 = vmul.bf16 %v2448, %v2928
    %v2977 = vmul.bf16 %v2455, %v2929
    %v2978 = vmul.bf16 %v2462, %v2930
    %v2979 = vmul.bf16 %v2469, %v2925
    %v2980 = vmul.bf16 %v2476, %v2926
    %v2981 = vmul.bf16 %v2483, %v2927
    %v2982 = vmul.bf16 %v2490, %v2928
    %v2983 = vmul.bf16 %v2497, %v2929
    %v2984 = vmul.bf16 %v2504, %v2930
    %v2985 = vmul.bf16 %v2511, %v2925
    %v2986 = vmul.bf16 %v2518, %v2926
    %v2987 = vmul.bf16 %v2525, %v2927
    %v2988 = vmul.bf16 %v2532, %v2928
    %v2989 = vmul.bf16 %v2539, %v2929
    %v2990 = vmul.bf16 %v2546, %v2930
    %v2991 = vmul.bf16 %v2553, %v2925
    %v2992 = vmul.bf16 %v2560, %v2926
    %v2993 = vmul.bf16 %v2567, %v2927
    %v2994 = vmul.bf16 %v2574, %v2928
    %v2995 = vmul.bf16 %v2581, %v2929
    %v2996 = vmul.bf16 %v2588, %v2930
    %v2997 = vmul.bf16 %v2595, %v2931
    %v2998 = vmul.bf16 %v2602, %v2932
    %v2999 = vmul.bf16 %v2609, %v2933
    %v3000 = vmul.bf16 %v2616, %v2934
    %v3001 = vmul.bf16 %v2623, %v2935
    %v3002 = vmul.bf16 %v2630, %v2936
    %v3003 = vmul.bf16 %v2637, %v2931
    %v3004 = vmul.bf16 %v2644, %v2932
    %v3005 = vmul.bf16 %v2651, %v2933
    %v3006 = vmul.bf16 %v2658, %v2934
    %v3007 = vmul.bf16 %v2665, %v2935
    %v3008 = vmul.bf16 %v2672, %v2936
    %v3009 = vmul.bf16 %v2679, %v2931
    %v3010 = vmul.bf16 %v2686, %v2932
    %v3011 = vmul.bf16 %v2693, %v2933
    %v3012 = vmul.bf16 %v2700, %v2934
    %v3013 = vmul.bf16 %v2707, %v2935
    %v3014 = vmul.bf16 %v2714, %v2936
    %v3015 = vmul.bf16 %v2721, %v2931
    %v3016 = vmul.bf16 %v2728, %v2932
    %v3017 = vmul.bf16 %v2735, %v2933
    %v3018 = vmul.bf16 %v2742, %v2934
    %v3019 = vmul.bf16 %v2749, %v2935
    %v3020 = vmul.bf16 %v2756, %v2936
    %v3021 = vmul.bf16 %v2763, %v2931
    %v3022 = vmul.bf16 %v2770, %v2932
    %v3023 = vmul.bf16 %v2777, %v2933
    %v3024 = vmul.bf16 %v2784, %v2934
    %v3025 = vmul.bf16 %v2791, %v2935
    %v3026 = vmul.bf16 %v2798, %v2936
    %v3027 = vmul.bf16 %v2805, %v2931
    %v3028 = vmul.bf16 %v2812, %v2932
    %v3029 = vmul.bf16 %v2819, %v2933
    %v3030 = vmul.bf16 %v2826, %v2934
    %v3031 = vmul.bf16 %v2833, %v2935
    %v3032 = vmul.bf16 %v2840, %v2936
    %v3033 = vmul.bf16 %v2847, %v2931
    %v3034 = vmul.bf16 %v2854, %v2932
    %v3035 = vmul.bf16 %v2861, %v2933
    %v3036 = vmul.bf16 %v2868, %v2934
    %v3037 = vmul.bf16 %v2875, %v2935
    %v3038 = vmul.bf16 %v2882, %v2936
    %v3039 = vmul.bf16 %v2889, %v2931
    %v3040 = vmul.bf16 %v2896, %v2932
    %v3041 = vmul.bf16 %v2903, %v2933
    %v3042 = vmul.bf16 %v2910, %v2934
    %v3043 = vmul.bf16 %v2917, %v2935
    %v3044 = vmul.bf16 %v2924, %v2936
    %v3141 = vunpack.c.l.b16 %v2949
    %v3142 = vunpack.c.l.b16 %v2950
    %v3143 = vunpack.c.l.b16 %v2951
    %v3144 = vunpack.c.l.b16 %v2952
    %v3145 = vunpack.c.l.b16 %v2953
    %v3146 = vunpack.c.l.b16 %v2954
    %v3147 = vunpack.c.l.b16 %v2955
    %v3148 = vunpack.c.l.b16 %v2956
    %v3149 = vunpack.c.l.b16 %v2957
    %v3150 = vunpack.c.l.b16 %v2958
    %v3151 = vunpack.c.l.b16 %v2959
    %v3152 = vunpack.c.l.b16 %v2960
    %v3153 = vunpack.c.l.b16 %v2961
    %v3154 = vunpack.c.l.b16 %v2962
    %v3155 = vunpack.c.l.b16 %v2963
    %v3156 = vunpack.c.l.b16 %v2964
    %v3157 = vunpack.c.l.b16 %v2965
    %v3158 = vunpack.c.l.b16 %v2966
    %v3159 = vunpack.c.l.b16 %v2967
    %v3160 = vunpack.c.l.b16 %v2968
    %v3161 = vunpack.c.l.b16 %v2969
    %v3162 = vunpack.c.l.b16 %v2970
    %v3163 = vunpack.c.l.b16 %v2971
    %v3164 = vunpack.c.l.b16 %v2972
    %v3165 = vunpack.c.l.b16 %v2973
    %v3166 = vunpack.c.l.b16 %v2974
    %v3167 = vunpack.c.l.b16 %v2975
    %v3168 = vunpack.c.l.b16 %v2976
    %v3169 = vunpack.c.l.b16 %v2977
    %v3170 = vunpack.c.l.b16 %v2978
    %v3171 = vunpack.c.l.b16 %v2979
    %v3172 = vunpack.c.l.b16 %v2980
    %v3173 = vunpack.c.l.b16 %v2981
    %v3174 = vunpack.c.l.b16 %v2982
    %v3175 = vunpack.c.l.b16 %v2983
    %v3176 = vunpack.c.l.b16 %v2984
    %v3177 = vunpack.c.l.b16 %v2985
    %v3178 = vunpack.c.l.b16 %v2986
    %v3179 = vunpack.c.l.b16 %v2987
    %v3180 = vunpack.c.l.b16 %v2988
    %v3181 = vunpack.c.l.b16 %v2989
    %v3182 = vunpack.c.l.b16 %v2990
    %v3183 = vunpack.c.l.b16 %v2991
    %v3184 = vunpack.c.l.b16 %v2992
    %v3185 = vunpack.c.l.b16 %v2993
    %v3186 = vunpack.c.l.b16 %v2994
    %v3187 = vunpack.c.l.b16 %v2995
    %v3188 = vunpack.c.l.b16 %v2996
    %v3189 = vunpack.c.l.b16 %v2997
    %v3190 = vunpack.c.l.b16 %v2998
    %v3191 = vunpack.c.l.b16 %v2999
    %v3192 = vunpack.c.l.b16 %v3000
    %v3193 = vunpack.c.l.b16 %v3001
    %v3194 = vunpack.c.l.b16 %v3002
    %v3195 = vunpack.c.l.b16 %v3003
    %v3196 = vunpack.c.l.b16 %v3004
    %v3197 = vunpack.c.l.b16 %v3005
    %v3198 = vunpack.c.l.b16 %v3006
    %v3199 = vunpack.c.l.b16 %v3007
    %v3200 = vunpack.c.l.b16 %v3008
    %v3201 = vunpack.c.l.b16 %v3009
    %v3202 = vunpack.c.l.b16 %v3010
    %v3203 = vunpack.c.l.b16 %v3011
    %v3204 = vunpack.c.l.b16 %v3012
    %v3205 = vunpack.c.l.b16 %v3013
    %v3206 = vunpack.c.l.b16 %v3014
    %v3207 = vunpack.c.l.b16 %v3015
    %v3208 = vunpack.c.l.b16 %v3016
    %v3209 = vunpack.c.l.b16 %v3017
    %v3210 = vunpack.c.l.b16 %v3018
    %v3211 = vunpack.c.l.b16 %v3019
    %v3212 = vunpack.c.l.b16 %v3020
    %v3213 = vunpack.c.l.b16 %v3021
    %v3214 = vunpack.c.l.b16 %v3022
    %v3215 = vunpack.c.l.b16 %v3023
    %v3216 = vunpack.c.l.b16 %v3024
    %v3217 = vunpack.c.l.b16 %v3025
    %v3218 = vunpack.c.l.b16 %v3026
    %v3219 = vunpack.c.l.b16 %v3027
    %v3220 = vunpack.c.l.b16 %v3028
    %v3221 = vunpack.c.l.b16 %v3029
    %v3222 = vunpack.c.l.b16 %v3030
    %v3223 = vunpack.c.l.b16 %v3031
    %v3224 = vunpack.c.l.b16 %v3032
    %v3225 = vunpack.c.l.b16 %v3033
    %v3226 = vunpack.c.l.b16 %v3034
    %v3227 = vunpack.c.l.b16 %v3035
    %v3228 = vunpack.c.l.b16 %v3036
    %v3229 = vunpack.c.l.b16 %v3037
    %v3230 = vunpack.c.l.b16 %v3038
    %v3231 = vunpack.c.l.b16 %v3039
    %v3232 = vunpack.c.l.b16 %v3040
    %v3233 = vunpack.c.l.b16 %v3041
    %v3234 = vunpack.c.l.b16 %v3042
    %v3235 = vunpack.c.l.b16 %v3043
    %v3236 = vunpack.c.l.b16 %v3044
    %v3237 = vld [vmem:[#allocation9] sm:$0xf]
    %v3238 = vld [vmem:[#allocation9 + $0x4] sm:$0xf]
    %v3239 = vld [vmem:[#allocation9 + $0x8] sm:$0xf]
    %v3240 = vld [vmem:[#allocation9 + $0xc] sm:$0xf]
    %v3241 = vld [vmem:[#allocation9 + $0x10] sm:$0xf]
    %v3242 = vld [vmem:[#allocation9 + $0x14] sm:$0xf]
    %v3243 = vld [vmem:[#allocation9 + $0x18] sm:$0xf]
    %v3244 = vld [vmem:[#allocation9 + $0x1c] sm:$0xf]
    %v3245 = vld [vmem:[#allocation9 + $0x20] sm:$0xf]
    %v3246 = vld [vmem:[#allocation9 + $0x24] sm:$0xf]
    %v3247 = vld [vmem:[#allocation9 + $0x28] sm:$0xf]
    %v3248 = vld [vmem:[#allocation9 + $0x2c] sm:$0xf]
    %v3249 = vld [vmem:[#allocation9 + $0x30] sm:$0xf]
    %v3250 = vld [vmem:[#allocation9 + $0x34] sm:$0xf]
    %v3251 = vld [vmem:[#allocation9 + $0x38] sm:$0xf]
    %v3252 = vld [vmem:[#allocation9 + $0x3c] sm:$0xf]
    %v3253 = vld [vmem:[#allocation9 + $0x40] sm:$0xf]
    %v3254 = vld [vmem:[#allocation9 + $0x44] sm:$0xf]
    %v3255 = vld [vmem:[#allocation9 + $0x48] sm:$0xf]
    %v3256 = vld [vmem:[#allocation9 + $0x4c] sm:$0xf]
    %v3257 = vld [vmem:[#allocation9 + $0x50] sm:$0xf]
    %v3258 = vld [vmem:[#allocation9 + $0x54] sm:$0xf]
    %v3259 = vld [vmem:[#allocation9 + $0x58] sm:$0xf]
    %v3260 = vld [vmem:[#allocation9 + $0x5c] sm:$0xf]
    %v3261 = vld [vmem:[#allocation9 + $0x60] sm:$0xf]
    %v3262 = vld [vmem:[#allocation9 + $0x64] sm:$0xf]
    %v3263 = vld [vmem:[#allocation9 + $0x68] sm:$0xf]
    %v3264 = vld [vmem:[#allocation9 + $0x6c] sm:$0xf]
    %v3265 = vld [vmem:[#allocation9 + $0x70] sm:$0xf]
    %v3266 = vld [vmem:[#allocation9 + $0x74] sm:$0xf]
    %v3267 = vld [vmem:[#allocation9 + $0x78] sm:$0xf]
    %v3268 = vld [vmem:[#allocation9 + $0x7c] sm:$0xf]
    %v3269 = vld [vmem:[#allocation9 + $0x80] sm:$0xf]
    %v3270 = vld [vmem:[#allocation9 + $0x84] sm:$0xf]
    %v3271 = vld [vmem:[#allocation9 + $0x88] sm:$0xf]
    %v3272 = vld [vmem:[#allocation9 + $0x8c] sm:$0xf]
    %v3273 = vld [vmem:[#allocation9 + $0x90] sm:$0xf]
    %v3274 = vld [vmem:[#allocation9 + $0x94] sm:$0xf]
    %v3275 = vld [vmem:[#allocation9 + $0x98] sm:$0xf]
    %v3276 = vld [vmem:[#allocation9 + $0x9c] sm:$0xf]
    %v3277 = vld [vmem:[#allocation9 + $0xa0] sm:$0xf]
    %v3278 = vld [vmem:[#allocation9 + $0xa4] sm:$0xf]
    %v3279 = vld [vmem:[#allocation9 + $0xa8] sm:$0xf]
    %v3280 = vld [vmem:[#allocation9 + $0xac] sm:$0xf]
    %v3281 = vld [vmem:[#allocation9 + $0xb0] sm:$0xf]
    %v3282 = vld [vmem:[#allocation9 + $0xb4] sm:$0xf]
    %v3283 = vld [vmem:[#allocation9 + $0xb8] sm:$0xf]
    %v3284 = vld [vmem:[#allocation9 + $0xbc] sm:$0xf]
    %v3285 = vld [vmem:[#allocation9 + $0xc0] sm:$0xf]
    %v3286 = vld [vmem:[#allocation9 + $0xc4] sm:$0xf]
    %v3287 = vld [vmem:[#allocation9 + $0xc8] sm:$0xf]
    %v3288 = vld [vmem:[#allocation9 + $0xcc] sm:$0xf]
    %v3289 = vld [vmem:[#allocation9 + $0xd0] sm:$0xf]
    %v3290 = vld [vmem:[#allocation9 + $0xd4] sm:$0xf]
    %v3291 = vld [vmem:[#allocation9 + $0xd8] sm:$0xf]
    %v3292 = vld [vmem:[#allocation9 + $0xdc] sm:$0xf]
    %v3293 = vld [vmem:[#allocation9 + $0xe0] sm:$0xf]
    %v3294 = vld [vmem:[#allocation9 + $0xe4] sm:$0xf]
    %v3295 = vld [vmem:[#allocation9 + $0xe8] sm:$0xf]
    %v3296 = vld [vmem:[#allocation9 + $0xec] sm:$0xf]
    %v3297 = vld [vmem:[#allocation9 + $0xf0] sm:$0xf]
    %v3298 = vld [vmem:[#allocation9 + $0xf4] sm:$0xf]
    %v3299 = vld [vmem:[#allocation9 + $0xf8] sm:$0xf]
    %v3300 = vld [vmem:[#allocation9 + $0xfc] sm:$0xf]
    %v3301 = vld [vmem:[#allocation9 + $0x100] sm:$0xf]
    %v3302 = vld [vmem:[#allocation9 + $0x104] sm:$0xf]
    %v3303 = vld [vmem:[#allocation9 + $0x108] sm:$0xf]
    %v3304 = vld [vmem:[#allocation9 + $0x10c] sm:$0xf]
    %v3305 = vld [vmem:[#allocation9 + $0x110] sm:$0xf]
    %v3306 = vld [vmem:[#allocation9 + $0x114] sm:$0xf]
    %v3307 = vld [vmem:[#allocation9 + $0x118] sm:$0xf]
    %v3308 = vld [vmem:[#allocation9 + $0x11c] sm:$0xf]
    %v3309 = vld [vmem:[#allocation9 + $0x120] sm:$0xf]
    %v3310 = vld [vmem:[#allocation9 + $0x124] sm:$0xf]
    %v3311 = vld [vmem:[#allocation9 + $0x128] sm:$0xf]
    %v3312 = vld [vmem:[#allocation9 + $0x12c] sm:$0xf]
    %v3313 = vld [vmem:[#allocation9 + $0x130] sm:$0xf]
    %v3314 = vld [vmem:[#allocation9 + $0x134] sm:$0xf]
    %v3315 = vld [vmem:[#allocation9 + $0x138] sm:$0xf]
    %v3316 = vld [vmem:[#allocation9 + $0x13c] sm:$0xf]
    %v3317 = vld [vmem:[#allocation9 + $0x140] sm:$0xf]
    %v3318 = vld [vmem:[#allocation9 + $0x144] sm:$0xf]
    %v3319 = vld [vmem:[#allocation9 + $0x148] sm:$0xf]
    %v3320 = vld [vmem:[#allocation9 + $0x14c] sm:$0xf]
    %v3321 = vld [vmem:[#allocation9 + $0x150] sm:$0xf]
    %v3322 = vld [vmem:[#allocation9 + $0x154] sm:$0xf]
    %v3323 = vld [vmem:[#allocation9 + $0x158] sm:$0xf]
    %v3324 = vld [vmem:[#allocation9 + $0x15c] sm:$0xf]
    %v3325 = vld [vmem:[#allocation9 + $0x160] sm:$0xf]
    %v3326 = vld [vmem:[#allocation9 + $0x164] sm:$0xf]
    %v3327 = vld [vmem:[#allocation9 + $0x168] sm:$0xf]
    %v3328 = vld [vmem:[#allocation9 + $0x16c] sm:$0xf]
    %v3329 = vld [vmem:[#allocation9 + $0x170] sm:$0xf]
    %v3330 = vld [vmem:[#allocation9 + $0x174] sm:$0xf]
    %v3331 = vld [vmem:[#allocation9 + $0x178] sm:$0xf]
    %v3332 = vld [vmem:[#allocation9 + $0x17c] sm:$0xf]
    %v3333 = vpack.c.b16 %v3147, %v3141
    %v3334 = vpack.c.b16 %v3148, %v3142
    %v3335 = vpack.c.b16 %v3149, %v3143
    %v3336 = vpack.c.b16 %v3150, %v3144
    %v3337 = vpack.c.b16 %v3151, %v3145
    %v3338 = vpack.c.b16 %v3152, %v3146
    %v3339 = vpack.c.b16 %v3159, %v3153
    %v3340 = vpack.c.b16 %v3160, %v3154
    %v3341 = vpack.c.b16 %v3161, %v3155
    %v3342 = vpack.c.b16 %v3162, %v3156
    %v3343 = vpack.c.b16 %v3163, %v3157
    %v3344 = vpack.c.b16 %v3164, %v3158
    %v3345 = vpack.c.b16 %v3171, %v3165
    %v3346 = vpack.c.b16 %v3172, %v3166
    %v3347 = vpack.c.b16 %v3173, %v3167
    %v3348 = vpack.c.b16 %v3174, %v3168
    %v3349 = vpack.c.b16 %v3175, %v3169
    %v3350 = vpack.c.b16 %v3176, %v3170
    %v3351 = vpack.c.b16 %v3183, %v3177
    %v3352 = vpack.c.b16 %v3184, %v3178
    %v3353 = vpack.c.b16 %v3185, %v3179
    %v3354 = vpack.c.b16 %v3186, %v3180
    %v3355 = vpack.c.b16 %v3187, %v3181
    %v3356 = vpack.c.b16 %v3188, %v3182
    %v3357 = vpack.c.b16 %v3195, %v3189
    %v3358 = vpack.c.b16 %v3196, %v3190
    %v3359 = vpack.c.b16 %v3197, %v3191
    %v3360 = vpack.c.b16 %v3198, %v3192
    %v3361 = vpack.c.b16 %v3199, %v3193
    %v3362 = vpack.c.b16 %v3200, %v3194
    %v3363 = vpack.c.b16 %v3207, %v3201
    %v3364 = vpack.c.b16 %v3208, %v3202
    %v3365 = vpack.c.b16 %v3209, %v3203
    %v3366 = vpack.c.b16 %v3210, %v3204
    %v3367 = vpack.c.b16 %v3211, %v3205
    %v3368 = vpack.c.b16 %v3212, %v3206
    %v3369 = vpack.c.b16 %v3219, %v3213
    %v3370 = vpack.c.b16 %v3220, %v3214
    %v3371 = vpack.c.b16 %v3221, %v3215
    %v3372 = vpack.c.b16 %v3222, %v3216
    %v3373 = vpack.c.b16 %v3223, %v3217
    %v3374 = vpack.c.b16 %v3224, %v3218
    %v3375 = vpack.c.b16 %v3231, %v3225
    %v3376 = vpack.c.b16 %v3232, %v3226
    %v3377 = vpack.c.b16 %v3233, %v3227
    %v3378 = vpack.c.b16 %v3234, %v3228
    %v3379 = vpack.c.b16 %v3235, %v3229
    %v3380 = vpack.c.b16 %v3236, %v3230
    %v3525 = vunpack.c.l.b16 %v3237
    %v3526 = vunpack.c.l.b16 %v3238
    %v3527 = vunpack.c.l.b16 %v3239
    %v3528 = vunpack.c.l.b16 %v3240
    %v3529 = vunpack.c.l.b16 %v3241
    %v3530 = vunpack.c.l.b16 %v3242
    %v3531 = vunpack.c.l.b16 %v3243
    %v3532 = vunpack.c.l.b16 %v3244
    %v3533 = vunpack.c.l.b16 %v3245
    %v3534 = vunpack.c.l.b16 %v3246
    %v3535 = vunpack.c.l.b16 %v3247
    %v3536 = vunpack.c.l.b16 %v3248
    %v3537 = vunpack.c.l.b16 %v3249
    %v3538 = vunpack.c.l.b16 %v3250
    %v3539 = vunpack.c.l.b16 %v3251
    %v3540 = vunpack.c.l.b16 %v3252
    %v3541 = vunpack.c.l.b16 %v3253
    %v3542 = vunpack.c.l.b16 %v3254
    %v3543 = vunpack.c.l.b16 %v3255
    %v3544 = vunpack.c.l.b16 %v3256
    %v3545 = vunpack.c.l.b16 %v3257
    %v3546 = vunpack.c.l.b16 %v3258
    %v3547 = vunpack.c.l.b16 %v3259
    %v3548 = vunpack.c.l.b16 %v3260
    %v3549 = vunpack.c.l.b16 %v3261
    %v3550 = vunpack.c.l.b16 %v3262
    %v3551 = vunpack.c.l.b16 %v3263
    %v3552 = vunpack.c.l.b16 %v3264
    %v3553 = vunpack.c.l.b16 %v3265
    %v3554 = vunpack.c.l.b16 %v3266
    %v3555 = vunpack.c.l.b16 %v3267
    %v3556 = vunpack.c.l.b16 %v3268
    %v3557 = vunpack.c.l.b16 %v3269
    %v3558 = vunpack.c.l.b16 %v3270
    %v3559 = vunpack.c.l.b16 %v3271
    %v3560 = vunpack.c.l.b16 %v3272
    %v3561 = vunpack.c.l.b16 %v3273
    %v3562 = vunpack.c.l.b16 %v3274
    %v3563 = vunpack.c.l.b16 %v3275
    %v3564 = vunpack.c.l.b16 %v3276
    %v3565 = vunpack.c.l.b16 %v3277
    %v3566 = vunpack.c.l.b16 %v3278
    %v3567 = vunpack.c.l.b16 %v3279
    %v3568 = vunpack.c.l.b16 %v3280
    %v3569 = vunpack.c.l.b16 %v3281
    %v3570 = vunpack.c.l.b16 %v3282
    %v3571 = vunpack.c.l.b16 %v3283
    %v3572 = vunpack.c.l.b16 %v3284
    %v3573 = vunpack.c.l.b16 %v3285
    %v3574 = vunpack.c.l.b16 %v3286
    %v3575 = vunpack.c.l.b16 %v3287
    %v3576 = vunpack.c.l.b16 %v3288
    %v3577 = vunpack.c.l.b16 %v3289
    %v3578 = vunpack.c.l.b16 %v3290
    %v3579 = vunpack.c.l.b16 %v3291
    %v3580 = vunpack.c.l.b16 %v3292
    %v3581 = vunpack.c.l.b16 %v3293
    %v3582 = vunpack.c.l.b16 %v3294
    %v3583 = vunpack.c.l.b16 %v3295
    %v3584 = vunpack.c.l.b16 %v3296
    %v3585 = vunpack.c.l.b16 %v3297
    %v3586 = vunpack.c.l.b16 %v3298
    %v3587 = vunpack.c.l.b16 %v3299
    %v3588 = vunpack.c.l.b16 %v3300
    %v3589 = vunpack.c.l.b16 %v3301
    %v3590 = vunpack.c.l.b16 %v3302
    %v3591 = vunpack.c.l.b16 %v3303
    %v3592 = vunpack.c.l.b16 %v3304
    %v3593 = vunpack.c.l.b16 %v3305
    %v3594 = vunpack.c.l.b16 %v3306
    %v3595 = vunpack.c.l.b16 %v3307
    %v3596 = vunpack.c.l.b16 %v3308
    %v3597 = vunpack.c.l.b16 %v3309
    %v3598 = vunpack.c.l.b16 %v3310
    %v3599 = vunpack.c.l.b16 %v3311
    %v3600 = vunpack.c.l.b16 %v3312
    %v3601 = vunpack.c.l.b16 %v3313
    %v3602 = vunpack.c.l.b16 %v3314
    %v3603 = vunpack.c.l.b16 %v3315
    %v3604 = vunpack.c.l.b16 %v3316
    %v3605 = vunpack.c.l.b16 %v3317
    %v3606 = vunpack.c.l.b16 %v3318
    %v3607 = vunpack.c.l.b16 %v3319
    %v3608 = vunpack.c.l.b16 %v3320
    %v3609 = vunpack.c.l.b16 %v3321
    %v3610 = vunpack.c.l.b16 %v3322
    %v3611 = vunpack.c.l.b16 %v3323
    %v3612 = vunpack.c.l.b16 %v3324
    %v3613 = vunpack.c.l.b16 %v3325
    %v3614 = vunpack.c.l.b16 %v3326
    %v3615 = vunpack.c.l.b16 %v3327
    %v3616 = vunpack.c.l.b16 %v3328
    %v3617 = vunpack.c.l.b16 %v3329
    %v3618 = vunpack.c.l.b16 %v3330
    %v3619 = vunpack.c.l.b16 %v3331
    %v3620 = vunpack.c.l.b16 %v3332
    %v3621 = vpack.c.b16 %v3526, %v3525
    %v3622 = vpack.c.b16 %v3528, %v3527
    %v3623 = vpack.c.b16 %v3530, %v3529
    %v3624 = vpack.c.b16 %v3532, %v3531
    %v3625 = vpack.c.b16 %v3534, %v3533
    %v3626 = vpack.c.b16 %v3536, %v3535
    %v3627 = vpack.c.b16 %v3538, %v3537
    %v3628 = vpack.c.b16 %v3540, %v3539
    %v3629 = vpack.c.b16 %v3542, %v3541
    %v3630 = vpack.c.b16 %v3544, %v3543
    %v3631 = vpack.c.b16 %v3546, %v3545
    %v3632 = vpack.c.b16 %v3548, %v3547
    %v3633 = vpack.c.b16 %v3550, %v3549
    %v3634 = vpack.c.b16 %v3552, %v3551
    %v3635 = vpack.c.b16 %v3554, %v3553
    %v3636 = vpack.c.b16 %v3556, %v3555
    %v3637 = vpack.c.b16 %v3558, %v3557
    %v3638 = vpack.c.b16 %v3560, %v3559
    %v3639 = vpack.c.b16 %v3562, %v3561
    %v3640 = vpack.c.b16 %v3564, %v3563
    %v3641 = vpack.c.b16 %v3566, %v3565
    %v3642 = vpack.c.b16 %v3568, %v3567
    %v3643 = vpack.c.b16 %v3570, %v3569
    %v3644 = vpack.c.b16 %v3572, %v3571
    %v3645 = vpack.c.b16 %v3574, %v3573
    %v3646 = vpack.c.b16 %v3576, %v3575
    %v3647 = vpack.c.b16 %v3578, %v3577
    %v3648 = vpack.c.b16 %v3580, %v3579
    %v3649 = vpack.c.b16 %v3582, %v3581
    %v3650 = vpack.c.b16 %v3584, %v3583
    %v3651 = vpack.c.b16 %v3586, %v3585
    %v3652 = vpack.c.b16 %v3588, %v3587
    %v3653 = vpack.c.b16 %v3590, %v3589
    %v3654 = vpack.c.b16 %v3592, %v3591
    %v3655 = vpack.c.b16 %v3594, %v3593
    %v3656 = vpack.c.b16 %v3596, %v3595
    %v3657 = vpack.c.b16 %v3598, %v3597
    %v3658 = vpack.c.b16 %v3600, %v3599
    %v3659 = vpack.c.b16 %v3602, %v3601
    %v3660 = vpack.c.b16 %v3604, %v3603
    %v3661 = vpack.c.b16 %v3606, %v3605
    %v3662 = vpack.c.b16 %v3608, %v3607
    %v3663 = vpack.c.b16 %v3610, %v3609
    %v3664 = vpack.c.b16 %v3612, %v3611
    %v3665 = vpack.c.b16 %v3614, %v3613
    %v3666 = vpack.c.b16 %v3616, %v3615
    %v3667 = vpack.c.b16 %v3618, %v3617
    %v3668 = vpack.c.b16 %v3620, %v3619
    %3717 = vmatprep.subr.bf16.mxu0 0
    %3718 = vmatpush1.bf16.msra.mxu0 %v3621
    %3719 = vmatprep.subr.bf16.mxu0 0
    %3720 = vmatpush1.bf16.msra.mxu0 %v3622
    %3721 = vmatprep.subr.bf16.mxu0 0
    %3722 = vmatpush1.bf16.msra.mxu0 %v3623
    %3723 = vmatprep.subr.bf16.mxu0 0
    %3724 = vmatpush1.bf16.msra.mxu0 %v3624
    %3725 = vmatprep.subr.bf16.mxu0 0
    %3726 = vmatpush1.bf16.msra.mxu0 %v3625
    %3727 = vmatprep.subr.bf16.mxu0 0
    %3728 = vmatpush1.bf16.msra.mxu0 %v3626
    %3729 = vmatprep.subr.bf16.mxu0 0
    %3730 = vmatpush1.bf16.msra.mxu0 %v3627
    %3731 = vmatprep.subr.bf16.mxu0 0
    %3732 = vmatpush1.bf16.msra.mxu0 %v3628
    %3733 = vmatprep.subr.bf16.mxu0 0
    %3734 = vmatpush1.bf16.msra.mxu0 %v3629
    %3735 = vmatprep.subr.bf16.mxu0 0
    %3736 = vmatpush1.bf16.msra.mxu0 %v3630
    %3737 = vmatprep.subr.bf16.mxu0 0
    %3738 = vmatpush1.bf16.msra.mxu0 %v3631
    %3739 = vmatprep.subr.bf16.mxu0 0
    %3740 = vmatpush1.bf16.msra.mxu0 %v3632
    %3741 = vmatprep.subr.bf16.mxu0 0
    %3742 = vmatpush1.bf16.msra.mxu0 %v3633
    %3743 = vmatprep.subr.bf16.mxu0 0
    %3744 = vmatpush1.bf16.msra.mxu0 %v3634
    %3745 = vmatprep.subr.bf16.mxu0 0
    %3746 = vmatpush1.bf16.msra.mxu0 %v3635
    %3747 = vmatprep.subr.bf16.mxu0 0
    %3748 = vmatpush1.bf16.msra.mxu0 %v3636
    %3749 = vmatprep.mubr.bf16.mxu0 %v3334
    %3750 = vmatmul.mubr.bf16.gmra.mrb[0].mxu0 %v3333
    %v3751 = vpop.f32.mrb[0].mxu0
    %v3752 = vadd.f32 0.0, %v3751
    %v3753 = vpop.f32.mrb[0].mxu0
    %v3754 = vpop.f32.mrb[0].mxu0
    %v3755 = vadd.f32 0.0, %v3754
    %v3756 = vpop.f32.mrb[0].mxu0
    %3757 = vmatprep.mubr.bf16.mxu0 %v3340
    %3758 = vmatmul.mubr.bf16.gmra.mrb[0].mxu0 %v3339
    %v3759 = vpop.f32.mrb[0].mxu0
    %v3760 = vadd.f32 0.0, %v3759
    %v3761 = vpop.f32.mrb[0].mxu0
    %v3762 = vpop.f32.mrb[0].mxu0
    %v3763 = vadd.f32 0.0, %v3762
    %v3764 = vpop.f32.mrb[0].mxu0
    %3765 = vmatprep.mubr.bf16.mxu0 %v3346
    %3766 = vmatmul.mubr.bf16.gmra.mrb[0].mxu0 %v3345
    %v3767 = vpop.f32.mrb[0].mxu0
    %v3768 = vadd.f32 0.0, %v3767
    %v3769 = vpop.f32.mrb[0].mxu0
    %v3770 = vpop.f32.mrb[0].mxu0
    %v3771 = vadd.f32 0.0, %v3770
    %v3772 = vpop.f32.mrb[0].mxu0
    %3773 = vmatprep.mubr.bf16.mxu0 %v3352
    %3774 = vmatmul.mubr.bf16.gmra.mrb[0].mxu0 %v3351
    %v3775 = vpop.f32.mrb[0].mxu0
    %v3776 = vadd.f32 0.0, %v3775
    %v3777 = vpop.f32.mrb[0].mxu0
    %v3778 = vpop.f32.mrb[0].mxu0
    %v3779 = vadd.f32 0.0, %v3778
    %v3780 = vpop.f32.mrb[0].mxu0
    %3781 = vmatprep.mubr.bf16.mxu0 %v3358
    %3782 = vmatmul.mubr.bf16.gmra.mrb[0].mxu0 %v3357
    %v3783 = vpop.f32.mrb[0].mxu0
    %v3784 = vadd.f32 0.0, %v3783
    %v3785 = vpop.f32.mrb[0].mxu0
    %v3786 = vpop.f32.mrb[0].mxu0
    %v3787 = vadd.f32 0.0, %v3786
    %v3788 = vpop.f32.mrb[0].mxu0
    %3789 = vmatprep.mubr.bf16.mxu0 %v3364
    %3790 = vmatmul.mubr.bf16.gmra.mrb[0].mxu0 %v3363
    %v3791 = vpop.f32.mrb[0].mxu0
    %v3792 = vadd.f32 0.0, %v3791
    %v3793 = vpop.f32.mrb[0].mxu0
    %v3794 = vpop.f32.mrb[0].mxu0
    %v3795 = vadd.f32 0.0, %v3794
    %v3796 = vpop.f32.mrb[0].mxu0
    %3797 = vmatprep.mubr.bf16.mxu0 %v3370
    %3798 = vmatmul.mubr.bf16.gmra.mrb[0].mxu0 %v3369
    %v3799 = vpop.f32.mrb[0].mxu0
    %v3800 = vadd.f32 0.0, %v3799
    %v3801 = vpop.f32.mrb[0].mxu0
    %v3802 = vpop.f32.mrb[0].mxu0
    %v3803 = vadd.f32 0.0, %v3802
    %v3804 = vpop.f32.mrb[0].mxu0
    %3805 = vmatprep.mubr.bf16.mxu0 %v3376
    %3806 = vmatmul.mubr.bf16.gmra.mrb[0].mxu0 %v3375
    %v3807 = vpop.f32.mrb[0].mxu0
    %v3808 = vadd.f32 0.0, %v3807
    %v3809 = vpop.f32.mrb[0].mxu0
    %v3810 = vpop.f32.mrb[0].mxu0
    %v3811 = vadd.f32 0.0, %v3810
    %v3812 = vpop.f32.mrb[0].mxu0
    %3813 = vdwg.mxu0
    %3814 = vmatprep.subr.bf16.mxu0 0
    %3815 = vmatpush1.bf16.msra.mxu0 %v3637
    %3816 = vmatprep.subr.bf16.mxu0 0
    %3817 = vmatpush1.bf16.msra.mxu0 %v3638
    %3818 = vmatprep.subr.bf16.mxu0 0
    %3819 = vmatpush1.bf16.msra.mxu0 %v3639
    %3820 = vmatprep.subr.bf16.mxu0 0
    %3821 = vmatpush1.bf16.msra.mxu0 %v3640
    %3822 = vmatprep.subr.bf16.mxu0 0
    %3823 = vmatpush1.bf16.msra.mxu0 %v3641
    %3824 = vmatprep.subr.bf16.mxu0 0
    %3825 = vmatpush1.bf16.msra.mxu0 %v3642
    %3826 = vmatprep.subr.bf16.mxu0 0
    %3827 = vmatpush1.bf16.msra.mxu0 %v3643
    %3828 = vmatprep.subr.bf16.mxu0 0
    %3829 = vmatpush1.bf16.msra.mxu0 %v3644
    %3830 = vmatprep.subr.bf16.mxu0 0
    %3831 = vmatpush1.bf16.msra.mxu0 %v3645
    %3832 = vmatprep.subr.bf16.mxu0 0
    %3833 = vmatpush1.bf16.msra.mxu0 %v3646
    %3834 = vmatprep.subr.bf16.mxu0 0
    %3835 = vmatpush1.bf16.msra.mxu0 %v3647
    %3836 = vmatprep.subr.bf16.mxu0 0
    %3837 = vmatpush1.bf16.msra.mxu0 %v3648
    %3838 = vmatprep.subr.bf16.mxu0 0
    %3839 = vmatpush1.bf16.msra.mxu0 %v3649
    %3840 = vmatprep.subr.bf16.mxu0 0
    %3841 = vmatpush1.bf16.msra.mxu0 %v3650
    %3842 = vmatprep.subr.bf16.mxu0 0
    %3843 = vmatpush1.bf16.msra.mxu0 %v3651
    %3844 = vmatprep.subr.bf16.mxu0 0
    %3845 = vmatpush1.bf16.msra.mxu0 %v3652
    %3846 = vmatprep.mubr.bf16.mxu0 %v3336
    %3847 = vmatmul.mubr.bf16.gmra.mrb[0].mxu0 %v3335
    %v3848 = vpop.f32.mrb[0].mxu0
    %v3849 = vadd.f32 %v3752, %v3848
    %v3850 = vpop.f32.mrb[0].mxu0
    %v3851 = vpop.f32.mrb[0].mxu0
    %v3852 = vadd.f32 %v3755, %v3851
    %v3853 = vpop.f32.mrb[0].mxu0
    %3854 = vmatprep.mubr.bf16.mxu0 %v3342
    %3855 = vmatmul.mubr.bf16.gmra.mrb[0].mxu0 %v3341
    %v3856 = vpop.f32.mrb[0].mxu0
    %v3857 = vadd.f32 %v3760, %v3856
    %v3858 = vpop.f32.mrb[0].mxu0
    %v3859 = vpop.f32.mrb[0].mxu0
    %v3860 = vadd.f32 %v3763, %v3859
    %v3861 = vpop.f32.mrb[0].mxu0
    %3862 = vmatprep.mubr.bf16.mxu0 %v3348
    %3863 = vmatmul.mubr.bf16.gmra.mrb[0].mxu0 %v3347
    %v3864 = vpop.f32.mrb[0].mxu0
    %v3865 = vadd.f32 %v3768, %v3864
    %v3866 = vpop.f32.mrb[0].mxu0
    %v3867 = vpop.f32.mrb[0].mxu0
    %v3868 = vadd.f32 %v3771, %v3867
    %v3869 = vpop.f32.mrb[0].mxu0
    %3870 = vmatprep.mubr.bf16.mxu0 %v3354
    %3871 = vmatmul.mubr.bf16.gmra.mrb[0].mxu0 %v3353
    %v3872 = vpop.f32.mrb[0].mxu0
    %v3873 = vadd.f32 %v3776, %v3872
    %v3874 = vpop.f32.mrb[0].mxu0
    %v3875 = vpop.f32.mrb[0].mxu0
    %v3876 = vadd.f32 %v3779, %v3875
    %v3877 = vpop.f32.mrb[0].mxu0
    %3878 = vmatprep.mubr.bf16.mxu0 %v3360
    %3879 = vmatmul.mubr.bf16.gmra.mrb[0].mxu0 %v3359
    %v3880 = vpop.f32.mrb[0].mxu0
    %v3881 = vadd.f32 %v3784, %v3880
    %v3882 = vpop.f32.mrb[0].mxu0
    %v3883 = vpop.f32.mrb[0].mxu0
    %v3884 = vadd.f32 %v3787, %v3883
    %v3885 = vpop.f32.mrb[0].mxu0
    %3886 = vmatprep.mubr.bf16.mxu0 %v3366
    %3887 = vmatmul.mubr.bf16.gmra.mrb[0].mxu0 %v3365
    %v3888 = vpop.f32.mrb[0].mxu0
    %v3889 = vadd.f32 %v3792, %v3888
    %v3890 = vpop.f32.mrb[0].mxu0
    %v3891 = vpop.f32.mrb[0].mxu0
    %v3892 = vadd.f32 %v3795, %v3891
    %v3893 = vpop.f32.mrb[0].mxu0
    %3894 = vmatprep.mubr.bf16.mxu0 %v3372
    %3895 = vmatmul.mubr.bf16.gmra.mrb[0].mxu0 %v3371
    %v3896 = vpop.f32.mrb[0].mxu0
    %v3897 = vadd.f32 %v3800, %v3896
    %v3898 = vpop.f32.mrb[0].mxu0
    %v3899 = vpop.f32.mrb[0].mxu0
    %v3900 = vadd.f32 %v3803, %v3899
    %v3901 = vpop.f32.mrb[0].mxu0
    %3902 = vmatprep.mubr.bf16.mxu0 %v3378
    %3903 = vmatmul.mubr.bf16.gmra.mrb[0].mxu0 %v3377
    %v3904 = vpop.f32.mrb[0].mxu0
    %v3905 = vadd.f32 %v3808, %v3904
    %v3906 = vpop.f32.mrb[0].mxu0
    %v3907 = vpop.f32.mrb[0].mxu0
    %v3908 = vadd.f32 %v3811, %v3907
    %v3909 = vpop.f32.mrb[0].mxu0
    %3910 = vdwg.mxu0
    %3911 = vmatprep.subr.bf16.mxu0 0
    %3912 = vmatpush1.bf16.msra.mxu0 %v3653
    %3913 = vmatprep.subr.bf16.mxu0 0
    %3914 = vmatpush1.bf16.msra.mxu0 %v3654
    %3915 = vmatprep.subr.bf16.mxu0 0
    %3916 = vmatpush1.bf16.msra.mxu0 %v3655
    %3917 = vmatprep.subr.bf16.mxu0 0
    %3918 = vmatpush1.bf16.msra.mxu0 %v3656
    %3919 = vmatprep.subr.bf16.mxu0 0
    %3920 = vmatpush1.bf16.msra.mxu0 %v3657
    %3921 = vmatprep.subr.bf16.mxu0 0
    %3922 = vmatpush1.bf16.msra.mxu0 %v3658
    %3923 = vmatprep.subr.bf16.mxu0 0
    %3924 = vmatpush1.bf16.msra.mxu0 %v3659
    %3925 = vmatprep.subr.bf16.mxu0 0
    %3926 = vmatpush1.bf16.msra.mxu0 %v3660
    %3927 = vmatprep.subr.bf16.mxu0 0
    %3928 = vmatpush1.bf16.msra.mxu0 %v3661
    %3929 = vmatprep.subr.bf16.mxu0 0
    %3930 = vmatpush1.bf16.msra.mxu0 %v3662
    %3931 = vmatprep.subr.bf16.mxu0 0
    %3932 = vmatpush1.bf16.msra.mxu0 %v3663
    %3933 = vmatprep.subr.bf16.mxu0 0
    %3934 = vmatpush1.bf16.msra.mxu0 %v3664
    %3935 = vmatprep.subr.bf16.mxu0 0
    %3936 = vmatpush1.bf16.msra.mxu0 %v3665
    %3937 = vmatprep.subr.bf16.mxu0 0
    %3938 = vmatpush1.bf16.msra.mxu0 %v3666
    %3939 = vmatprep.subr.bf16.mxu0 0
    %3940 = vmatpush1.bf16.msra.mxu0 %v3667
    %3941 = vmatprep.subr.bf16.mxu0 0
    %3942 = vmatpush1.bf16.msra.mxu0 %v3668
    %3943 = vmatprep.mubr.bf16.mxu0 %v3338
    %3944 = vmatmul.mubr.bf16.gmra.mrb[0].mxu0 %v3337
    %v3945 = vpop.f32.mrb[0].mxu0
    %v3946 = vadd.f32 %v3849, %v3945
    %v3947 = vpop.f32.mrb[0].mxu0
    %v3948 = vpop.f32.mrb[0].mxu0
    %v3949 = vadd.f32 %v3852, %v3948
    %v3950 = vpop.f32.mrb[0].mxu0
    %3951 = vmatprep.mubr.bf16.mxu0 %v3344
    %3952 = vmatmul.mubr.bf16.gmra.mrb[0].mxu0 %v3343
    %v3953 = vpop.f32.mrb[0].mxu0
    %v3954 = vadd.f32 %v3857, %v3953
    %v3955 = vpop.f32.mrb[0].mxu0
    %v3956 = vpop.f32.mrb[0].mxu0
    %v3957 = vadd.f32 %v3860, %v3956
    %v3958 = vpop.f32.mrb[0].mxu0
    %3959 = vmatprep.mubr.bf16.mxu0 %v3350
    %3960 = vmatmul.mubr.bf16.gmra.mrb[0].mxu0 %v3349
    %v3961 = vpop.f32.mrb[0].mxu0
    %v3962 = vadd.f32 %v3865, %v3961
    %v3963 = vpop.f32.mrb[0].mxu0
    %v3964 = vpop.f32.mrb[0].mxu0
    %v3965 = vadd.f32 %v3868, %v3964
    %v3966 = vpop.f32.mrb[0].mxu0
    %3967 = vmatprep.mubr.bf16.mxu0 %v3356
    %3968 = vmatmul.mubr.bf16.gmra.mrb[0].mxu0 %v3355
    %v3969 = vpop.f32.mrb[0].mxu0
    %v3970 = vadd.f32 %v3873, %v3969
    %v3971 = vpop.f32.mrb[0].mxu0
    %v3972 = vpop.f32.mrb[0].mxu0
    %v3973 = vadd.f32 %v3876, %v3972
    %v3974 = vpop.f32.mrb[0].mxu0
    %3975 = vmatprep.mubr.bf16.mxu0 %v3362
    %3976 = vmatmul.mubr.bf16.gmra.mrb[0].mxu0 %v3361
    %v3977 = vpop.f32.mrb[0].mxu0
    %v3978 = vadd.f32 %v3881, %v3977
    %v3979 = vpop.f32.mrb[0].mxu0
    %v3980 = vpop.f32.mrb[0].mxu0
    %v3981 = vadd.f32 %v3884, %v3980
    %v3982 = vpop.f32.mrb[0].mxu0
    %3983 = vmatprep.mubr.bf16.mxu0 %v3368
    %3984 = vmatmul.mubr.bf16.gmra.mrb[0].mxu0 %v3367
    %v3985 = vpop.f32.mrb[0].mxu0
    %v3986 = vadd.f32 %v3889, %v3985
    %v3987 = vpop.f32.mrb[0].mxu0
    %v3988 = vpop.f32.mrb[0].mxu0
    %v3989 = vadd.f32 %v3892, %v3988
    %v3990 = vpop.f32.mrb[0].mxu0
    %3991 = vmatprep.mubr.bf16.mxu0 %v3374
    %3992 = vmatmul.mubr.bf16.gmra.mrb[0].mxu0 %v3373
    %v3993 = vpop.f32.mrb[0].mxu0
    %v3994 = vadd.f32 %v3897, %v3993
    %v3995 = vpop.f32.mrb[0].mxu0
    %v3996 = vpop.f32.mrb[0].mxu0
    %v3997 = vadd.f32 %v3900, %v3996
    %v3998 = vpop.f32.mrb[0].mxu0
    %3999 = vmatprep.mubr.bf16.mxu0 %v3380
    %4000 = vmatmul.mubr.bf16.gmra.mrb[0].mxu0 %v3379
    %v4001 = vpop.f32.mrb[0].mxu0
    %v4002 = vadd.f32 %v3905, %v4001
    %v4003 = vpop.f32.mrb[0].mxu0
    %v4004 = vpop.f32.mrb[0].mxu0
    %v4005 = vadd.f32 %v3908, %v4004
    %v4006 = vpop.f32.mrb[0].mxu0
    %4007 = vdwg.mxu0
    %v4008 = vlaneseq
    %v4009 = vshrl.u32 %v4008, 7
    %v4010 = vsub.s32 0, %v4009
    %v4011 = vrot.slane %v1626, %v4010
    %v4012 = vlaneseq
    %v4013 = vshrl.u32 %v4012, 7
    %v4014 = vsub.s32 0, %v4013
    %v4015 = vrot.slane %v1640, %v4014
    %v4016 = vlaneseq
    %v4017 = vshrl.u32 %v4016, 7
    %v4018 = vsub.s32 0, %v4017
    %v4019 = vrot.slane %v1648, %v4018
    %v4020 = vlaneseq
    %v4021 = vshrl.u32 %v4020, 7
    %v4022 = vsub.s32 0, %v4021
    %v4023 = vrot.slane %v1650, %v4022
    %v4024 = vlaneseq
    %v4025 = vshrl.u32 %v4024, 7
    %v4026 = vsub.s32 0, %v4025
    %v4027 = vrot.slane %v1633, %v4026
    %v4028 = vlaneseq
    %v4029 = vshrl.u32 %v4028, 7
    %v4030 = vsub.s32 0, %v4029
    %v4031 = vrot.slane %v1647, %v4030
    %v4032 = vlaneseq
    %v4033 = vshrl.u32 %v4032, 7
    %v4034 = vsub.s32 0, %v4033
    %v4035 = vrot.slane %v1649, %v4034
    %v4036 = vlaneseq
    %v4037 = vshrl.u32 %v4036, 7
    %v4038 = vsub.s32 0, %v4037
    %v4039 = vrot.slane %v1651, %v4038
    %v4040 = vlaneseq
    %v4041 = vshrl.u32 %v4040, 7
    %v4042 = vsub.s32 0, %v4041
    %v4043 = vrot.slane %v1675, %v4042
    %v4044 = vlaneseq
    %v4045 = vshrl.u32 %v4044, 7
    %v4046 = vsub.s32 0, %v4045
    %v4047 = vrot.slane %v1689, %v4046
    %v4048 = vlaneseq
    %v4049 = vshrl.u32 %v4048, 7
    %v4050 = vsub.s32 0, %v4049
    %v4051 = vrot.slane %v1697, %v4050
    %v4052 = vlaneseq
    %v4053 = vshrl.u32 %v4052, 7
    %v4054 = vsub.s32 0, %v4053
    %v4055 = vrot.slane %v1699, %v4054
    %v4056 = vlaneseq
    %v4057 = vshrl.u32 %v4056, 7
    %v4058 = vsub.s32 0, %v4057
    %v4059 = vrot.slane %v1682, %v4058
    %v4060 = vlaneseq
    %v4061 = vshrl.u32 %v4060, 7
    %v4062 = vsub.s32 0, %v4061
    %v4063 = vrot.slane %v1696, %v4062
    %v4064 = vlaneseq
    %v4065 = vshrl.u32 %v4064, 7
    %v4066 = vsub.s32 0, %v4065
    %v4067 = vrot.slane %v1698, %v4066
    %v4068 = vlaneseq
    %v4069 = vshrl.u32 %v4068, 7
    %v4070 = vsub.s32 0, %v4069
    %v4071 = vrot.slane %v1700, %v4070
    %v4088 = vadd.f32 %v3946, %v4011
    %v4089 = vadd.f32 %v3949, %v4015
    %v4090 = vadd.f32 %v3954, %v4019
    %v4091 = vadd.f32 %v3957, %v4023
    %v4092 = vadd.f32 %v3962, %v4027
    %v4093 = vadd.f32 %v3965, %v4031
    %v4094 = vadd.f32 %v3970, %v4035
    %v4095 = vadd.f32 %v3973, %v4039
    %v4096 = vadd.f32 %v3978, %v4043
    %v4097 = vadd.f32 %v3981, %v4047
    %v4098 = vadd.f32 %v3986, %v4051
    %v4099 = vadd.f32 %v3989, %v4055
    %v4100 = vadd.f32 %v3994, %v4059
    %v4101 = vadd.f32 %v3997, %v4063
    %v4102 = vadd.f32 %v4002, %v4067
    %v4103 = vadd.f32 %v4005, %v4071
    %v4104 = vadd.f32 %v4088, %v1595
    %v4105 = vadd.f32 %v4089, %v1595
    %v4106 = vadd.f32 %v4090, %v1595
    %v4107 = vadd.f32 %v4091, %v1595
    %v4108 = vadd.f32 %v4092, %v1595
    %v4109 = vadd.f32 %v4093, %v1595
    %v4110 = vadd.f32 %v4094, %v1595
    %v4111 = vadd.f32 %v4095, %v1595
    %v4112 = vadd.f32 %v4096, %v1599
    %v4113 = vadd.f32 %v4097, %v1599
    %v4114 = vadd.f32 %v4098, %v1599
    %v4115 = vadd.f32 %v4099, %v1599
    %v4116 = vadd.f32 %v4100, %v1599
    %v4117 = vadd.f32 %v4101, %v1599
    %v4118 = vadd.f32 %v4102, %v1599
    %v4119 = vadd.f32 %v4103, %v1599
    %v4120 = vld [vmem:[%s4] sm:$0x1]
    %v4122 = vlaneseq
    %v4123 = vshrl.u32 %v4122, 7
    %v4124 = vsub.s32 0, %v4123
    %v4125 = vrot.slane %v4120, %v4124
    %v4127 = vadd.f32 %v4104, %v4125
    %v4128 = vadd.f32 %v4105, %v4125
    %v4129 = vadd.f32 %v4106, %v4125
    %v4130 = vadd.f32 %v4107, %v4125
    %v4131 = vadd.f32 %v4108, %v4125
    %v4132 = vadd.f32 %v4109, %v4125
    %v4133 = vadd.f32 %v4110, %v4125
    %v4134 = vadd.f32 %v4111, %v4125
    %v4135 = vadd.f32 %v4112, %v4125
    %v4136 = vadd.f32 %v4113, %v4125
    %v4137 = vadd.f32 %v4114, %v4125
    %v4138 = vadd.f32 %v4115, %v4125
    %v4139 = vadd.f32 %v4116, %v4125
    %v4140 = vadd.f32 %v4117, %v4125
    %v4141 = vadd.f32 %v4118, %v4125
    %v4142 = vadd.f32 %v4119, %v4125
    %v4143 = vtanh.pop %v4127
    %v4144 = vtanh.pop %v4128
    %v4145 = vtanh.pop %v4129
    %v4146 = vtanh.pop %v4130
    %v4147 = vtanh.pop %v4131
    %v4148 = vtanh.pop %v4132
    %v4149 = vtanh.pop %v4133
    %v4150 = vtanh.pop %v4134
    %v4151 = vtanh.pop %v4135
    %v4152 = vtanh.pop %v4136
    %v4153 = vtanh.pop %v4137
    %v4154 = vtanh.pop %v4138
    %v4155 = vtanh.pop %v4139
    %v4156 = vtanh.pop %v4140
    %v4157 = vtanh.pop %v4141
    %v4158 = vtanh.pop %v4142
    %v4159 = vpack.c.bf16 %v4144, %v4143
    %v4160 = vpack.c.bf16 %v4146, %v4145
    %v4161 = vpack.c.bf16 %v4148, %v4147
    %v4162 = vpack.c.bf16 %v4150, %v4149
    %v4163 = vpack.c.bf16 %v4152, %v4151
    %v4164 = vpack.c.bf16 %v4154, %v4153
    %v4165 = vpack.c.bf16 %v4156, %v4155
    %v4166 = vpack.c.bf16 %v4158, %v4157
    %v4167 = vld [vmem:[#allocation10] sm:$0xf]
    %v4168 = vld [vmem:[#allocation10 + $0x4] sm:$0xf]
    %v4169 = vld [vmem:[#allocation10 + $0x8] sm:$0xf]
    %v4170 = vld [vmem:[#allocation10 + $0xc] sm:$0xf]
    %v4171 = vld [vmem:[#allocation10 + $0x10] sm:$0xf]
    %v4172 = vld [vmem:[#allocation10 + $0x14] sm:$0xf]
    %v4173 = vld [vmem:[#allocation10 + $0x18] sm:$0xf]
    %v4174 = vld [vmem:[#allocation10 + $0x1c] sm:$0xf]
    %v4175 = vld [vmem:[#allocation10 + $0x20] sm:$0xf]
    %v4176 = vld [vmem:[#allocation10 + $0x24] sm:$0xf]
    %v4177 = vld [vmem:[#allocation10 + $0x28] sm:$0xf]
    %v4178 = vld [vmem:[#allocation10 + $0x2c] sm:$0xf]
    %v4179 = vld [vmem:[#allocation10 + $0x30] sm:$0xf]
    %v4180 = vld [vmem:[#allocation10 + $0x34] sm:$0xf]
    %v4181 = vld [vmem:[#allocation10 + $0x38] sm:$0xf]
    %v4182 = vld [vmem:[#allocation10 + $0x3c] sm:$0xf]
    %v4183 = vld [vmem:[%s6] sm:$0x1]
    %v4185 = vlaneseq
    %v4186 = vshrl.u32 %v4185, 7
    %v4187 = vsub.s32 0, %v4186
    %v4188 = vrot.slane %v4183, %v4187
    %v4206 = vunpack.c.l.b16 %v4167
    %v4207 = vunpack.c.l.b16 %v4168
    %v4208 = vunpack.c.l.b16 %v4169
    %v4209 = vunpack.c.l.b16 %v4170
    %v4210 = vunpack.c.l.b16 %v4171
    %v4211 = vunpack.c.l.b16 %v4172
    %v4212 = vunpack.c.l.b16 %v4173
    %v4213 = vunpack.c.l.b16 %v4174
    %v4214 = vunpack.c.l.b16 %v4175
    %v4215 = vunpack.c.l.b16 %v4176
    %v4216 = vunpack.c.l.b16 %v4177
    %v4217 = vunpack.c.l.b16 %v4178
    %v4218 = vunpack.c.l.b16 %v4179
    %v4219 = vunpack.c.l.b16 %v4180
    %v4220 = vunpack.c.l.b16 %v4181
    %v4221 = vunpack.c.l.b16 %v4182
    %v4222 = vpack.c.b16 %v4207, %v4206
    %v4223 = vpack.c.b16 %v4209, %v4208
    %v4224 = vpack.c.b16 %v4211, %v4210
    %v4225 = vpack.c.b16 %v4213, %v4212
    %v4226 = vpack.c.b16 %v4215, %v4214
    %v4227 = vpack.c.b16 %v4217, %v4216
    %v4228 = vpack.c.b16 %v4219, %v4218
    %v4229 = vpack.c.b16 %v4221, %v4220
    %4238 = vmatprep.subr.bf16.mxu0 0
    %4239 = vmatpush1.bf16.msra.mxu0 %v4222
    %4240 = vmatprep.subr.bf16.mxu0 0
    %4241 = vmatpush1.bf16.msra.mxu0 %v4223
    %4242 = vmatprep.subr.bf16.mxu0 0
    %4243 = vmatpush1.bf16.msra.mxu0 %v4224
    %4244 = vmatprep.subr.bf16.mxu0 0
    %4245 = vmatpush1.bf16.msra.mxu0 %v4225
    %4246 = vmatprep.subr.bf16.mxu0 0
    %4247 = vmatpush1.bf16.msra.mxu0 %v4226
    %4248 = vmatprep.subr.bf16.mxu0 0
    %4249 = vmatpush1.bf16.msra.mxu0 %v4227
    %4250 = vmatprep.subr.bf16.mxu0 0
    %4251 = vmatpush1.bf16.msra.mxu0 %v4228
    %4252 = vmatprep.subr.bf16.mxu0 0
    %4253 = vmatpush1.bf16.msra.mxu0 %v4229
    %4254 = vmatprep.subr.bf16.mxu0 0
    %4255 = vmatpush1.bf16.msra.mxu0 0
    %4256 = vmatprep.subr.bf16.mxu0 0
    %4257 = vmatpush1.bf16.msra.mxu0 0
    %4258 = vmatprep.subr.bf16.mxu0 0
    %4259 = vmatpush1.bf16.msra.mxu0 0
    %4260 = vmatprep.subr.bf16.mxu0 0
    %4261 = vmatpush1.bf16.msra.mxu0 0
    %4262 = vmatprep.subr.bf16.mxu0 0
    %4263 = vmatpush1.bf16.msra.mxu0 0
    %4264 = vmatprep.subr.bf16.mxu0 0
    %4265 = vmatpush1.bf16.msra.mxu0 0
    %4266 = vmatprep.subr.bf16.mxu0 0
    %4267 = vmatpush1.bf16.msra.mxu0 0
    %4268 = vmatprep.subr.bf16.mxu0 0
    %4269 = vmatpush1.bf16.msra.mxu0 0
    %4270 = vmatprep.mubr.bf16.mxu0 0
    %4271 = vmatmul.mubr.bf16.gmra.mrb[0].mxu0 %v4159
    %v4272 = vpop.f32.mrb[0].mxu0
    %v4273 = vadd.f32 %v4188, %v4272
    %v4274 = vpop.f32.mrb[0].mxu0
    %v4275 = vpop.f32.mrb[0].mxu0
    %v4276 = vadd.f32 %v4188, %v4275
    %v4277 = vpop.f32.mrb[0].mxu0
    %4278 = vmatprep.mubr.bf16.mxu0 0
    %4279 = vmatmul.mubr.bf16.gmra.mrb[0].mxu0 %v4160
    %v4280 = vpop.f32.mrb[0].mxu0
    %v4281 = vadd.f32 %v4188, %v4280
    %v4282 = vpop.f32.mrb[0].mxu0
    %v4283 = vpop.f32.mrb[0].mxu0
    %v4284 = vadd.f32 %v4188, %v4283
    %v4285 = vpop.f32.mrb[0].mxu0
    %4286 = vmatprep.mubr.bf16.mxu0 0
    %4287 = vmatmul.mubr.bf16.gmra.mrb[0].mxu0 %v4161
    %v4288 = vpop.f32.mrb[0].mxu0
    %v4289 = vadd.f32 %v4188, %v4288
    %v4290 = vpop.f32.mrb[0].mxu0
    %v4291 = vpop.f32.mrb[0].mxu0
    %v4292 = vadd.f32 %v4188, %v4291
    %v4293 = vpop.f32.mrb[0].mxu0
    %4294 = vmatprep.mubr.bf16.mxu0 0
    %4295 = vmatmul.mubr.bf16.gmra.mrb[0].mxu0 %v4162
    %v4296 = vpop.f32.mrb[0].mxu0
    %v4297 = vadd.f32 %v4188, %v4296
    %v4298 = vpop.f32.mrb[0].mxu0
    %v4299 = vpop.f32.mrb[0].mxu0
    %v4300 = vadd.f32 %v4188, %v4299
    %v4301 = vpop.f32.mrb[0].mxu0
    %4302 = vmatprep.mubr.bf16.mxu0 0
    %4303 = vmatmul.mubr.bf16.gmra.mrb[0].mxu0 %v4163
    %v4304 = vpop.f32.mrb[0].mxu0
    %v4305 = vadd.f32 %v4188, %v4304
    %v4306 = vpop.f32.mrb[0].mxu0
    %v4307 = vpop.f32.mrb[0].mxu0
    %v4308 = vadd.f32 %v4188, %v4307
    %v4309 = vpop.f32.mrb[0].mxu0
    %4310 = vmatprep.mubr.bf16.mxu0 0
    %4311 = vmatmul.mubr.bf16.gmra.mrb[0].mxu0 %v4164
    %v4312 = vpop.f32.mrb[0].mxu0
    %v4313 = vadd.f32 %v4188, %v4312
    %v4314 = vpop.f32.mrb[0].mxu0
    %v4315 = vpop.f32.mrb[0].mxu0
    %v4316 = vadd.f32 %v4188, %v4315
    %v4317 = vpop.f32.mrb[0].mxu0
    %4318 = vmatprep.mubr.bf16.mxu0 0
    %4319 = vmatmul.mubr.bf16.gmra.mrb[0].mxu0 %v4165
    %v4320 = vpop.f32.mrb[0].mxu0
    %v4321 = vadd.f32 %v4188, %v4320
    %v4322 = vpop.f32.mrb[0].mxu0
    %v4323 = vpop.f32.mrb[0].mxu0
    %v4324 = vadd.f32 %v4188, %v4323
    %v4325 = vpop.f32.mrb[0].mxu0
    %4326 = vmatprep.mubr.bf16.mxu0 0
    %4327 = vmatmul.mubr.bf16.gmra.mrb[0].mxu0 %v4166
    %v4328 = vpop.f32.mrb[0].mxu0
    %v4329 = vadd.f32 %v4188, %v4328
    %v4330 = vpop.f32.mrb[0].mxu0
    %v4331 = vpop.f32.mrb[0].mxu0
    %v4332 = vadd.f32 %v4188, %v4331
    %v4333 = vpop.f32.mrb[0].mxu0
    %4334 = vdwg.mxu0
    %v4335 = vpack.c.bf16 %v4276, %v4273
    %v4336 = vpack.c.bf16 %v4284, %v4281
    %v4337 = vpack.c.bf16 %v4292, %v4289
    %v4338 = vpack.c.bf16 %v4300, %v4297
    %v4339 = vpack.c.bf16 %v4308, %v4305
    %v4340 = vpack.c.bf16 %v4316, %v4313
    %v4341 = vpack.c.bf16 %v4324, %v4321
    %v4342 = vpack.c.bf16 %v4332, %v4329
    %v4351 = vunpack.c.l.b16 %v4335
    %v4352 = vunpack.c.h.b16 %v4335
    %v4353 = vunpack.c.l.b16 %v4336
    %v4354 = vunpack.c.h.b16 %v4336
    %v4355 = vunpack.c.l.b16 %v4337
    %v4356 = vunpack.c.h.b16 %v4337
    %v4357 = vunpack.c.l.b16 %v4338
    %v4358 = vunpack.c.h.b16 %v4338
    %v4359 = vunpack.c.l.b16 %v4339
    %v4360 = vunpack.c.h.b16 %v4339
    %v4361 = vunpack.c.l.b16 %v4340
    %v4362 = vunpack.c.h.b16 %v4340
    %v4363 = vunpack.c.l.b16 %v4341
    %v4364 = vunpack.c.h.b16 %v4341
    %v4365 = vunpack.c.l.b16 %v4342
    %v4366 = vunpack.c.h.b16 %v4342
    %v4367 = vpack.c.b16 %v4351, %v4351
    %v4368 = vpack.c.b16 %v4352, %v4352
    %v4369 = vpack.c.b16 %v4353, %v4353
    %v4370 = vpack.c.b16 %v4354, %v4354
    %v4371 = vpack.c.b16 %v4355, %v4355
    %v4372 = vpack.c.b16 %v4356, %v4356
    %v4373 = vpack.c.b16 %v4357, %v4357
    %v4374 = vpack.c.b16 %v4358, %v4358
    %v4375 = vpack.c.b16 %v4359, %v4359
    %v4376 = vpack.c.b16 %v4360, %v4360
    %v4377 = vpack.c.b16 %v4361, %v4361
    %v4378 = vpack.c.b16 %v4362, %v4362
    %v4379 = vpack.c.b16 %v4363, %v4363
    %v4380 = vpack.c.b16 %v4364, %v4364
    %v4381 = vpack.c.b16 %v4365, %v4365
    %v4382 = vpack.c.b16 %v4366, %v4366
    %4399 = vst [vmem:[#allocation12] sm:$0xf] %v4367
    %4400 = vst [vmem:[#allocation12 + $0x4] sm:$0xf] %v4368
    %4401 = vst [vmem:[#allocation12 + $0x8] sm:$0xf] %v4369
    %4402 = vst [vmem:[#allocation12 + $0xc] sm:$0xf] %v4370
    %4403 = vst [vmem:[#allocation12 + $0x10] sm:$0xf] %v4371
    %4404 = vst [vmem:[#allocation12 + $0x14] sm:$0xf] %v4372
    %4405 = vst [vmem:[#allocation12 + $0x18] sm:$0xf] %v4373
    %4406 = vst [vmem:[#allocation12 + $0x1c] sm:$0xf] %v4374
    %4407 = vst [vmem:[#allocation12 + $0x20] sm:$0xf] %v4375
    %4408 = vst [vmem:[#allocation12 + $0x24] sm:$0xf] %v4376
    %4409 = vst [vmem:[#allocation12 + $0x28] sm:$0xf] %v4377
    %4410 = vst [vmem:[#allocation12 + $0x2c] sm:$0xf] %v4378
    %4411 = vst [vmem:[#allocation12 + $0x30] sm:$0xf] %v4379
    %4412 = vst [vmem:[#allocation12 + $0x34] sm:$0xf] %v4380
    %4413 = vst [vmem:[#allocation12 + $0x38] sm:$0xf] %v4381
    %4414 = vst [vmem:[#allocation12 + $0x3c] sm:$0xf] %v4382
    // Predicated region
    $region42: #{tpu_custom_call.1} parent=1 // pred_check
      _
    $region43: #{tpu_custom_call.1} parent=1 // pred_check_branch
      %4416 = sbr.rel (0) target = $region45
    $region44: #{tpu_custom_call.1} parent=1 // pred_region
      %s4418 = ssub.s32 1024, 1024
      %4419 = vsyncadd [#allocation6], %s4418
      %s4420 = sshll.u32 [#allocation12], 4
      %s4421 = int_to_ptr.vmem [resolvable:$true] %s4420
      %4426 = dma.vmem_to_hbm [thread:$0]  %s4421, 1024, %s7, [#allocation6], 64, 64, 4
    $region45: #{tpu_custom_call.1} parent=1 // pred_fallthru
      _
    // Predicated region
    $region46: #{tpu_custom_call.1} parent=1 // pred_check
      _
    $region47: #{tpu_custom_call.1} parent=1 // pred_check_branch
      %4428 = sbr.rel (0) target = $region49
    $region48: #{tpu_custom_call.1} parent=1 // pred_region
      %4429 = dma.done [#allocation6], 1024
    $region49: #{tpu_custom_call.1} parent=1 // pred_fallthru
      _
    %4430 = vsyncpa [#allocation5], 1
    %4431 = vsyncpa [#allocation8], 1
    %4432 = vsyncpa [#allocation11], 1
    %4433 = vsyncpa [#allocation6], 1

</llo_original>
